<compile_context>
chip_gen: v6e
topology: v6e:2x2x1
jax: 0.10.0
libtpu: 0.0.40
codegen_flags: <defaults>
</compile_context>

<pallas_src>
import functools

import jax
import jax.numpy as jnp
from jax.experimental import pallas as pl
from jax.experimental.pallas import tpu as pltpu


def _round_up(x, m):
    return ((x + m - 1) // m) * m


def _cdiv(a, b):
    return -(-a // b)


def _vmem_cap_bytes():
    """Physical VMEM per core; conservative 64 MiB (v7x) if unknown."""
    try:
        if jax.devices()[0].platform == "tpu":
            return int(pltpu.get_tpu_info().vmem_capacity_bytes)
    except Exception:
        pass
    return 64 << 20


def _dwsep_kernel(x_ref, dw_ref, pw_ref, o_ref, acc_ref, *, stride, th, wo):
    """One grid step = (batch n, output-row band h, Cout tile co).

    x_ref  : (s, TH+dH, s, Wq, Cp)  polyphase row band (halo included)
    dw_ref : (3, 3, Cp)             depthwise taps
    pw_ref : (Cp, TCo)              pointwise weight tile
    o_ref  : (TH, Wo, TCo)          output tile (lane-dense: TCo % 128 == 0)
    acc_ref: (TH, Wo, Cp) f32       depthwise result, reused across Cout tiles
    """
    s = stride
    cp = acc_ref.shape[-1]
    co = pl.program_id(2)

    # Depthwise 3x3: compute once per (n, h) band.  NOTE: this relies on the
    # Cout axis being the innermost, sequentially iterated ("arbitrary") grid
    # axis so acc_ref stays valid across Cout tiles.
    @pl.when(co == 0)
    def _depthwise():
        dwv = dw_ref[...].astype(jnp.float32)            # (3, 3, Cp)
        for kj in range(3):
            w_ph, w_off = kj % s, kj // s
            part = jnp.zeros((th, wo, cp), jnp.float32)
            for ki in range(3):
                h_ph, h_off = ki % s, ki // s
                # Polyphase layout => every tap is a contiguous slice.
                tap = x_ref[h_ph, h_off:h_off + th, w_ph, w_off:w_off + wo, :]
                part = part + tap.astype(jnp.float32) * dwv[ki, kj]
            if kj == 0:
                acc_ref[...] = part           # init on first kj
            else:
                acc_ref[...] = acc_ref[...] + part

    # Pointwise 1x1 on the MXU: (TH*Wo, Cp) @ (Cp, TCo).
    acc = acc_ref[...].reshape(th * wo, cp).astype(pw_ref.dtype)
    y = jnp.dot(acc, pw_ref[...],
                preferred_element_type=jnp.float32,
                precision=jax.lax.Precision.HIGHEST)
    o_ref[...] = y.reshape(th, wo, o_ref.shape[-1]).astype(o_ref.dtype)


def depthwise_separable_conv2d(x_nchw, dw_weight, pw_weight, stride,
                               *, param_dtype=jnp.float32):
    """x_nchw: (N, C, H, W); dw_weight: (C, 1, 3, 3); pw_weight: (Cout, C, 1, 1)."""
    N, C, H, W = map(int, x_nchw.shape)
    Cout = int(pw_weight.shape[0])
    s = int(stride)

    # PyTorch output size for k=3, pad=1.
    Ho = (H - 1) // s + 1
    Wo = (W - 1) // s + 1

    # Channel padding to the 128-lane width (contraction and output lanes).
    # TODO(synk): for small C (< 128) a lane-packed W*C layout would avoid the
    # padded-channel VALU/MXU/DMA waste; such cases are simply padded here.
    Cp = _round_up(C, 128)
    Cop = _round_up(Cout, 128)

    isz = jnp.dtype(param_dtype).itemsize

    # ---- tiling -------------------------------------------------------------
    d = 2 // s                                   # halo positions per phase
    th = max(1, min(Ho, 256 // max(1, Wo)))      # target TH*Wo ~ 256 MXU rows
    # Keep the double-buffered input band comfortably small in VMEM.
    while th > 1 and 2 * (s * (th + d)) * (s * (Wo + d)) * Cp * isz > (12 << 20):
        th = _cdiv(th, 2)
    Ho_pad = _round_up(Ho, th)                   # pad Ho up, never th -> 1
    n_h = Ho_pad // th
    tco = 256 if Cop % 256 == 0 else 128
    n_co = Cop // tco

    # ---- polyphase, H-banded input layout (one wrapper-side repack) ---------
    # Padded coords: output (r, j), tap (ki, kj) reads padded pixel
    # (r*s + ki, j*s + kj).  Decomposing ki = h_ph + s*h_off (same for kj)
    # makes every tap a contiguous slice over (row-pos, col-pos) at a fixed
    # (row-phase, col-phase) -> no strided loads inside the kernel.
    Hq = max(Ho_pad + d, _cdiv(H + 1, s))        # row positions per phase
    Wq = max(Wo + d, _cdiv(W + 1, s))            # col positions per phase
    Hp, Wp = s * Hq, s * Wq

    x = jnp.transpose(x_nchw, (0, 2, 3, 1)).astype(param_dtype)        # NHWC
    x = jnp.pad(x, ((0, 0), (1, Hp - H - 1), (1, Wp - W - 1), (0, Cp - C)))
    x = x.reshape(N, Hq, s, Wq, s, Cp)
    band_idx = (jnp.arange(n_h) * th)[:, None] + jnp.arange(th + d)[None, :]
    xb = x[:, band_idx]                            # (N, n_h, TH+d, s, Wq, s, Cp)
    xb = jnp.transpose(xb, (0, 1, 3, 2, 5, 4, 6))  # (N, n_h, s, TH+d, s, Wq, Cp)
    # TODO(synk): fuse this repack into the Pallas input DMA (allow_input_fusion
    # or in-kernel halo build via manual DMA) to drop the extra HBM pass.

    dw = jnp.transpose(dw_weight[:, 0], (1, 2, 0))                     # (3,3,C)
    dw = jnp.pad(dw, ((0, 0), (0, 0), (0, Cp - C))).astype(param_dtype)
    pw = jnp.transpose(pw_weight[:, :, 0, 0], (1, 0))                  # (C,Cout)
    pw = jnp.pad(pw, ((0, Cp - C), (0, Cop - Cout))).astype(param_dtype)

    kernel = functools.partial(_dwsep_kernel, stride=s, th=th, wo=Wo)

    # ---- VMEM budget & advisory cost ----------------------------------------
    band_bytes = (s * (th + d)) * (s * Wq) * Cp * isz
    needed = (2 * band_bytes                      # input band, double-buffered
              + 2 * 8 * 3 * Cp * isz              # dw taps (sublane-padded)
              + 2 * Cp * tco * isz                # pointwise weight tile
              + 2 * th * Wo * tco * 4             # output tile
              + th * Wo * Cp * 4)                 # f32 depthwise scratch
    cap = _vmem_cap_bytes()
    vmem_limit = max(16 << 20,
                     min(max(needed + (16 << 20), 32 << 20), cap - (16 << 20)))

    flops = N * Ho_pad * Wo * Cp * (18 + 2 * Cop)
    bytes_accessed = (isz * (int(xb.size) + int(dw.size) + n_h * N * int(pw.size))
                      + 4 * N * Ho_pad * Wo * Cop)

    out = pl.pallas_call(
        kernel,
        out_shape=jax.ShapeDtypeStruct((N, Ho_pad, Wo, Cop), jnp.float32),
        grid=(N, n_h, n_co),
        in_specs=[
            pl.BlockSpec((None, None, s, th + d, s, Wq, Cp),
                         lambda n, h, c: (n, h, 0, 0, 0, 0, 0)),
            pl.BlockSpec((3, 3, Cp), lambda n, h, c: (0, 0, 0)),
            pl.BlockSpec((Cp, tco), lambda n, h, c: (0, c)),
        ],
        out_specs=pl.BlockSpec((None, th, Wo, tco), lambda n, h, c: (n, h, 0, c)),
        scratch_shapes=[pltpu.VMEM((th, Wo, Cp), jnp.float32)],
        compiler_params=pltpu.CompilerParams(
            dimension_semantics=("parallel", "parallel", "arbitrary"),
            vmem_limit_bytes=int(vmem_limit)),
        cost_estimate=pl.CostEstimate(flops=int(flops), transcendentals=0,
                                      bytes_accessed=int(bytes_accessed)),
    )(xb, dw, pw)

    out = out[:, :Ho, :, :Cout]                    # drop Ho / Cout padding
    # TODO(synk): keep NHWC through the surrounding model to avoid this
    # transpose round trip on a memory-bound op.
    return jnp.transpose(out, (0, 3, 1, 2))        # back to NCHW


def _reference_forward(x_nchw, dw_weight, pw_weight, stride):
    """Pure-JAX reference (lax conv) for correctness checking."""
    C = x_nchw.shape[1]
    y = jax.lax.conv_general_dilated(
        x_nchw, dw_weight, window_strides=(stride, stride),
        padding=((1, 1), (1, 1)), feature_group_count=C,
        dimension_numbers=("NCHW", "OIHW", "NCHW"),
        precision=jax.lax.Precision.HIGHEST)
    y = jax.lax.conv_general_dilated(
        y, pw_weight, window_strides=(1, 1), padding="VALID",
        dimension_numbers=("NCHW", "OIHW", "NCHW"),
        precision=jax.lax.Precision.HIGHEST)
    return y


if __name__ == "__main__":
    key = jax.random.PRNGKey(0)
    k_x, k_dw, k_pw = jax.random.split(key, 3)

    N, C, H, W = 2, 4, 16, 16
    Cout = 8

    x = jax.random.normal(k_x, (N, C, H, W), dtype=jnp.float32)
    # deterministic synthetic parameters (PyTorch weight shapes)
    dw_weight = jax.random.normal(k_dw, (C, 1, 3, 3), dtype=jnp.float32) * 0.2
    pw_weight = jax.random.normal(k_pw, (Cout, C, 1, 1), dtype=jnp.float32) * 0.2

    ok = True
    for stride in (1, 2):
        out = depthwise_separable_conv2d(x, dw_weight, pw_weight, stride)
        out = jax.block_until_ready(out)
        ref = _reference_forward(x, dw_weight, pw_weight, stride)
        if out.shape != ref.shape or not jnp.allclose(out, ref, atol=1e-4, rtol=1e-4):
            ok = False

    print("KERNEL_OK" if ok else "KERNEL_MISMATCH")
</pallas_src>

<mosaic_0001>
module attributes {stable_mosaic.version = 11 : i64} {
  func.func @_dwsep_kernel(%arg0: i32, %arg1: i32, %arg2: i32, %arg3: memref<1x1x1x18x1x18x128xf32, #tpu.memory_space<vmem>>, %arg4: memref<3x3x128xf32, #tpu.memory_space<vmem>>, %arg5: memref<128x128xf32, #tpu.memory_space<vmem>>, %arg6: memref<1x16x16x128xf32, #tpu.memory_space<vmem>>, %arg7: memref<16x16x128xf32, #tpu.memory_space<vmem>>) attributes {dimension_semantics = [#tpu.dimension_semantics<parallel>, #tpu.dimension_semantics<parallel>, #tpu.dimension_semantics<arbitrary>], iteration_bounds = array<i64: 2, 1, 1>, scalar_prefetch = 0 : i64, scratch_operands = 1 : i64, tpu.core_type = #tpu.core_type<tc>, window_params = [{transform_indices = @transform_0, window_bounds = array<i64: 1, 1, 1, 18, 1, 18, 128>}, {pipeline_mode = #tpu.pipeline_mode<synchronous>, transform_indices = @transform_1, window_bounds = array<i64: 3, 3, 128>}, {transform_indices = @transform_2, window_bounds = array<i64: 128, 128>}, {transform_indices = @transform_3, window_bounds = array<i64: 1, 16, 16, 128>}]} {
    %c0_i32 = arith.constant 0 : i32
    %0 = arith.cmpi eq, %arg2, %c0_i32 : i32
    %1 = arith.extui %0 : i1 to i32
    %c0_i32_0 = arith.constant 0 : i32
    %2 = arith.cmpi ne, %1, %c0_i32_0 : i32
    scf.if %2 {
      %c0_9 = arith.constant 0 : index
      %c0_10 = arith.constant 0 : index
      %c0_11 = arith.constant 0 : index
      %11 = vector.load %arg4[%c0_9, %c0_10, %c0_11] : memref<3x3x128xf32, #tpu.memory_space<vmem>>, vector<3x3x128xf32>
      %cst_12 = arith.constant 0.000000e+00 : f32
      %12 = vector.broadcast %cst_12 : f32 to vector<16x16x128xf32>
      %c0_13 = arith.constant 0 : index
      %c0_14 = arith.constant 0 : index
      %c0_15 = arith.constant 0 : index
      %c0_16 = arith.constant 0 : index
      %c0_17 = arith.constant 0 : index
      %c0_18 = arith.constant 0 : index
      %c0_19 = arith.constant 0 : index
      %13 = vector.load %arg3[%c0_13, %c0_14, %c0_15, %c0_16, %c0_17, %c0_18, %c0_19] : memref<1x1x1x18x1x18x128xf32, #tpu.memory_space<vmem>>, vector<1x1x1x16x1x16x128xf32>
      %14 = vector.shape_cast %13 : vector<1x1x1x16x1x16x128xf32> to vector<16x16x128xf32>
      %15 = vector.extract_strided_slice %11 {offsets = [0, 0, 0], sizes = [1, 1, 128], strides = [1, 1, 1]} : vector<3x3x128xf32> to vector<1x1x128xf32>
      %16 = vector.shape_cast %15 : vector<1x1x128xf32> to vector<128xf32>
      %17 = vector.shape_cast %16 : vector<128xf32> to vector<1x1x128xf32>
      %18 = vector.broadcast %17 : vector<1x1x128xf32> to vector<16x16x128xf32>
      %19 = arith.mulf %14, %18 : vector<16x16x128xf32>
      %20 = arith.addf %12, %19 : vector<16x16x128xf32>
      %c0_20 = arith.constant 0 : index
      %c0_21 = arith.constant 0 : index
      %c0_22 = arith.constant 0 : index
      %c1 = arith.constant 1 : index
      %c0_23 = arith.constant 0 : index
      %c0_24 = arith.constant 0 : index
      %c0_25 = arith.constant 0 : index
      %21 = vector.load %arg3[%c0_20, %c0_21, %c0_22, %c1, %c0_23, %c0_24, %c0_25] : memref<1x1x1x18x1x18x128xf32, #tpu.memory_space<vmem>>, vector<1x1x1x16x1x16x128xf32>
      %22 = vector.shape_cast %21 : vector<1x1x1x16x1x16x128xf32> to vector<16x16x128xf32>
      %23 = vector.extract_strided_slice %11 {offsets = [1, 0, 0], sizes = [1, 1, 128], strides = [1, 1, 1]} : vector<3x3x128xf32> to vector<1x1x128xf32>
      %24 = vector.shape_cast %23 : vector<1x1x128xf32> to vector<128xf32>
      %25 = vector.shape_cast %24 : vector<128xf32> to vector<1x1x128xf32>
      %26 = vector.broadcast %25 : vector<1x1x128xf32> to vector<16x16x128xf32>
      %27 = arith.mulf %22, %26 : vector<16x16x128xf32>
      %28 = arith.addf %20, %27 : vector<16x16x128xf32>
      %c0_26 = arith.constant 0 : index
      %c0_27 = arith.constant 0 : index
      %c0_28 = arith.constant 0 : index
      %c2 = arith.constant 2 : index
      %c0_29 = arith.constant 0 : index
      %c0_30 = arith.constant 0 : index
      %c0_31 = arith.constant 0 : index
      %29 = vector.load %arg3[%c0_26, %c0_27, %c0_28, %c2, %c0_29, %c0_30, %c0_31] : memref<1x1x1x18x1x18x128xf32, #tpu.memory_space<vmem>>, vector<1x1x1x16x1x16x128xf32>
      %30 = vector.shape_cast %29 : vector<1x1x1x16x1x16x128xf32> to vector<16x16x128xf32>
      %31 = vector.extract_strided_slice %11 {offsets = [2, 0, 0], sizes = [1, 1, 128], strides = [1, 1, 1]} : vector<3x3x128xf32> to vector<1x1x128xf32>
      %32 = vector.shape_cast %31 : vector<1x1x128xf32> to vector<128xf32>
      %33 = vector.shape_cast %32 : vector<128xf32> to vector<1x1x128xf32>
      %34 = vector.broadcast %33 : vector<1x1x128xf32> to vector<16x16x128xf32>
      %35 = arith.mulf %30, %34 : vector<16x16x128xf32>
      %36 = arith.addf %28, %35 : vector<16x16x128xf32>
      %c0_32 = arith.constant 0 : index
      %c0_33 = arith.constant 0 : index
      %c0_34 = arith.constant 0 : index
      %37 = vector.load %arg7[%c0_32, %c0_33, %c0_34] : memref<16x16x128xf32, #tpu.memory_space<vmem>>, vector<16x16x128xf32>
      tpu.vector_store %arg7[%c0_32, %c0_33, %c0_34], %36 {strides = array<i32>} : memref<16x16x128xf32, #tpu.memory_space<vmem>>, vector<16x16x128xf32>,
      %cst_35 = arith.constant 0.000000e+00 : f32
      %38 = vector.broadcast %cst_35 : f32 to vector<16x16x128xf32>
      %c0_36 = arith.constant 0 : index
      %c0_37 = arith.constant 0 : index
      %c0_38 = arith.constant 0 : index
      %c0_39 = arith.constant 0 : index
      %c0_40 = arith.constant 0 : index
      %c1_41 = arith.constant 1 : index
      %c0_42 = arith.constant 0 : index
      %39 = vector.load %arg3[%c0_36, %c0_37, %c0_38, %c0_39, %c0_40, %c1_41, %c0_42] : memref<1x1x1x18x1x18x128xf32, #tpu.memory_space<vmem>>, vector<1x1x1x16x1x16x128xf32>
      %40 = vector.shape_cast %39 : vector<1x1x1x16x1x16x128xf32> to vector<16x16x128xf32>
      %41 = vector.extract_strided_slice %11 {offsets = [0, 1, 0], sizes = [1, 1, 128], strides = [1, 1, 1]} : vector<3x3x128xf32> to vector<1x1x128xf32>
      %42 = vector.shape_cast %41 : vector<1x1x128xf32> to vector<128xf32>
      %43 = vector.shape_cast %42 : vector<128xf32> to vector<1x1x128xf32>
      %44 = vector.broadcast %43 : vector<1x1x128xf32> to vector<16x16x128xf32>
      %45 = arith.mulf %40, %44 : vector<16x16x128xf32>
      %46 = arith.addf %38, %45 : vector<16x16x128xf32>
      %c0_43 = arith.constant 0 : index
      %c0_44 = arith.constant 0 : index
      %c0_45 = arith.constant 0 : index
      %c1_46 = arith.constant 1 : index
      %c0_47 = arith.constant 0 : index
      %c1_48 = arith.constant 1 : index
      %c0_49 = arith.constant 0 : index
      %47 = vector.load %arg3[%c0_43, %c0_44, %c0_45, %c1_46, %c0_47, %c1_48, %c0_49] : memref<1x1x1x18x1x18x128xf32, #tpu.memory_space<vmem>>, vector<1x1x1x16x1x16x128xf32>
      %48 = vector.shape_cast %47 : vector<1x1x1x16x1x16x128xf32> to vector<16x16x128xf32>
      %49 = vector.extract_strided_slice %11 {offsets = [1, 1, 0], sizes = [1, 1, 128], strides = [1, 1, 1]} : vector<3x3x128xf32> to vector<1x1x128xf32>
      %50 = vector.shape_cast %49 : vector<1x1x128xf32> to vector<128xf32>
      %51 = vector.shape_cast %50 : vector<128xf32> to vector<1x1x128xf32>
      %52 = vector.broadcast %51 : vector<1x1x128xf32> to vector<16x16x128xf32>
      %53 = arith.mulf %48, %52 : vector<16x16x128xf32>
      %54 = arith.addf %46, %53 : vector<16x16x128xf32>
      %c0_50 = arith.constant 0 : index
      %c0_51 = arith.constant 0 : index
      %c0_52 = arith.constant 0 : index
      %c2_53 = arith.constant 2 : index
      %c0_54 = arith.constant 0 : index
      %c1_55 = arith.constant 1 : index
      %c0_56 = arith.constant 0 : index
      %55 = vector.load %arg3[%c0_50, %c0_51, %c0_52, %c2_53, %c0_54, %c1_55, %c0_56] : memref<1x1x1x18x1x18x128xf32, #tpu.memory_space<vmem>>, vector<1x1x1x16x1x16x128xf32>
      %56 = vector.shape_cast %55 : vector<1x1x1x16x1x16x128xf32> to vector<16x16x128xf32>
      %57 = vector.extract_strided_slice %11 {offsets = [2, 1, 0], sizes = [1, 1, 128], strides = [1, 1, 1]} : vector<3x3x128xf32> to vector<1x1x128xf32>
      %58 = vector.shape_cast %57 : vector<1x1x128xf32> to vector<128xf32>
      %59 = vector.shape_cast %58 : vector<128xf32> to vector<1x1x128xf32>
      %60 = vector.broadcast %59 : vector<1x1x128xf32> to vector<16x16x128xf32>
      %61 = arith.mulf %56, %60 : vector<16x16x128xf32>
      %62 = arith.addf %54, %61 : vector<16x16x128xf32>
      %c0_57 = arith.constant 0 : index
      %c0_58 = arith.constant 0 : index
      %c0_59 = arith.constant 0 : index
      %63 = vector.load %arg7[%c0_57, %c0_58, %c0_59] : memref<16x16x128xf32, #tpu.memory_space<vmem>>, vector<16x16x128xf32>
      %64 = arith.addf %63, %62 : vector<16x16x128xf32>
      %c0_60 = arith.constant 0 : index
      %c0_61 = arith.constant 0 : index
      %c0_62 = arith.constant 0 : index
      %65 = vector.load %arg7[%c0_60, %c0_61, %c0_62] : memref<16x16x128xf32, #tpu.memory_space<vmem>>, vector<16x16x128xf32>
      tpu.vector_store %arg7[%c0_60, %c0_61, %c0_62], %64 {strides = array<i32>} : memref<16x16x128xf32, #tpu.memory_space<vmem>>, vector<16x16x128xf32>,
      %cst_63 = arith.constant 0.000000e+00 : f32
      %66 = vector.broadcast %cst_63 : f32 to vector<16x16x128xf32>
      %c0_64 = arith.constant 0 : index
      %c0_65 = arith.constant 0 : index
      %c0_66 = arith.constant 0 : index
      %c0_67 = arith.constant 0 : index
      %c0_68 = arith.constant 0 : index
      %c2_69 = arith.constant 2 : index
      %c0_70 = arith.constant 0 : index
      %67 = vector.load %arg3[%c0_64, %c0_65, %c0_66, %c0_67, %c0_68, %c2_69, %c0_70] : memref<1x1x1x18x1x18x128xf32, #tpu.memory_space<vmem>>, vector<1x1x1x16x1x16x128xf32>
      %68 = vector.shape_cast %67 : vector<1x1x1x16x1x16x128xf32> to vector<16x16x128xf32>
      %69 = vector.extract_strided_slice %11 {offsets = [0, 2, 0], sizes = [1, 1, 128], strides = [1, 1, 1]} : vector<3x3x128xf32> to vector<1x1x128xf32>
      %70 = vector.shape_cast %69 : vector<1x1x128xf32> to vector<128xf32>
      %71 = vector.shape_cast %70 : vector<128xf32> to vector<1x1x128xf32>
      %72 = vector.broadcast %71 : vector<1x1x128xf32> to vector<16x16x128xf32>
      %73 = arith.mulf %68, %72 : vector<16x16x128xf32>
      %74 = arith.addf %66, %73 : vector<16x16x128xf32>
      %c0_71 = arith.constant 0 : index
      %c0_72 = arith.constant 0 : index
      %c0_73 = arith.constant 0 : index
      %c1_74 = arith.constant 1 : index
      %c0_75 = arith.constant 0 : index
      %c2_76 = arith.constant 2 : index
      %c0_77 = arith.constant 0 : index
      %75 = vector.load %arg3[%c0_71, %c0_72, %c0_73, %c1_74, %c0_75, %c2_76, %c0_77] : memref<1x1x1x18x1x18x128xf32, #tpu.memory_space<vmem>>, vector<1x1x1x16x1x16x128xf32>
      %76 = vector.shape_cast %75 : vector<1x1x1x16x1x16x128xf32> to vector<16x16x128xf32>
      %77 = vector.extract_strided_slice %11 {offsets = [1, 2, 0], sizes = [1, 1, 128], strides = [1, 1, 1]} : vector<3x3x128xf32> to vector<1x1x128xf32>
      %78 = vector.shape_cast %77 : vector<1x1x128xf32> to vector<128xf32>
      %79 = vector.shape_cast %78 : vector<128xf32> to vector<1x1x128xf32>
      %80 = vector.broadcast %79 : vector<1x1x128xf32> to vector<16x16x128xf32>
      %81 = arith.mulf %76, %80 : vector<16x16x128xf32>
      %82 = arith.addf %74, %81 : vector<16x16x128xf32>
      %c0_78 = arith.constant 0 : index
      %c0_79 = arith.constant 0 : index
      %c0_80 = arith.constant 0 : index
      %c2_81 = arith.constant 2 : index
      %c0_82 = arith.constant 0 : index
      %c2_83 = arith.constant 2 : index
      %c0_84 = arith.constant 0 : index
      %83 = vector.load %arg3[%c0_78, %c0_79, %c0_80, %c2_81, %c0_82, %c2_83, %c0_84] : memref<1x1x1x18x1x18x128xf32, #tpu.memory_space<vmem>>, vector<1x1x1x16x1x16x128xf32>
      %84 = vector.shape_cast %83 : vector<1x1x1x16x1x16x128xf32> to vector<16x16x128xf32>
      %85 = vector.extract_strided_slice %11 {offsets = [2, 2, 0], sizes = [1, 1, 128], strides = [1, 1, 1]} : vector<3x3x128xf32> to vector<1x1x128xf32>
      %86 = vector.shape_cast %85 : vector<1x1x128xf32> to vector<128xf32>
      %87 = vector.shape_cast %86 : vector<128xf32> to vector<1x1x128xf32>
      %88 = vector.broadcast %87 : vector<1x1x128xf32> to vector<16x16x128xf32>
      %89 = arith.mulf %84, %88 : vector<16x16x128xf32>
      %90 = arith.addf %82, %89 : vector<16x16x128xf32>
      %c0_85 = arith.constant 0 : index
      %c0_86 = arith.constant 0 : index
      %c0_87 = arith.constant 0 : index
      %91 = vector.load %arg7[%c0_85, %c0_86, %c0_87] : memref<16x16x128xf32, #tpu.memory_space<vmem>>, vector<16x16x128xf32>
      %92 = arith.addf %91, %90 : vector<16x16x128xf32>
      %c0_88 = arith.constant 0 : index
      %c0_89 = arith.constant 0 : index
      %c0_90 = arith.constant 0 : index
      %93 = vector.load %arg7[%c0_88, %c0_89, %c0_90] : memref<16x16x128xf32, #tpu.memory_space<vmem>>, vector<16x16x128xf32>
      tpu.vector_store %arg7[%c0_88, %c0_89, %c0_90], %92 {strides = array<i32>} : memref<16x16x128xf32, #tpu.memory_space<vmem>>, vector<16x16x128xf32>,
    } else {
    }
    %c0 = arith.constant 0 : index
    %c0_1 = arith.constant 0 : index
    %c0_2 = arith.constant 0 : index
    %3 = vector.load %arg7[%c0, %c0_1, %c0_2] : memref<16x16x128xf32, #tpu.memory_space<vmem>>, vector<16x16x128xf32>
    %4 = vector.shape_cast %3 : vector<16x16x128xf32> to vector<256x128xf32>
    %c0_3 = arith.constant 0 : index
    %c0_4 = arith.constant 0 : index
    %5 = vector.load %arg5[%c0_3, %c0_4] : memref<128x128xf32, #tpu.memory_space<vmem>>, vector<128x128xf32>
    %cst = arith.constant dense<0.000000e+00> : vector<256x128xf32>
    %6 = tpu.matmul %4, %5, %cst {dimension_numbers = #tpu.dot_dimension_numbers<[1], [0], [0], [1], [0, 0, 1, 1], [], []>, precision = #tpu.contract_precision<fp32>} : vector<256x128xf32>, vector<128x128xf32>, vector<256x128xf32> -> vector<256x128xf32>
    %7 = vector.shape_cast %6 : vector<256x128xf32> to vector<16x16x128xf32>
    %c0_5 = arith.constant 0 : index
    %c0_6 = arith.constant 0 : index
    %c0_7 = arith.constant 0 : index
    %c0_8 = arith.constant 0 : index
    %8 = vector.load %arg6[%c0_5, %c0_6, %c0_7, %c0_8] : memref<1x16x16x128xf32, #tpu.memory_space<vmem>>, vector<1x16x16x128xf32>
    %9 = vector.shape_cast %8 : vector<1x16x16x128xf32> to vector<16x16x128xf32>
    %10 = vector.shape_cast %7 : vector<16x16x128xf32> to vector<1x16x16x128xf32>
    tpu.vector_store %arg6[%c0_5, %c0_6, %c0_7, %c0_8], %10 {strides = array<i32>} : memref<1x16x16x128xf32, #tpu.memory_space<vmem>>, vector<1x16x16x128xf32>,
    return
  }
  func.func @transform_0(%arg0: i32, %arg1: i32, %arg2: i32) -> (i32, i32, i32, i32, i32, i32, i32) {
    %c0_i32 = arith.constant 0 : i32
    %c0_i32_0 = arith.constant 0 : i32
    %c0_i32_1 = arith.constant 0 : i32
    %c0_i32_2 = arith.constant 0 : i32
    %c0_i32_3 = arith.constant 0 : i32
    %c0_i32_4 = arith.constant 0 : i32
    return %arg0, %arg1, %c0_i32, %c0_i32_0, %c0_i32_1, %c0_i32_2, %c0_i32_3 : i32, i32, i32, i32, i32, i32, i32
  }
  func.func @transform_1(%arg0: i32, %arg1: i32, %arg2: i32) -> (i32, i32, i32) {
    %c0_i32 = arith.constant 0 : i32
    %c0_i32_0 = arith.constant 0 : i32
    %c0_i32_1 = arith.constant 0 : i32
    %c0_i32_2 = arith.constant 0 : i32
    return %c0_i32, %c0_i32_0, %c0_i32_1 : i32, i32, i32
  }
  func.func @transform_2(%arg0: i32, %arg1: i32, %arg2: i32) -> (i32, i32) {
    %c0_i32 = arith.constant 0 : i32
    %c0_i32_0 = arith.constant 0 : i32
    return %c0_i32, %arg2 : i32, i32
  }
  func.func @transform_3(%arg0: i32, %arg1: i32, %arg2: i32) -> (i32, i32, i32, i32) {
    %c0_i32 = arith.constant 0 : i32
    %c0_i32_0 = arith.constant 0 : i32
    return %arg0, %arg1, %c0_i32, %arg2 : i32, i32, i32, i32
  }
}

</mosaic_0001>

<llo_original>
// kernel: tpu_custom_call.1
$region0: #{tpu_custom_call.1}
  #allocation0 [shape = 'u32[]', space=smem, size = 0x4, offset = 0x4, fixed_abs, tag = 'smem constant byte address 0x4 - core index']
  #allocation1 [shape = 'u32[144,128]{1,0:T(1,128)}', space=vmem, size = 0x12000, scoped, tag = 'internal scratch']
  #allocation2 [shape = 'f32[16,16,128]{2,1,0:T(8,128)}', space=vmem, size = 0x20000, scoped, tag = 'scratch operand']
  %s0 = inlined_call_operand.vmem [shape: f32[2,1,1,18,1,18,128], index: 0, kind: input, shape index: {}]
  %s1 = inlined_call_operand.vmem [shape: f32[3,3,128], index: 1, kind: input, shape index: {}]
  %s2 = inlined_call_operand.vmem [shape: f32[128,128], index: 2, kind: input, shape index: {}]
  %s3 = inlined_call_operand.hbm [shape: f32[2,16,16,128], index: 3, kind: output, shape index: {}]
  %s4 = sld [smem:[#allocation0]]
  $region49: #{tpu_custom_call.1} parent=0
    _
  %s6 = ssub.s32 1, %s4
  %s7 = scalar_select 0, %s6, %s4
  $region1: #{tpu_custom_call.1} parent=0
    #allocation3 [shape = 'u8[262144]{0}', space=vmem, size = 0x40000, scoped, tag = 'output window, operand 0']
    #allocation4 [shape = 's32[2]{0}', space=sflag, size = 0x8, scoped, tag = 'scoped memory for tpu_custom_call.1']
    %8 = vsyncpa [#allocation4], 0
    %s9 = scalar_lea.sflag [#allocation4], 1
    %10 = vsyncpa %s9, 0
    loop: start=0, step=1, limit=4
    $region2: #{tpu_custom_call.1} parent=1 // loop_pre_header
      _
    $region3: #{tpu_custom_call.1} parent=1 // loop_header
      %s12 = sphi 0, %s16
      %p13 = scmp.ge.s32.totalorder %s12, 4
      %s19 = sphi 0, %s38
      %s20 = sphi 0, %s34
      %s21 = sphi 0, %s30
      %s22 = sphi 0, %s19
      %s23 = sphi 0, %s20
      %s24 = sphi 0, %s21
      %s25 = sphi 0, %s22
      %s26 = sphi 0, %s23
      %s27 = sphi 0, %s24
      %s43 = sphi 0, %s45
      %s46 = sphi 0, %s43
      %s47 = sphi 0, %s46
      %s63 = sphi 0, %s47
      %s67 = sphi 0, %s67
      %s69 = sphi 0, %s67
      %s70 = sphi 0, %s69
      %s84 = sphi 0, %s70
      %s90 = sphi 0, %s92
      %s93 = sphi 0, %s90
      %s94 = sphi 0, %s93
      %s110 = sphi 0, %s94
      %s120 = sphi 0, %s122
      %s123 = sphi 0, %s120
      %s124 = sphi 0, %s123
      %s140 = sphi 0, %s124
    $region4: #{tpu_custom_call.1} parent=1 // loop_header_branch
      %15 = sbr.rel (%p13) target = $region8
    $region5: #{tpu_custom_call.1} parent=1 // loop_body
      %s17 = ssub.s32 %s12, 1
      %s18 = ssub.s32 %s12, 2
      %s28 = sadd.s32 1, %s21
      %p29 = scmp.ge.s32.totalorder %s28, 1
      %s30 = scalar_select %p29, 0, %s28
      %s31 = sadd.s32 1, %s20
      %s32 = scalar_select %p29, %s31, %s20
      %p33 = scmp.ge.s32.totalorder %s32, 1
      %s34 = scalar_select %p33, 0, %s32
      %s35 = sadd.s32 1, %s19
      %s36 = scalar_select %p33, %s35, %s19
      %p37 = scmp.ge.s32.totalorder %s36, 2
      %s38 = scalar_select %p37, 0, %s36
      %s39 = ssub.s32 %s19, %s38
      %s40 = ssub.s32 %s20, %s34
      %s41 = sor.u32 %s39, %s40
      %p42 = scmp.eq.s32.totalorder %s41, 0
      %s44 = sadd.s32 %s43, 1
      %s45 = scalar_select %p42, %s43, %s44
      %p48 = pneg %p42
      %p49 = scmp.eq.s32.totalorder %s12, 1
      %p50 = por %p48, %p49
      %p51 = scmp.ne.s32.totalorder %s43, %s46
      %p52 = scmp.eq.s32.totalorder %s12, 0
      %p53 = por %p51, %p52
      %p54 = scmp.ne.s32.totalorder %s43, %s46
      %p55 = scmp.eq.s32.totalorder %s17, 1
      %p56 = por %p54, %p55
      %p57 = scmp.ne.s32.totalorder %s46, %s47
      %p58 = scmp.eq.s32.totalorder %s17, 0
      %p59 = por %p57, %p58
      %p60 = scmp.ne.s32.totalorder %s46, %s47
      %p61 = scmp.eq.s32.totalorder %s18, 1
      %p62 = por %p60, %p61
      %p64 = scmp.ne.s32.totalorder %s47, %s63
      %p65 = scmp.eq.s32.totalorder %s18, 0
      %p66 = por %p64, %p65
      %s68 = sadd.s32 %s67, 1
      %p71 = scmp.eq.s32.totalorder %s12, 1
      %p72 = scmp.ne.s32.totalorder %s67, %s69
      %p73 = scmp.eq.s32.totalorder %s12, 0
      %p74 = por %p72, %p73
      %p75 = scmp.ne.s32.totalorder %s67, %s69
      %p76 = scmp.eq.s32.totalorder %s17, 1
      %p77 = por %p75, %p76
      %p78 = scmp.ne.s32.totalorder %s69, %s70
      %p79 = scmp.eq.s32.totalorder %s17, 0
      %p80 = por %p78, %p79
      %p81 = scmp.ne.s32.totalorder %s69, %s70
      %p82 = scmp.eq.s32.totalorder %s18, 1
      %p83 = por %p81, %p82
      %p85 = scmp.ne.s32.totalorder %s70, %s84
      %p86 = scmp.eq.s32.totalorder %s18, 0
      %p87 = por %p85, %p86
      %s88 = ssub.s32 %s21, %s30
      %p89 = scmp.eq.s32.totalorder %s88, 0
      %s91 = sadd.s32 %s90, 1
      %s92 = scalar_select %p89, %s90, %s91
      %p95 = pneg %p89
      %p96 = scmp.eq.s32.totalorder %s12, 1
      %p97 = por %p95, %p96
      %p98 = scmp.ne.s32.totalorder %s90, %s93
      %p99 = scmp.eq.s32.totalorder %s12, 0
      %p100 = por %p98, %p99
      %p101 = scmp.ne.s32.totalorder %s90, %s93
      %p102 = scmp.eq.s32.totalorder %s17, 1
      %p103 = por %p101, %p102
      %p104 = scmp.ne.s32.totalorder %s93, %s94
      %p105 = scmp.eq.s32.totalorder %s17, 0
      %p106 = por %p104, %p105
      %p107 = scmp.ne.s32.totalorder %s93, %s94
      %p108 = scmp.eq.s32.totalorder %s18, 1
      %p109 = por %p107, %p108
      %p111 = scmp.ne.s32.totalorder %s94, %s110
      %p112 = scmp.eq.s32.totalorder %s18, 0
      %p113 = por %p111, %p112
      %s114 = ssub.s32 %s19, %s38
      %s115 = ssub.s32 %s20, %s34
      %s116 = sor.u32 %s114, %s115
      %s117 = ssub.s32 %s21, %s30
      %s118 = sor.u32 %s116, %s117
      %p119 = scmp.eq.s32.totalorder %s118, 0
      %s121 = sadd.s32 %s120, 1
      %s122 = scalar_select %p119, %s120, %s121
      %p125 = pneg %p119
      %p126 = scmp.eq.s32.totalorder %s12, 1
      %p127 = por %p125, %p126
      %p128 = scmp.ne.s32.totalorder %s120, %s123
      %p129 = scmp.eq.s32.totalorder %s12, 0
      %p130 = por %p128, %p129
      %p131 = scmp.ne.s32.totalorder %s120, %s123
      %p132 = scmp.eq.s32.totalorder %s17, 1
      %p133 = por %p131, %p132
      %p134 = scmp.ne.s32.totalorder %s123, %s124
      %p135 = scmp.eq.s32.totalorder %s17, 0
      %p136 = por %p134, %p135
      %p137 = scmp.ne.s32.totalorder %s123, %s124
      %p138 = scmp.eq.s32.totalorder %s18, 1
      %p139 = por %p137, %p138
      %p141 = scmp.ne.s32.totalorder %s124, %s140
      %p142 = scmp.eq.s32.totalorder %s18, 0
      %p143 = por %p141, %p142
      %p144 = scmp.le.s32.totalorder 1, %s12
      %p145 = scmp.lt.s32.totalorder %s12, 3
      %p146 = pnand %p144, %p145
      %p147 = pneg %p146
      // Predicated region
      $region9: #{tpu_custom_call.1} parent=5 // pred_check
        _
      $region10: #{tpu_custom_call.1} parent=5 // pred_check_branch
        %149 = sbr.rel (%p146) target = $region12
      $region11: #{tpu_custom_call.1} parent=5 // pred_region
        %s150 = ssub.s32 %s12, 1
        // Predicated region
        $region13: #{tpu_custom_call.1} parent=11 // pred_check
          %p151 = pneg %p80
        $region14: #{tpu_custom_call.1} parent=11 // pred_check_branch
          %153 = sbr.rel (%p151) target = $region16
        $region15: #{tpu_custom_call.1} parent=11 // pred_region
          _
        $region16: #{tpu_custom_call.1} parent=11 // pred_fallthru
          _
        // Predicated region
        $region17: #{tpu_custom_call.1} parent=11 // pred_check
          %p154 = pneg %p106
        $region18: #{tpu_custom_call.1} parent=11 // pred_check_branch
          %156 = sbr.rel (%p154) target = $region20
        $region19: #{tpu_custom_call.1} parent=11 // pred_region
          %p157 = scmp.lt.s32.totalorder %s24, 0
          %s158 = scalar_select %p157, %s24, 0
          %s159 = smul.addr %s158, 8
          %s160 = scalar_lea.vmem %s2, %s159
        $region20: #{tpu_custom_call.1} parent=11 // pred_fallthru
          _
      $region12: #{tpu_custom_call.1} parent=5 // pred_fallthru
        _
      %p161 = scmp.lt.s32.totalorder %s12, 2
      // Predicated region
      $region21: #{tpu_custom_call.1} parent=5 // pred_check
        %p162 = pneg %p161
      $region22: #{tpu_custom_call.1} parent=5 // pred_check_branch
        %164 = sbr.rel (%p162) target = $region24
      $region23: #{tpu_custom_call.1} parent=5 // pred_region
        // Predicated region
        $region25: #{tpu_custom_call.1} parent=23 // pred_check
          %p165 = pneg %p53
        $region26: #{tpu_custom_call.1} parent=23 // pred_check_branch
          %167 = sbr.rel (%p165) target = $region28
        $region27: #{tpu_custom_call.1} parent=23 // pred_region
          %p168 = scmp.lt.s32.totalorder %s19, 1
          %s169 = scalar_select %p168, %s19, 1
          %p170 = scmp.lt.s32.totalorder %s20, 0
          %s171 = scalar_select %p170, %s20, 0
          %s172 = smul.addr %s171, 54
          %s173 = smul.addr %s169, 54
          %s174 = sadd.s32 %s172, %s173
          %s175 = smul.addr %s174, 8
          %s176 = scalar_lea.vmem %s0, %s175
        $region28: #{tpu_custom_call.1} parent=23 // pred_fallthru
          _
      $region24: #{tpu_custom_call.1} parent=5 // pred_fallthru
        _
      %p177 = scmp.le.s32.totalorder 1, %s12
      %p178 = scmp.lt.s32.totalorder %s12, 3
      %p179 = pnand %p177, %p178
      %p180 = pneg %p179
      // Predicated region
      $region29: #{tpu_custom_call.1} parent=5 // pred_check
        _
      $region30: #{tpu_custom_call.1} parent=5 // pred_check_branch
        %182 = sbr.rel (%p179) target = $region32
      $region31: #{tpu_custom_call.1} parent=5 // pred_region
        %s183 = ssub.s32 %s12, 1
        %p184 = scmp.lt.s32.totalorder %s22, 1
        %s185 = scalar_select %p184, %s22, 1
        %p186 = scmp.lt.s32.totalorder %s23, 0
        %s187 = scalar_select %p186, %s23, 0
        %s188 = smul.addr %s187, 54
        %s189 = smul.addr %s185, 54
        %s190 = sadd.s32 %s188, %s189
        %s191 = smul.addr %s190, 8
        %s192 = scalar_lea.vmem %s0, %s191
        %p193 = pneg %p59
        %p194 = pneg %p56
        %p195 = pneg %p80
        %p196 = pneg %p77
        %p197 = scmp.lt.s32.totalorder %s24, 0
        %s198 = scalar_select %p197, %s24, 0
        %s199 = smul.addr %s198, 8
        %s200 = scalar_lea.vmem %s2, %s199
        %p201 = pneg %p106
        %p202 = pneg %p103
        %p203 = pneg %p136
        %p204 = pneg %p133
        %s205 = sand.u32 %s123, 1
        %s206 = scalar_lea.sflag [#allocation4], %s205
        %s207 = sand.u32 %s123, 1
        %s208 = smul.addr %s207, 256
        %s209 = scalar_lea.vmem [#allocation3], %s208
        %p210 = scmp.lt.s32.totalorder %s22, 1
        %s211 = scalar_select %p210, %s22, 1
        %p212 = scmp.lt.s32.totalorder %s23, 0
        %s213 = scalar_select %p212, %s23, 0
        %s214 = smul.addr %s213, 54
        %s215 = smul.addr %s211, 54
        %s216 = sadd.s32 %s214, %s215
        %s217 = smul.addr %s216, 8
        %s218 = scalar_lea.vmem %s0, %s217
        %p219 = scmp.lt.s32.totalorder %s24, 0
        %s220 = scalar_select %p219, %s24, 0
        %s221 = smul.addr %s220, 8
        %s222 = scalar_lea.vmem %s2, %s221
        %s223 = smul.u32 16, %s23
        %p224 = scmp.eq.s32.totalorder %s24, 0
        // Predicated region
        $region33: #{tpu_custom_call.1} parent=31 // pred_check
          %p225 = pneg %p224
        $region34: #{tpu_custom_call.1} parent=31 // pred_check_branch
          %227 = sbr.rel (%p225) target = $region36
        $region35: #{tpu_custom_call.1} parent=31 // pred_region
          %v228 = vld [vmem:[%s1] sm:$0x7]
          %v229 = vld [vmem:[%s1 + $0x4] sm:$0x7]
          %v230 = vld [vmem:[%s1 + $0x8] sm:$0x7]
          %v231 = vld [vmem:[%s218] sm:$0xff]
          %v232 = vld [vmem:[%s218 + $0x8] sm:$0xff]
          %v233 = vld [vmem:[%s218 + $0x18] sm:$0xff]
          %v234 = vld [vmem:[%s218 + $0x20] sm:$0xff]
          %v235 = vld [vmem:[%s218 + $0x30] sm:$0xff]
          %v236 = vld [vmem:[%s218 + $0x38] sm:$0xff]
          %v237 = vld [vmem:[%s218 + $0x48] sm:$0xff]
          %v238 = vld [vmem:[%s218 + $0x50] sm:$0xff]
          %v239 = vld [vmem:[%s218 + $0x60] sm:$0xff]
          %v240 = vld [vmem:[%s218 + $0x68] sm:$0xff]
          %v241 = vld [vmem:[%s218 + $0x78] sm:$0xff]
          %v242 = vld [vmem:[%s218 + $0x80] sm:$0xff]
          %v243 = vld [vmem:[%s218 + $0x90] sm:$0xff]
          %v244 = vld [vmem:[%s218 + $0x98] sm:$0xff]
          %v245 = vld [vmem:[%s218 + $0xa8] sm:$0xff]
          %v246 = vld [vmem:[%s218 + $0xb0] sm:$0xff]
          %v247 = vld [vmem:[%s218 + $0xc0] sm:$0xff]
          %v248 = vld [vmem:[%s218 + $0xc8] sm:$0xff]
          %v249 = vld [vmem:[%s218 + $0xd8] sm:$0xff]
          %v250 = vld [vmem:[%s218 + $0xe0] sm:$0xff]
          %v251 = vld [vmem:[%s218 + $0xf0] sm:$0xff]
          %v252 = vld [vmem:[%s218 + $0xf8] sm:$0xff]
          %v253 = vld [vmem:[%s218 + $0x108] sm:$0xff]
          %v254 = vld [vmem:[%s218 + $0x110] sm:$0xff]
          %v255 = vld [vmem:[%s218 + $0x120] sm:$0xff]
          %v256 = vld [vmem:[%s218 + $0x128] sm:$0xff]
          %v257 = vld [vmem:[%s218 + $0x138] sm:$0xff]
          %v258 = vld [vmem:[%s218 + $0x140] sm:$0xff]
          %v259 = vld [vmem:[%s218 + $0x150] sm:$0xff]
          %v260 = vld [vmem:[%s218 + $0x158] sm:$0xff]
          %v261 = vld [vmem:[%s218 + $0x168] sm:$0xff]
          %v262 = vld [vmem:[%s218 + $0x170] sm:$0xff]
          %v263 = vlaneseq
          %v264 = vshrl.u32 %v263, 7
          %v265 = vsub.s32 0, %v264
          %v266 = vrot.slane %v228, %v265
          %v267 = vmul.f32 %v231, %v266
          %v268 = vmul.f32 %v232, %v266
          %v269 = vmul.f32 %v233, %v266
          %v270 = vmul.f32 %v234, %v266
          %v271 = vmul.f32 %v235, %v266
          %v272 = vmul.f32 %v236, %v266
          %v273 = vmul.f32 %v237, %v266
          %v274 = vmul.f32 %v238, %v266
          %v275 = vmul.f32 %v239, %v266
          %v276 = vmul.f32 %v240, %v266
          %v277 = vmul.f32 %v241, %v266
          %v278 = vmul.f32 %v242, %v266
          %v279 = vmul.f32 %v243, %v266
          %v280 = vmul.f32 %v244, %v266
          %v281 = vmul.f32 %v245, %v266
          %v282 = vmul.f32 %v246, %v266
          %v283 = vmul.f32 %v247, %v266
          %v284 = vmul.f32 %v248, %v266
          %v285 = vmul.f32 %v249, %v266
          %v286 = vmul.f32 %v250, %v266
          %v287 = vmul.f32 %v251, %v266
          %v288 = vmul.f32 %v252, %v266
          %v289 = vmul.f32 %v253, %v266
          %v290 = vmul.f32 %v254, %v266
          %v291 = vmul.f32 %v255, %v266
          %v292 = vmul.f32 %v256, %v266
          %v293 = vmul.f32 %v257, %v266
          %v294 = vmul.f32 %v258, %v266
          %v295 = vmul.f32 %v259, %v266
          %v296 = vmul.f32 %v260, %v266
          %v297 = vmul.f32 %v261, %v266
          %v298 = vmul.f32 %v262, %v266
          %v299 = vadd.f32 %v267, 0.0
          %v300 = vadd.f32 %v268, 0.0
          %v301 = vadd.f32 %v269, 0.0
          %v302 = vadd.f32 %v270, 0.0
          %v303 = vadd.f32 %v271, 0.0
          %v304 = vadd.f32 %v272, 0.0
          %v305 = vadd.f32 %v273, 0.0
          %v306 = vadd.f32 %v274, 0.0
          %v307 = vadd.f32 %v275, 0.0
          %v308 = vadd.f32 %v276, 0.0
          %v309 = vadd.f32 %v277, 0.0
          %v310 = vadd.f32 %v278, 0.0
          %v311 = vadd.f32 %v279, 0.0
          %v312 = vadd.f32 %v280, 0.0
          %v313 = vadd.f32 %v281, 0.0
          %v314 = vadd.f32 %v282, 0.0
          %v315 = vadd.f32 %v283, 0.0
          %v316 = vadd.f32 %v284, 0.0
          %v317 = vadd.f32 %v285, 0.0
          %v318 = vadd.f32 %v286, 0.0
          %v319 = vadd.f32 %v287, 0.0
          %v320 = vadd.f32 %v288, 0.0
          %v321 = vadd.f32 %v289, 0.0
          %v322 = vadd.f32 %v290, 0.0
          %v323 = vadd.f32 %v291, 0.0
          %v324 = vadd.f32 %v292, 0.0
          %v325 = vadd.f32 %v293, 0.0
          %v326 = vadd.f32 %v294, 0.0
          %v327 = vadd.f32 %v295, 0.0
          %v328 = vadd.f32 %v296, 0.0
          %v329 = vadd.f32 %v297, 0.0
          %v330 = vadd.f32 %v298, 0.0
          %s331 = scalar_lea.vmem %s218, 24
          %v332 = vld [vmem:[%s331] sm:$0xff]
          %v333 = vld [vmem:[%s331 + $0x8] sm:$0xff]
          %v334 = vld [vmem:[%s331 + $0x18] sm:$0xff]
          %v335 = vld [vmem:[%s331 + $0x20] sm:$0xff]
          %v336 = vld [vmem:[%s331 + $0x30] sm:$0xff]
          %v337 = vld [vmem:[%s331 + $0x38] sm:$0xff]
          %v338 = vld [vmem:[%s331 + $0x48] sm:$0xff]
          %v339 = vld [vmem:[%s331 + $0x50] sm:$0xff]
          %v340 = vld [vmem:[%s331 + $0x60] sm:$0xff]
          %v341 = vld [vmem:[%s331 + $0x68] sm:$0xff]
          %v342 = vld [vmem:[%s331 + $0x78] sm:$0xff]
          %v343 = vld [vmem:[%s331 + $0x80] sm:$0xff]
          %v344 = vld [vmem:[%s331 + $0x90] sm:$0xff]
          %v345 = vld [vmem:[%s331 + $0x98] sm:$0xff]
          %v346 = vld [vmem:[%s331 + $0xa8] sm:$0xff]
          %v347 = vld [vmem:[%s331 + $0xb0] sm:$0xff]
          %v348 = vld [vmem:[%s331 + $0xc0] sm:$0xff]
          %v349 = vld [vmem:[%s331 + $0xc8] sm:$0xff]
          %v350 = vld [vmem:[%s331 + $0xd8] sm:$0xff]
          %v351 = vld [vmem:[%s331 + $0xe0] sm:$0xff]
          %v352 = vld [vmem:[%s331 + $0xf0] sm:$0xff]
          %v353 = vld [vmem:[%s331 + $0xf8] sm:$0xff]
          %v354 = vld [vmem:[%s331 + $0x108] sm:$0xff]
          %v355 = vld [vmem:[%s331 + $0x110] sm:$0xff]
          %v356 = vld [vmem:[%s331 + $0x120] sm:$0xff]
          %v357 = vld [vmem:[%s331 + $0x128] sm:$0xff]
          %v358 = vld [vmem:[%s331 + $0x138] sm:$0xff]
          %v359 = vld [vmem:[%s331 + $0x140] sm:$0xff]
          %v360 = vld [vmem:[%s331 + $0x150] sm:$0xff]
          %v361 = vld [vmem:[%s331 + $0x158] sm:$0xff]
          %v362 = vld [vmem:[%s331 + $0x168] sm:$0xff]
          %v363 = vld [vmem:[%s331 + $0x170] sm:$0xff]
          %v364 = vlaneseq
          %v365 = vshrl.u32 %v364, 7
          %v366 = vsub.s32 0, %v365
          %v367 = vrot.slane %v229, %v366
          %v368 = vmul.f32 %v332, %v367
          %v369 = vmul.f32 %v333, %v367
          %v370 = vmul.f32 %v334, %v367
          %v371 = vmul.f32 %v335, %v367
          %v372 = vmul.f32 %v336, %v367
          %v373 = vmul.f32 %v337, %v367
          %v374 = vmul.f32 %v338, %v367
          %v375 = vmul.f32 %v339, %v367
          %v376 = vmul.f32 %v340, %v367
          %v377 = vmul.f32 %v341, %v367
          %v378 = vmul.f32 %v342, %v367
          %v379 = vmul.f32 %v343, %v367
          %v380 = vmul.f32 %v344, %v367
          %v381 = vmul.f32 %v345, %v367
          %v382 = vmul.f32 %v346, %v367
          %v383 = vmul.f32 %v347, %v367
          %v384 = vmul.f32 %v348, %v367
          %v385 = vmul.f32 %v349, %v367
          %v386 = vmul.f32 %v350, %v367
          %v387 = vmul.f32 %v351, %v367
          %v388 = vmul.f32 %v352, %v367
          %v389 = vmul.f32 %v353, %v367
          %v390 = vmul.f32 %v354, %v367
          %v391 = vmul.f32 %v355, %v367
          %v392 = vmul.f32 %v356, %v367
          %v393 = vmul.f32 %v357, %v367
          %v394 = vmul.f32 %v358, %v367
          %v395 = vmul.f32 %v359, %v367
          %v396 = vmul.f32 %v360, %v367
          %v397 = vmul.f32 %v361, %v367
          %v398 = vmul.f32 %v362, %v367
          %v399 = vmul.f32 %v363, %v367
          %v400 = vadd.f32 %v299, %v368
          %v401 = vadd.f32 %v300, %v369
          %v402 = vadd.f32 %v301, %v370
          %v403 = vadd.f32 %v302, %v371
          %v404 = vadd.f32 %v303, %v372
          %v405 = vadd.f32 %v304, %v373
          %v406 = vadd.f32 %v305, %v374
          %v407 = vadd.f32 %v306, %v375
          %v408 = vadd.f32 %v307, %v376
          %v409 = vadd.f32 %v308, %v377
          %v410 = vadd.f32 %v309, %v378
          %v411 = vadd.f32 %v310, %v379
          %v412 = vadd.f32 %v311, %v380
          %v413 = vadd.f32 %v312, %v381
          %v414 = vadd.f32 %v313, %v382
          %v415 = vadd.f32 %v314, %v383
          %v416 = vadd.f32 %v315, %v384
          %v417 = vadd.f32 %v316, %v385
          %v418 = vadd.f32 %v317, %v386
          %v419 = vadd.f32 %v318, %v387
          %v420 = vadd.f32 %v319, %v388
          %v421 = vadd.f32 %v320, %v389
          %v422 = vadd.f32 %v321, %v390
          %v423 = vadd.f32 %v322, %v391
          %v424 = vadd.f32 %v323, %v392
          %v425 = vadd.f32 %v324, %v393
          %v426 = vadd.f32 %v325, %v394
          %v427 = vadd.f32 %v326, %v395
          %v428 = vadd.f32 %v327, %v396
          %v429 = vadd.f32 %v328, %v397
          %v430 = vadd.f32 %v329, %v398
          %v431 = vadd.f32 %v330, %v399
          %s432 = scalar_lea.vmem %s218, 48
          %v433 = vld [vmem:[%s432] sm:$0xff]
          %v434 = vld [vmem:[%s432 + $0x8] sm:$0xff]
          %v435 = vld [vmem:[%s432 + $0x18] sm:$0xff]
          %v436 = vld [vmem:[%s432 + $0x20] sm:$0xff]
          %v437 = vld [vmem:[%s432 + $0x30] sm:$0xff]
          %v438 = vld [vmem:[%s432 + $0x38] sm:$0xff]
          %v439 = vld [vmem:[%s432 + $0x48] sm:$0xff]
          %v440 = vld [vmem:[%s432 + $0x50] sm:$0xff]
          %v441 = vld [vmem:[%s432 + $0x60] sm:$0xff]
          %v442 = vld [vmem:[%s432 + $0x68] sm:$0xff]
          %v443 = vld [vmem:[%s432 + $0x78] sm:$0xff]
          %v444 = vld [vmem:[%s432 + $0x80] sm:$0xff]
          %v445 = vld [vmem:[%s432 + $0x90] sm:$0xff]
          %v446 = vld [vmem:[%s432 + $0x98] sm:$0xff]
          %v447 = vld [vmem:[%s432 + $0xa8] sm:$0xff]
          %v448 = vld [vmem:[%s432 + $0xb0] sm:$0xff]
          %v449 = vld [vmem:[%s432 + $0xc0] sm:$0xff]
          %v450 = vld [vmem:[%s432 + $0xc8] sm:$0xff]
          %v451 = vld [vmem:[%s432 + $0xd8] sm:$0xff]
          %v452 = vld [vmem:[%s432 + $0xe0] sm:$0xff]
          %v453 = vld [vmem:[%s432 + $0xf0] sm:$0xff]
          %v454 = vld [vmem:[%s432 + $0xf8] sm:$0xff]
          %v455 = vld [vmem:[%s432 + $0x108] sm:$0xff]
          %v456 = vld [vmem:[%s432 + $0x110] sm:$0xff]
          %v457 = vld [vmem:[%s432 + $0x120] sm:$0xff]
          %v458 = vld [vmem:[%s432 + $0x128] sm:$0xff]
          %v459 = vld [vmem:[%s432 + $0x138] sm:$0xff]
          %v460 = vld [vmem:[%s432 + $0x140] sm:$0xff]
          %v461 = vld [vmem:[%s432 + $0x150] sm:$0xff]
          %v462 = vld [vmem:[%s432 + $0x158] sm:$0xff]
          %v463 = vld [vmem:[%s432 + $0x168] sm:$0xff]
          %v464 = vld [vmem:[%s432 + $0x170] sm:$0xff]
          %v465 = vlaneseq
          %v466 = vshrl.u32 %v465, 7
          %v467 = vsub.s32 0, %v466
          %v468 = vrot.slane %v230, %v467
          %v469 = vmul.f32 %v433, %v468
          %v470 = vmul.f32 %v434, %v468
          %v471 = vmul.f32 %v435, %v468
          %v472 = vmul.f32 %v436, %v468
          %v473 = vmul.f32 %v437, %v468
          %v474 = vmul.f32 %v438, %v468
          %v475 = vmul.f32 %v439, %v468
          %v476 = vmul.f32 %v440, %v468
          %v477 = vmul.f32 %v441, %v468
          %v478 = vmul.f32 %v442, %v468
          %v479 = vmul.f32 %v443, %v468
          %v480 = vmul.f32 %v444, %v468
          %v481 = vmul.f32 %v445, %v468
          %v482 = vmul.f32 %v446, %v468
          %v483 = vmul.f32 %v447, %v468
          %v484 = vmul.f32 %v448, %v468
          %v485 = vmul.f32 %v449, %v468
          %v486 = vmul.f32 %v450, %v468
          %v487 = vmul.f32 %v451, %v468
          %v488 = vmul.f32 %v452, %v468
          %v489 = vmul.f32 %v453, %v468
          %v490 = vmul.f32 %v454, %v468
          %v491 = vmul.f32 %v455, %v468
          %v492 = vmul.f32 %v456, %v468
          %v493 = vmul.f32 %v457, %v468
          %v494 = vmul.f32 %v458, %v468
          %v495 = vmul.f32 %v459, %v468
          %v496 = vmul.f32 %v460, %v468
          %v497 = vmul.f32 %v461, %v468
          %v498 = vmul.f32 %v462, %v468
          %v499 = vmul.f32 %v463, %v468
          %v500 = vmul.f32 %v464, %v468
          %v501 = vadd.f32 %v400, %v469
          %v502 = vadd.f32 %v401, %v470
          %v503 = vadd.f32 %v402, %v471
          %v504 = vadd.f32 %v403, %v472
          %v505 = vadd.f32 %v404, %v473
          %v506 = vadd.f32 %v405, %v474
          %v507 = vadd.f32 %v406, %v475
          %v508 = vadd.f32 %v407, %v476
          %v509 = vadd.f32 %v408, %v477
          %v510 = vadd.f32 %v409, %v478
          %v511 = vadd.f32 %v410, %v479
          %v512 = vadd.f32 %v411, %v480
          %v513 = vadd.f32 %v412, %v481
          %v514 = vadd.f32 %v413, %v482
          %v515 = vadd.f32 %v414, %v483
          %v516 = vadd.f32 %v415, %v484
          %v517 = vadd.f32 %v416, %v485
          %v518 = vadd.f32 %v417, %v486
          %v519 = vadd.f32 %v418, %v487
          %v520 = vadd.f32 %v419, %v488
          %v521 = vadd.f32 %v420, %v489
          %v522 = vadd.f32 %v421, %v490
          %v523 = vadd.f32 %v422, %v491
          %v524 = vadd.f32 %v423, %v492
          %v525 = vadd.f32 %v424, %v493
          %v526 = vadd.f32 %v425, %v494
          %v527 = vadd.f32 %v426, %v495
          %v528 = vadd.f32 %v427, %v496
          %v529 = vadd.f32 %v428, %v497
          %v530 = vadd.f32 %v429, %v498
          %v531 = vadd.f32 %v430, %v499
          %v532 = vadd.f32 %v431, %v500
          %533 = vst [vmem:[#allocation2] sm:$0xff] %v501
          %534 = vst [vmem:[#allocation2 + $0x8] sm:$0xff] %v502
          %535 = vst [vmem:[#allocation2 + $0x10] sm:$0xff] %v503
          %536 = vst [vmem:[#allocation2 + $0x18] sm:$0xff] %v504
          %537 = vst [vmem:[#allocation2 + $0x20] sm:$0xff] %v505
          %538 = vst [vmem:[#allocation2 + $0x28] sm:$0xff] %v506
          %539 = vst [vmem:[#allocation2 + $0x30] sm:$0xff] %v507
          %540 = vst [vmem:[#allocation2 + $0x38] sm:$0xff] %v508
          %541 = vst [vmem:[#allocation2 + $0x40] sm:$0xff] %v509
          %542 = vst [vmem:[#allocation2 + $0x48] sm:$0xff] %v510
          %543 = vst [vmem:[#allocation2 + $0x50] sm:$0xff] %v511
          %544 = vst [vmem:[#allocation2 + $0x58] sm:$0xff] %v512
          %545 = vst [vmem:[#allocation2 + $0x60] sm:$0xff] %v513
          %546 = vst [vmem:[#allocation2 + $0x68] sm:$0xff] %v514
          %547 = vst [vmem:[#allocation2 + $0x70] sm:$0xff] %v515
          %548 = vst [vmem:[#allocation2 + $0x78] sm:$0xff] %v516
          %549 = vst [vmem:[#allocation2 + $0x80] sm:$0xff] %v517
          %550 = vst [vmem:[#allocation2 + $0x88] sm:$0xff] %v518
          %551 = vst [vmem:[#allocation2 + $0x90] sm:$0xff] %v519
          %552 = vst [vmem:[#allocation2 + $0x98] sm:$0xff] %v520
          %553 = vst [vmem:[#allocation2 + $0xa0] sm:$0xff] %v521
          %554 = vst [vmem:[#allocation2 + $0xa8] sm:$0xff] %v522
          %555 = vst [vmem:[#allocation2 + $0xb0] sm:$0xff] %v523
          %556 = vst [vmem:[#allocation2 + $0xb8] sm:$0xff] %v524
          %557 = vst [vmem:[#allocation2 + $0xc0] sm:$0xff] %v525
          %558 = vst [vmem:[#allocation2 + $0xc8] sm:$0xff] %v526
          %559 = vst [vmem:[#allocation2 + $0xd0] sm:$0xff] %v527
          %560 = vst [vmem:[#allocation2 + $0xd8] sm:$0xff] %v528
          %561 = vst [vmem:[#allocation2 + $0xe0] sm:$0xff] %v529
          %562 = vst [vmem:[#allocation2 + $0xe8] sm:$0xff] %v530
          %563 = vst [vmem:[#allocation2 + $0xf0] sm:$0xff] %v531
          %564 = vst [vmem:[#allocation2 + $0xf8] sm:$0xff] %v532
          %v565 = vld [vmem:[%s218 + $0x1] sm:$0xff]
          %v566 = vld [vmem:[%s218 + $0x9] sm:$0xff]
          %v567 = vld [vmem:[%s218 + $0x19] sm:$0xff]
          %v568 = vld [vmem:[%s218 + $0x21] sm:$0xff]
          %v569 = vld [vmem:[%s218 + $0x31] sm:$0xff]
          %v570 = vld [vmem:[%s218 + $0x39] sm:$0xff]
          %v571 = vld [vmem:[%s218 + $0x49] sm:$0xff]
          %v572 = vld [vmem:[%s218 + $0x51] sm:$0xff]
          %v573 = vld [vmem:[%s218 + $0x61] sm:$0xff]
          %v574 = vld [vmem:[%s218 + $0x69] sm:$0xff]
          %v575 = vld [vmem:[%s218 + $0x79] sm:$0xff]
          %v576 = vld [vmem:[%s218 + $0x81] sm:$0xff]
          %v577 = vld [vmem:[%s218 + $0x91] sm:$0xff]
          %v578 = vld [vmem:[%s218 + $0x99] sm:$0xff]
          %v579 = vld [vmem:[%s218 + $0xa9] sm:$0xff]
          %v580 = vld [vmem:[%s218 + $0xb1] sm:$0xff]
          %v581 = vld [vmem:[%s218 + $0xc1] sm:$0xff]
          %v582 = vld [vmem:[%s218 + $0xc9] sm:$0xff]
          %v583 = vld [vmem:[%s218 + $0xd9] sm:$0xff]
          %v584 = vld [vmem:[%s218 + $0xe1] sm:$0xff]
          %v585 = vld [vmem:[%s218 + $0xf1] sm:$0xff]
          %v586 = vld [vmem:[%s218 + $0xf9] sm:$0xff]
          %v587 = vld [vmem:[%s218 + $0x109] sm:$0xff]
          %v588 = vld [vmem:[%s218 + $0x111] sm:$0xff]
          %v589 = vld [vmem:[%s218 + $0x121] sm:$0xff]
          %v590 = vld [vmem:[%s218 + $0x129] sm:$0xff]
          %v591 = vld [vmem:[%s218 + $0x139] sm:$0xff]
          %v592 = vld [vmem:[%s218 + $0x141] sm:$0xff]
          %v593 = vld [vmem:[%s218 + $0x151] sm:$0xff]
          %v594 = vld [vmem:[%s218 + $0x159] sm:$0xff]
          %v595 = vld [vmem:[%s218 + $0x169] sm:$0xff]
          %v596 = vld [vmem:[%s218 + $0x171] sm:$0xff]
          %v597 = vlaneseq
          %v598 = vshrl.u32 %v597, 7
          %v599 = vsub.s32 1, %v598
          %v600 = vrot.slane %v228, %v599
          %v601 = vmul.f32 %v565, %v600
          %v602 = vmul.f32 %v566, %v600
          %v603 = vmul.f32 %v567, %v600
          %v604 = vmul.f32 %v568, %v600
          %v605 = vmul.f32 %v569, %v600
          %v606 = vmul.f32 %v570, %v600
          %v607 = vmul.f32 %v571, %v600
          %v608 = vmul.f32 %v572, %v600
          %v609 = vmul.f32 %v573, %v600
          %v610 = vmul.f32 %v574, %v600
          %v611 = vmul.f32 %v575, %v600
          %v612 = vmul.f32 %v576, %v600
          %v613 = vmul.f32 %v577, %v600
          %v614 = vmul.f32 %v578, %v600
          %v615 = vmul.f32 %v579, %v600
          %v616 = vmul.f32 %v580, %v600
          %v617 = vmul.f32 %v581, %v600
          %v618 = vmul.f32 %v582, %v600
          %v619 = vmul.f32 %v583, %v600
          %v620 = vmul.f32 %v584, %v600
          %v621 = vmul.f32 %v585, %v600
          %v622 = vmul.f32 %v586, %v600
          %v623 = vmul.f32 %v587, %v600
          %v624 = vmul.f32 %v588, %v600
          %v625 = vmul.f32 %v589, %v600
          %v626 = vmul.f32 %v590, %v600
          %v627 = vmul.f32 %v591, %v600
          %v628 = vmul.f32 %v592, %v600
          %v629 = vmul.f32 %v593, %v600
          %v630 = vmul.f32 %v594, %v600
          %v631 = vmul.f32 %v595, %v600
          %v632 = vmul.f32 %v596, %v600
          %v633 = vadd.f32 %v601, 0.0
          %v634 = vadd.f32 %v602, 0.0
          %v635 = vadd.f32 %v603, 0.0
          %v636 = vadd.f32 %v604, 0.0
          %v637 = vadd.f32 %v605, 0.0
          %v638 = vadd.f32 %v606, 0.0
          %v639 = vadd.f32 %v607, 0.0
          %v640 = vadd.f32 %v608, 0.0
          %v641 = vadd.f32 %v609, 0.0
          %v642 = vadd.f32 %v610, 0.0
          %v643 = vadd.f32 %v611, 0.0
          %v644 = vadd.f32 %v612, 0.0
          %v645 = vadd.f32 %v613, 0.0
          %v646 = vadd.f32 %v614, 0.0
          %v647 = vadd.f32 %v615, 0.0
          %v648 = vadd.f32 %v616, 0.0
          %v649 = vadd.f32 %v617, 0.0
          %v650 = vadd.f32 %v618, 0.0
          %v651 = vadd.f32 %v619, 0.0
          %v652 = vadd.f32 %v620, 0.0
          %v653 = vadd.f32 %v621, 0.0
          %v654 = vadd.f32 %v622, 0.0
          %v655 = vadd.f32 %v623, 0.0
          %v656 = vadd.f32 %v624, 0.0
          %v657 = vadd.f32 %v625, 0.0
          %v658 = vadd.f32 %v626, 0.0
          %v659 = vadd.f32 %v627, 0.0
          %v660 = vadd.f32 %v628, 0.0
          %v661 = vadd.f32 %v629, 0.0
          %v662 = vadd.f32 %v630, 0.0
          %v663 = vadd.f32 %v631, 0.0
          %v664 = vadd.f32 %v632, 0.0
          %v665 = vld [vmem:[%s331 + $0x1] sm:$0xff]
          %v666 = vld [vmem:[%s331 + $0x9] sm:$0xff]
          %v667 = vld [vmem:[%s331 + $0x19] sm:$0xff]
          %v668 = vld [vmem:[%s331 + $0x21] sm:$0xff]
          %v669 = vld [vmem:[%s331 + $0x31] sm:$0xff]
          %v670 = vld [vmem:[%s331 + $0x39] sm:$0xff]
          %v671 = vld [vmem:[%s331 + $0x49] sm:$0xff]
          %v672 = vld [vmem:[%s331 + $0x51] sm:$0xff]
          %v673 = vld [vmem:[%s331 + $0x61] sm:$0xff]
          %v674 = vld [vmem:[%s331 + $0x69] sm:$0xff]
          %v675 = vld [vmem:[%s331 + $0x79] sm:$0xff]
          %v676 = vld [vmem:[%s331 + $0x81] sm:$0xff]
          %v677 = vld [vmem:[%s331 + $0x91] sm:$0xff]
          %v678 = vld [vmem:[%s331 + $0x99] sm:$0xff]
          %v679 = vld [vmem:[%s331 + $0xa9] sm:$0xff]
          %v680 = vld [vmem:[%s331 + $0xb1] sm:$0xff]
          %v681 = vld [vmem:[%s331 + $0xc1] sm:$0xff]
          %v682 = vld [vmem:[%s331 + $0xc9] sm:$0xff]
          %v683 = vld [vmem:[%s331 + $0xd9] sm:$0xff]
          %v684 = vld [vmem:[%s331 + $0xe1] sm:$0xff]
          %v685 = vld [vmem:[%s331 + $0xf1] sm:$0xff]
          %v686 = vld [vmem:[%s331 + $0xf9] sm:$0xff]
          %v687 = vld [vmem:[%s331 + $0x109] sm:$0xff]
          %v688 = vld [vmem:[%s331 + $0x111] sm:$0xff]
          %v689 = vld [vmem:[%s331 + $0x121] sm:$0xff]
          %v690 = vld [vmem:[%s331 + $0x129] sm:$0xff]
          %v691 = vld [vmem:[%s331 + $0x139] sm:$0xff]
          %v692 = vld [vmem:[%s331 + $0x141] sm:$0xff]
          %v693 = vld [vmem:[%s331 + $0x151] sm:$0xff]
          %v694 = vld [vmem:[%s331 + $0x159] sm:$0xff]
          %v695 = vld [vmem:[%s331 + $0x169] sm:$0xff]
          %v696 = vld [vmem:[%s331 + $0x171] sm:$0xff]
          %v697 = vlaneseq
          %v698 = vshrl.u32 %v697, 7
          %v699 = vsub.s32 1, %v698
          %v700 = vrot.slane %v229, %v699
          %v701 = vmul.f32 %v665, %v700
          %v702 = vmul.f32 %v666, %v700
          %v703 = vmul.f32 %v667, %v700
          %v704 = vmul.f32 %v668, %v700
          %v705 = vmul.f32 %v669, %v700
          %v706 = vmul.f32 %v670, %v700
          %v707 = vmul.f32 %v671, %v700
          %v708 = vmul.f32 %v672, %v700
          %v709 = vmul.f32 %v673, %v700
          %v710 = vmul.f32 %v674, %v700
          %v711 = vmul.f32 %v675, %v700
          %v712 = vmul.f32 %v676, %v700
          %v713 = vmul.f32 %v677, %v700
          %v714 = vmul.f32 %v678, %v700
          %v715 = vmul.f32 %v679, %v700
          %v716 = vmul.f32 %v680, %v700
          %v717 = vmul.f32 %v681, %v700
          %v718 = vmul.f32 %v682, %v700
          %v719 = vmul.f32 %v683, %v700
          %v720 = vmul.f32 %v684, %v700
          %v721 = vmul.f32 %v685, %v700
          %v722 = vmul.f32 %v686, %v700
          %v723 = vmul.f32 %v687, %v700
          %v724 = vmul.f32 %v688, %v700
          %v725 = vmul.f32 %v689, %v700
          %v726 = vmul.f32 %v690, %v700
          %v727 = vmul.f32 %v691, %v700
          %v728 = vmul.f32 %v692, %v700
          %v729 = vmul.f32 %v693, %v700
          %v730 = vmul.f32 %v694, %v700
          %v731 = vmul.f32 %v695, %v700
          %v732 = vmul.f32 %v696, %v700
          %v733 = vadd.f32 %v633, %v701
          %v734 = vadd.f32 %v634, %v702
          %v735 = vadd.f32 %v635, %v703
          %v736 = vadd.f32 %v636, %v704
          %v737 = vadd.f32 %v637, %v705
          %v738 = vadd.f32 %v638, %v706
          %v739 = vadd.f32 %v639, %v707
          %v740 = vadd.f32 %v640, %v708
          %v741 = vadd.f32 %v641, %v709
          %v742 = vadd.f32 %v642, %v710
          %v743 = vadd.f32 %v643, %v711
          %v744 = vadd.f32 %v644, %v712
          %v745 = vadd.f32 %v645, %v713
          %v746 = vadd.f32 %v646, %v714
          %v747 = vadd.f32 %v647, %v715
          %v748 = vadd.f32 %v648, %v716
          %v749 = vadd.f32 %v649, %v717
          %v750 = vadd.f32 %v650, %v718
          %v751 = vadd.f32 %v651, %v719
          %v752 = vadd.f32 %v652, %v720
          %v753 = vadd.f32 %v653, %v721
          %v754 = vadd.f32 %v654, %v722
          %v755 = vadd.f32 %v655, %v723
          %v756 = vadd.f32 %v656, %v724
          %v757 = vadd.f32 %v657, %v725
          %v758 = vadd.f32 %v658, %v726
          %v759 = vadd.f32 %v659, %v727
          %v760 = vadd.f32 %v660, %v728
          %v761 = vadd.f32 %v661, %v729
          %v762 = vadd.f32 %v662, %v730
          %v763 = vadd.f32 %v663, %v731
          %v764 = vadd.f32 %v664, %v732
          %v765 = vld [vmem:[%s432 + $0x1] sm:$0xff]
          %v766 = vld [vmem:[%s432 + $0x9] sm:$0xff]
          %v767 = vld [vmem:[%s432 + $0x19] sm:$0xff]
          %v768 = vld [vmem:[%s432 + $0x21] sm:$0xff]
          %v769 = vld [vmem:[%s432 + $0x31] sm:$0xff]
          %v770 = vld [vmem:[%s432 + $0x39] sm:$0xff]
          %v771 = vld [vmem:[%s432 + $0x49] sm:$0xff]
          %v772 = vld [vmem:[%s432 + $0x51] sm:$0xff]
          %v773 = vld [vmem:[%s432 + $0x61] sm:$0xff]
          %v774 = vld [vmem:[%s432 + $0x69] sm:$0xff]
          %v775 = vld [vmem:[%s432 + $0x79] sm:$0xff]
          %v776 = vld [vmem:[%s432 + $0x81] sm:$0xff]
          %v777 = vld [vmem:[%s432 + $0x91] sm:$0xff]
          %v778 = vld [vmem:[%s432 + $0x99] sm:$0xff]
          %v779 = vld [vmem:[%s432 + $0xa9] sm:$0xff]
          %v780 = vld [vmem:[%s432 + $0xb1] sm:$0xff]
          %v781 = vld [vmem:[%s432 + $0xc1] sm:$0xff]
          %v782 = vld [vmem:[%s432 + $0xc9] sm:$0xff]
          %v783 = vld [vmem:[%s432 + $0xd9] sm:$0xff]
          %v784 = vld [vmem:[%s432 + $0xe1] sm:$0xff]
          %v785 = vld [vmem:[%s432 + $0xf1] sm:$0xff]
          %v786 = vld [vmem:[%s432 + $0xf9] sm:$0xff]
          %v787 = vld [vmem:[%s432 + $0x109] sm:$0xff]
          %v788 = vld [vmem:[%s432 + $0x111] sm:$0xff]
          %v789 = vld [vmem:[%s432 + $0x121] sm:$0xff]
          %v790 = vld [vmem:[%s432 + $0x129] sm:$0xff]
          %v791 = vld [vmem:[%s432 + $0x139] sm:$0xff]
          %v792 = vld [vmem:[%s432 + $0x141] sm:$0xff]
          %v793 = vld [vmem:[%s432 + $0x151] sm:$0xff]
          %v794 = vld [vmem:[%s432 + $0x159] sm:$0xff]
          %v795 = vld [vmem:[%s432 + $0x169] sm:$0xff]
          %v796 = vld [vmem:[%s432 + $0x171] sm:$0xff]
          %v797 = vlaneseq
          %v798 = vshrl.u32 %v797, 7
          %v799 = vsub.s32 1, %v798
          %v800 = vrot.slane %v230, %v799
          %v801 = vmul.f32 %v765, %v800
          %v802 = vmul.f32 %v766, %v800
          %v803 = vmul.f32 %v767, %v800
          %v804 = vmul.f32 %v768, %v800
          %v805 = vmul.f32 %v769, %v800
          %v806 = vmul.f32 %v770, %v800
          %v807 = vmul.f32 %v771, %v800
          %v808 = vmul.f32 %v772, %v800
          %v809 = vmul.f32 %v773, %v800
          %v810 = vmul.f32 %v774, %v800
          %v811 = vmul.f32 %v775, %v800
          %v812 = vmul.f32 %v776, %v800
          %v813 = vmul.f32 %v777, %v800
          %v814 = vmul.f32 %v778, %v800
          %v815 = vmul.f32 %v779, %v800
          %v816 = vmul.f32 %v780, %v800
          %v817 = vmul.f32 %v781, %v800
          %v818 = vmul.f32 %v782, %v800
          %v819 = vmul.f32 %v783, %v800
          %v820 = vmul.f32 %v784, %v800
          %v821 = vmul.f32 %v785, %v800
          %v822 = vmul.f32 %v786, %v800
          %v823 = vmul.f32 %v787, %v800
          %v824 = vmul.f32 %v788, %v800
          %v825 = vmul.f32 %v789, %v800
          %v826 = vmul.f32 %v790, %v800
          %v827 = vmul.f32 %v791, %v800
          %v828 = vmul.f32 %v792, %v800
          %v829 = vmul.f32 %v793, %v800
          %v830 = vmul.f32 %v794, %v800
          %v831 = vmul.f32 %v795, %v800
          %v832 = vmul.f32 %v796, %v800
          %v833 = vadd.f32 %v733, %v801
          %v834 = vadd.f32 %v734, %v802
          %v835 = vadd.f32 %v735, %v803
          %v836 = vadd.f32 %v736, %v804
          %v837 = vadd.f32 %v737, %v805
          %v838 = vadd.f32 %v738, %v806
          %v839 = vadd.f32 %v739, %v807
          %v840 = vadd.f32 %v740, %v808
          %v841 = vadd.f32 %v741, %v809
          %v842 = vadd.f32 %v742, %v810
          %v843 = vadd.f32 %v743, %v811
          %v844 = vadd.f32 %v744, %v812
          %v845 = vadd.f32 %v745, %v813
          %v846 = vadd.f32 %v746, %v814
          %v847 = vadd.f32 %v747, %v815
          %v848 = vadd.f32 %v748, %v816
          %v849 = vadd.f32 %v749, %v817
          %v850 = vadd.f32 %v750, %v818
          %v851 = vadd.f32 %v751, %v819
          %v852 = vadd.f32 %v752, %v820
          %v853 = vadd.f32 %v753, %v821
          %v854 = vadd.f32 %v754, %v822
          %v855 = vadd.f32 %v755, %v823
          %v856 = vadd.f32 %v756, %v824
          %v857 = vadd.f32 %v757, %v825
          %v858 = vadd.f32 %v758, %v826
          %v859 = vadd.f32 %v759, %v827
          %v860 = vadd.f32 %v760, %v828
          %v861 = vadd.f32 %v761, %v829
          %v862 = vadd.f32 %v762, %v830
          %v863 = vadd.f32 %v763, %v831
          %v864 = vadd.f32 %v764, %v832
          %v865 = vld [vmem:[#allocation2] sm:$0xff]
          %v866 = vld [vmem:[#allocation2 + $0x8] sm:$0xff]
          %v867 = vld [vmem:[#allocation2 + $0x10] sm:$0xff]
          %v868 = vld [vmem:[#allocation2 + $0x18] sm:$0xff]
          %v869 = vld [vmem:[#allocation2 + $0x20] sm:$0xff]
          %v870 = vld [vmem:[#allocation2 + $0x28] sm:$0xff]
          %v871 = vld [vmem:[#allocation2 + $0x30] sm:$0xff]
          %v872 = vld [vmem:[#allocation2 + $0x38] sm:$0xff]
          %v873 = vld [vmem:[#allocation2 + $0x40] sm:$0xff]
          %v874 = vld [vmem:[#allocation2 + $0x48] sm:$0xff]
          %v875 = vld [vmem:[#allocation2 + $0x50] sm:$0xff]
          %v876 = vld [vmem:[#allocation2 + $0x58] sm:$0xff]
          %v877 = vld [vmem:[#allocation2 + $0x60] sm:$0xff]
          %v878 = vld [vmem:[#allocation2 + $0x68] sm:$0xff]
          %v879 = vld [vmem:[#allocation2 + $0x70] sm:$0xff]
          %v880 = vld [vmem:[#allocation2 + $0x78] sm:$0xff]
          %v881 = vld [vmem:[#allocation2 + $0x80] sm:$0xff]
          %v882 = vld [vmem:[#allocation2 + $0x88] sm:$0xff]
          %v883 = vld [vmem:[#allocation2 + $0x90] sm:$0xff]
          %v884 = vld [vmem:[#allocation2 + $0x98] sm:$0xff]
          %v885 = vld [vmem:[#allocation2 + $0xa0] sm:$0xff]
          %v886 = vld [vmem:[#allocation2 + $0xa8] sm:$0xff]
          %v887 = vld [vmem:[#allocation2 + $0xb0] sm:$0xff]
          %v888 = vld [vmem:[#allocation2 + $0xb8] sm:$0xff]
          %v889 = vld [vmem:[#allocation2 + $0xc0] sm:$0xff]
          %v890 = vld [vmem:[#allocation2 + $0xc8] sm:$0xff]
          %v891 = vld [vmem:[#allocation2 + $0xd0] sm:$0xff]
          %v892 = vld [vmem:[#allocation2 + $0xd8] sm:$0xff]
          %v893 = vld [vmem:[#allocation2 + $0xe0] sm:$0xff]
          %v894 = vld [vmem:[#allocation2 + $0xe8] sm:$0xff]
          %v895 = vld [vmem:[#allocation2 + $0xf0] sm:$0xff]
          %v896 = vld [vmem:[#allocation2 + $0xf8] sm:$0xff]
          %v897 = vadd.f32 %v865, %v833
          %v898 = vadd.f32 %v866, %v834
          %v899 = vadd.f32 %v867, %v835
          %v900 = vadd.f32 %v868, %v836
          %v901 = vadd.f32 %v869, %v837
          %v902 = vadd.f32 %v870, %v838
          %v903 = vadd.f32 %v871, %v839
          %v904 = vadd.f32 %v872, %v840
          %v905 = vadd.f32 %v873, %v841
          %v906 = vadd.f32 %v874, %v842
          %v907 = vadd.f32 %v875, %v843
          %v908 = vadd.f32 %v876, %v844
          %v909 = vadd.f32 %v877, %v845
          %v910 = vadd.f32 %v878, %v846
          %v911 = vadd.f32 %v879, %v847
          %v912 = vadd.f32 %v880, %v848
          %v913 = vadd.f32 %v881, %v849
          %v914 = vadd.f32 %v882, %v850
          %v915 = vadd.f32 %v883, %v851
          %v916 = vadd.f32 %v884, %v852
          %v917 = vadd.f32 %v885, %v853
          %v918 = vadd.f32 %v886, %v854
          %v919 = vadd.f32 %v887, %v855
          %v920 = vadd.f32 %v888, %v856
          %v921 = vadd.f32 %v889, %v857
          %v922 = vadd.f32 %v890, %v858
          %v923 = vadd.f32 %v891, %v859
          %v924 = vadd.f32 %v892, %v860
          %v925 = vadd.f32 %v893, %v861
          %v926 = vadd.f32 %v894, %v862
          %v927 = vadd.f32 %v895, %v863
          %v928 = vadd.f32 %v896, %v864
          %929 = vst [vmem:[#allocation2] sm:$0xff] %v897
          %930 = vst [vmem:[#allocation2 + $0x8] sm:$0xff] %v898
          %931 = vst [vmem:[#allocation2 + $0x10] sm:$0xff] %v899
          %932 = vst [vmem:[#allocation2 + $0x18] sm:$0xff] %v900
          %933 = vst [vmem:[#allocation2 + $0x20] sm:$0xff] %v901
          %934 = vst [vmem:[#allocation2 + $0x28] sm:$0xff] %v902
          %935 = vst [vmem:[#allocation2 + $0x30] sm:$0xff] %v903
          %936 = vst [vmem:[#allocation2 + $0x38] sm:$0xff] %v904
          %937 = vst [vmem:[#allocation2 + $0x40] sm:$0xff] %v905
          %938 = vst [vmem:[#allocation2 + $0x48] sm:$0xff] %v906
          %939 = vst [vmem:[#allocation2 + $0x50] sm:$0xff] %v907
          %940 = vst [vmem:[#allocation2 + $0x58] sm:$0xff] %v908
          %941 = vst [vmem:[#allocation2 + $0x60] sm:$0xff] %v909
          %942 = vst [vmem:[#allocation2 + $0x68] sm:$0xff] %v910
          %943 = vst [vmem:[#allocation2 + $0x70] sm:$0xff] %v911
          %944 = vst [vmem:[#allocation2 + $0x78] sm:$0xff] %v912
          %945 = vst [vmem:[#allocation2 + $0x80] sm:$0xff] %v913
          %946 = vst [vmem:[#allocation2 + $0x88] sm:$0xff] %v914
          %947 = vst [vmem:[#allocation2 + $0x90] sm:$0xff] %v915
          %948 = vst [vmem:[#allocation2 + $0x98] sm:$0xff] %v916
          %949 = vst [vmem:[#allocation2 + $0xa0] sm:$0xff] %v917
          %950 = vst [vmem:[#allocation2 + $0xa8] sm:$0xff] %v918
          %951 = vst [vmem:[#allocation2 + $0xb0] sm:$0xff] %v919
          %952 = vst [vmem:[#allocation2 + $0xb8] sm:$0xff] %v920
          %953 = vst [vmem:[#allocation2 + $0xc0] sm:$0xff] %v921
          %954 = vst [vmem:[#allocation2 + $0xc8] sm:$0xff] %v922
          %955 = vst [vmem:[#allocation2 + $0xd0] sm:$0xff] %v923
          %956 = vst [vmem:[#allocation2 + $0xd8] sm:$0xff] %v924
          %957 = vst [vmem:[#allocation2 + $0xe0] sm:$0xff] %v925
          %958 = vst [vmem:[#allocation2 + $0xe8] sm:$0xff] %v926
          %959 = vst [vmem:[#allocation2 + $0xf0] sm:$0xff] %v927
          %960 = vst [vmem:[#allocation2 + $0xf8] sm:$0xff] %v928
          %v961 = vld [vmem:[%s218 + $0x2] sm:$0xff]
          %v962 = vld [vmem:[%s218 + $0xa] sm:$0xff]
          %v963 = vld [vmem:[%s218 + $0x1a] sm:$0xff]
          %v964 = vld [vmem:[%s218 + $0x22] sm:$0xff]
          %v965 = vld [vmem:[%s218 + $0x32] sm:$0xff]
          %v966 = vld [vmem:[%s218 + $0x3a] sm:$0xff]
          %v967 = vld [vmem:[%s218 + $0x4a] sm:$0xff]
          %v968 = vld [vmem:[%s218 + $0x52] sm:$0xff]
          %v969 = vld [vmem:[%s218 + $0x62] sm:$0xff]
          %v970 = vld [vmem:[%s218 + $0x6a] sm:$0xff]
          %v971 = vld [vmem:[%s218 + $0x7a] sm:$0xff]
          %v972 = vld [vmem:[%s218 + $0x82] sm:$0xff]
          %v973 = vld [vmem:[%s218 + $0x92] sm:$0xff]
          %v974 = vld [vmem:[%s218 + $0x9a] sm:$0xff]
          %v975 = vld [vmem:[%s218 + $0xaa] sm:$0xff]
          %v976 = vld [vmem:[%s218 + $0xb2] sm:$0xff]
          %v977 = vld [vmem:[%s218 + $0xc2] sm:$0xff]
          %v978 = vld [vmem:[%s218 + $0xca] sm:$0xff]
          %v979 = vld [vmem:[%s218 + $0xda] sm:$0xff]
          %v980 = vld [vmem:[%s218 + $0xe2] sm:$0xff]
          %v981 = vld [vmem:[%s218 + $0xf2] sm:$0xff]
          %v982 = vld [vmem:[%s218 + $0xfa] sm:$0xff]
          %v983 = vld [vmem:[%s218 + $0x10a] sm:$0xff]
          %v984 = vld [vmem:[%s218 + $0x112] sm:$0xff]
          %v985 = vld [vmem:[%s218 + $0x122] sm:$0xff]
          %v986 = vld [vmem:[%s218 + $0x12a] sm:$0xff]
          %v987 = vld [vmem:[%s218 + $0x13a] sm:$0xff]
          %v988 = vld [vmem:[%s218 + $0x142] sm:$0xff]
          %v989 = vld [vmem:[%s218 + $0x152] sm:$0xff]
          %v990 = vld [vmem:[%s218 + $0x15a] sm:$0xff]
          %v991 = vld [vmem:[%s218 + $0x16a] sm:$0xff]
          %v992 = vld [vmem:[%s218 + $0x172] sm:$0xff]
          %v993 = vlaneseq
          %v994 = vshrl.u32 %v993, 7
          %v995 = vsub.s32 2, %v994
          %v996 = vrot.slane %v228, %v995
          %v997 = vmul.f32 %v961, %v996
          %v998 = vmul.f32 %v962, %v996
          %v999 = vmul.f32 %v963, %v996
          %v1000 = vmul.f32 %v964, %v996
          %v1001 = vmul.f32 %v965, %v996
          %v1002 = vmul.f32 %v966, %v996
          %v1003 = vmul.f32 %v967, %v996
          %v1004 = vmul.f32 %v968, %v996
          %v1005 = vmul.f32 %v969, %v996
          %v1006 = vmul.f32 %v970, %v996
          %v1007 = vmul.f32 %v971, %v996
          %v1008 = vmul.f32 %v972, %v996
          %v1009 = vmul.f32 %v973, %v996
          %v1010 = vmul.f32 %v974, %v996
          %v1011 = vmul.f32 %v975, %v996
          %v1012 = vmul.f32 %v976, %v996
          %v1013 = vmul.f32 %v977, %v996
          %v1014 = vmul.f32 %v978, %v996
          %v1015 = vmul.f32 %v979, %v996
          %v1016 = vmul.f32 %v980, %v996
          %v1017 = vmul.f32 %v981, %v996
          %v1018 = vmul.f32 %v982, %v996
          %v1019 = vmul.f32 %v983, %v996
          %v1020 = vmul.f32 %v984, %v996
          %v1021 = vmul.f32 %v985, %v996
          %v1022 = vmul.f32 %v986, %v996
          %v1023 = vmul.f32 %v987, %v996
          %v1024 = vmul.f32 %v988, %v996
          %v1025 = vmul.f32 %v989, %v996
          %v1026 = vmul.f32 %v990, %v996
          %v1027 = vmul.f32 %v991, %v996
          %v1028 = vmul.f32 %v992, %v996
          %v1029 = vadd.f32 %v997, 0.0
          %v1030 = vadd.f32 %v998, 0.0
          %v1031 = vadd.f32 %v999, 0.0
          %v1032 = vadd.f32 %v1000, 0.0
          %v1033 = vadd.f32 %v1001, 0.0
          %v1034 = vadd.f32 %v1002, 0.0
          %v1035 = vadd.f32 %v1003, 0.0
          %v1036 = vadd.f32 %v1004, 0.0
          %v1037 = vadd.f32 %v1005, 0.0
          %v1038 = vadd.f32 %v1006, 0.0
          %v1039 = vadd.f32 %v1007, 0.0
          %v1040 = vadd.f32 %v1008, 0.0
          %v1041 = vadd.f32 %v1009, 0.0
          %v1042 = vadd.f32 %v1010, 0.0
          %v1043 = vadd.f32 %v1011, 0.0
          %v1044 = vadd.f32 %v1012, 0.0
          %v1045 = vadd.f32 %v1013, 0.0
          %v1046 = vadd.f32 %v1014, 0.0
          %v1047 = vadd.f32 %v1015, 0.0
          %v1048 = vadd.f32 %v1016, 0.0
          %v1049 = vadd.f32 %v1017, 0.0
          %v1050 = vadd.f32 %v1018, 0.0
          %v1051 = vadd.f32 %v1019, 0.0
          %v1052 = vadd.f32 %v1020, 0.0
          %v1053 = vadd.f32 %v1021, 0.0
          %v1054 = vadd.f32 %v1022, 0.0
          %v1055 = vadd.f32 %v1023, 0.0
          %v1056 = vadd.f32 %v1024, 0.0
          %v1057 = vadd.f32 %v1025, 0.0
          %v1058 = vadd.f32 %v1026, 0.0
          %v1059 = vadd.f32 %v1027, 0.0
          %v1060 = vadd.f32 %v1028, 0.0
          %v1061 = vld [vmem:[%s331 + $0x2] sm:$0xff]
          %v1062 = vld [vmem:[%s331 + $0xa] sm:$0xff]
          %v1063 = vld [vmem:[%s331 + $0x1a] sm:$0xff]
          %v1064 = vld [vmem:[%s331 + $0x22] sm:$0xff]
          %v1065 = vld [vmem:[%s331 + $0x32] sm:$0xff]
          %v1066 = vld [vmem:[%s331 + $0x3a] sm:$0xff]
          %v1067 = vld [vmem:[%s331 + $0x4a] sm:$0xff]
          %v1068 = vld [vmem:[%s331 + $0x52] sm:$0xff]
          %v1069 = vld [vmem:[%s331 + $0x62] sm:$0xff]
          %v1070 = vld [vmem:[%s331 + $0x6a] sm:$0xff]
          %v1071 = vld [vmem:[%s331 + $0x7a] sm:$0xff]
          %v1072 = vld [vmem:[%s331 + $0x82] sm:$0xff]
          %v1073 = vld [vmem:[%s331 + $0x92] sm:$0xff]
          %v1074 = vld [vmem:[%s331 + $0x9a] sm:$0xff]
          %v1075 = vld [vmem:[%s331 + $0xaa] sm:$0xff]
          %v1076 = vld [vmem:[%s331 + $0xb2] sm:$0xff]
          %v1077 = vld [vmem:[%s331 + $0xc2] sm:$0xff]
          %v1078 = vld [vmem:[%s331 + $0xca] sm:$0xff]
          %v1079 = vld [vmem:[%s331 + $0xda] sm:$0xff]
          %v1080 = vld [vmem:[%s331 + $0xe2] sm:$0xff]
          %v1081 = vld [vmem:[%s331 + $0xf2] sm:$0xff]
          %v1082 = vld [vmem:[%s331 + $0xfa] sm:$0xff]
          %v1083 = vld [vmem:[%s331 + $0x10a] sm:$0xff]
          %v1084 = vld [vmem:[%s331 + $0x112] sm:$0xff]
          %v1085 = vld [vmem:[%s331 + $0x122] sm:$0xff]
          %v1086 = vld [vmem:[%s331 + $0x12a] sm:$0xff]
          %v1087 = vld [vmem:[%s331 + $0x13a] sm:$0xff]
          %v1088 = vld [vmem:[%s331 + $0x142] sm:$0xff]
          %v1089 = vld [vmem:[%s331 + $0x152] sm:$0xff]
          %v1090 = vld [vmem:[%s331 + $0x15a] sm:$0xff]
          %v1091 = vld [vmem:[%s331 + $0x16a] sm:$0xff]
          %v1092 = vld [vmem:[%s331 + $0x172] sm:$0xff]
          %v1093 = vlaneseq
          %v1094 = vshrl.u32 %v1093, 7
          %v1095 = vsub.s32 2, %v1094
          %v1096 = vrot.slane %v229, %v1095
          %v1097 = vmul.f32 %v1061, %v1096
          %v1098 = vmul.f32 %v1062, %v1096
          %v1099 = vmul.f32 %v1063, %v1096
          %v1100 = vmul.f32 %v1064, %v1096
          %v1101 = vmul.f32 %v1065, %v1096
          %v1102 = vmul.f32 %v1066, %v1096
          %v1103 = vmul.f32 %v1067, %v1096
          %v1104 = vmul.f32 %v1068, %v1096
          %v1105 = vmul.f32 %v1069, %v1096
          %v1106 = vmul.f32 %v1070, %v1096
          %v1107 = vmul.f32 %v1071, %v1096
          %v1108 = vmul.f32 %v1072, %v1096
          %v1109 = vmul.f32 %v1073, %v1096
          %v1110 = vmul.f32 %v1074, %v1096
          %v1111 = vmul.f32 %v1075, %v1096
          %v1112 = vmul.f32 %v1076, %v1096
          %v1113 = vmul.f32 %v1077, %v1096
          %v1114 = vmul.f32 %v1078, %v1096
          %v1115 = vmul.f32 %v1079, %v1096
          %v1116 = vmul.f32 %v1080, %v1096
          %v1117 = vmul.f32 %v1081, %v1096
          %v1118 = vmul.f32 %v1082, %v1096
          %v1119 = vmul.f32 %v1083, %v1096
          %v1120 = vmul.f32 %v1084, %v1096
          %v1121 = vmul.f32 %v1085, %v1096
          %v1122 = vmul.f32 %v1086, %v1096
          %v1123 = vmul.f32 %v1087, %v1096
          %v1124 = vmul.f32 %v1088, %v1096
          %v1125 = vmul.f32 %v1089, %v1096
          %v1126 = vmul.f32 %v1090, %v1096
          %v1127 = vmul.f32 %v1091, %v1096
          %v1128 = vmul.f32 %v1092, %v1096
          %v1129 = vadd.f32 %v1029, %v1097
          %v1130 = vadd.f32 %v1030, %v1098
          %v1131 = vadd.f32 %v1031, %v1099
          %v1132 = vadd.f32 %v1032, %v1100
          %v1133 = vadd.f32 %v1033, %v1101
          %v1134 = vadd.f32 %v1034, %v1102
          %v1135 = vadd.f32 %v1035, %v1103
          %v1136 = vadd.f32 %v1036, %v1104
          %v1137 = vadd.f32 %v1037, %v1105
          %v1138 = vadd.f32 %v1038, %v1106
          %v1139 = vadd.f32 %v1039, %v1107
          %v1140 = vadd.f32 %v1040, %v1108
          %v1141 = vadd.f32 %v1041, %v1109
          %v1142 = vadd.f32 %v1042, %v1110
          %v1143 = vadd.f32 %v1043, %v1111
          %v1144 = vadd.f32 %v1044, %v1112
          %v1145 = vadd.f32 %v1045, %v1113
          %v1146 = vadd.f32 %v1046, %v1114
          %v1147 = vadd.f32 %v1047, %v1115
          %v1148 = vadd.f32 %v1048, %v1116
          %v1149 = vadd.f32 %v1049, %v1117
          %v1150 = vadd.f32 %v1050, %v1118
          %v1151 = vadd.f32 %v1051, %v1119
          %v1152 = vadd.f32 %v1052, %v1120
          %v1153 = vadd.f32 %v1053, %v1121
          %v1154 = vadd.f32 %v1054, %v1122
          %v1155 = vadd.f32 %v1055, %v1123
          %v1156 = vadd.f32 %v1056, %v1124
          %v1157 = vadd.f32 %v1057, %v1125
          %v1158 = vadd.f32 %v1058, %v1126
          %v1159 = vadd.f32 %v1059, %v1127
          %v1160 = vadd.f32 %v1060, %v1128
          %v1161 = vld [vmem:[%s432 + $0x2] sm:$0xff]
          %v1162 = vld [vmem:[%s432 + $0xa] sm:$0xff]
          %v1163 = vld [vmem:[%s432 + $0x1a] sm:$0xff]
          %v1164 = vld [vmem:[%s432 + $0x22] sm:$0xff]
          %v1165 = vld [vmem:[%s432 + $0x32] sm:$0xff]
          %v1166 = vld [vmem:[%s432 + $0x3a] sm:$0xff]
          %v1167 = vld [vmem:[%s432 + $0x4a] sm:$0xff]
          %v1168 = vld [vmem:[%s432 + $0x52] sm:$0xff]
          %v1169 = vld [vmem:[%s432 + $0x62] sm:$0xff]
          %v1170 = vld [vmem:[%s432 + $0x6a] sm:$0xff]
          %v1171 = vld [vmem:[%s432 + $0x7a] sm:$0xff]
          %v1172 = vld [vmem:[%s432 + $0x82] sm:$0xff]
          %v1173 = vld [vmem:[%s432 + $0x92] sm:$0xff]
          %v1174 = vld [vmem:[%s432 + $0x9a] sm:$0xff]
          %v1175 = vld [vmem:[%s432 + $0xaa] sm:$0xff]
          %v1176 = vld [vmem:[%s432 + $0xb2] sm:$0xff]
          %v1177 = vld [vmem:[%s432 + $0xc2] sm:$0xff]
          %v1178 = vld [vmem:[%s432 + $0xca] sm:$0xff]
          %v1179 = vld [vmem:[%s432 + $0xda] sm:$0xff]
          %v1180 = vld [vmem:[%s432 + $0xe2] sm:$0xff]
          %v1181 = vld [vmem:[%s432 + $0xf2] sm:$0xff]
          %v1182 = vld [vmem:[%s432 + $0xfa] sm:$0xff]
          %v1183 = vld [vmem:[%s432 + $0x10a] sm:$0xff]
          %v1184 = vld [vmem:[%s432 + $0x112] sm:$0xff]
          %v1185 = vld [vmem:[%s432 + $0x122] sm:$0xff]
          %v1186 = vld [vmem:[%s432 + $0x12a] sm:$0xff]
          %v1187 = vld [vmem:[%s432 + $0x13a] sm:$0xff]
          %v1188 = vld [vmem:[%s432 + $0x142] sm:$0xff]
          %v1189 = vld [vmem:[%s432 + $0x152] sm:$0xff]
          %v1190 = vld [vmem:[%s432 + $0x15a] sm:$0xff]
          %v1191 = vld [vmem:[%s432 + $0x16a] sm:$0xff]
          %v1192 = vld [vmem:[%s432 + $0x172] sm:$0xff]
          %v1193 = vlaneseq
          %v1194 = vshrl.u32 %v1193, 7
          %v1195 = vsub.s32 2, %v1194
          %v1196 = vrot.slane %v230, %v1195
          %v1197 = vmul.f32 %v1161, %v1196
          %v1198 = vmul.f32 %v1162, %v1196
          %v1199 = vmul.f32 %v1163, %v1196
          %v1200 = vmul.f32 %v1164, %v1196
          %v1201 = vmul.f32 %v1165, %v1196
          %v1202 = vmul.f32 %v1166, %v1196
          %v1203 = vmul.f32 %v1167, %v1196
          %v1204 = vmul.f32 %v1168, %v1196
          %v1205 = vmul.f32 %v1169, %v1196
          %v1206 = vmul.f32 %v1170, %v1196
          %v1207 = vmul.f32 %v1171, %v1196
          %v1208 = vmul.f32 %v1172, %v1196
          %v1209 = vmul.f32 %v1173, %v1196
          %v1210 = vmul.f32 %v1174, %v1196
          %v1211 = vmul.f32 %v1175, %v1196
          %v1212 = vmul.f32 %v1176, %v1196
          %v1213 = vmul.f32 %v1177, %v1196
          %v1214 = vmul.f32 %v1178, %v1196
          %v1215 = vmul.f32 %v1179, %v1196
          %v1216 = vmul.f32 %v1180, %v1196
          %v1217 = vmul.f32 %v1181, %v1196
          %v1218 = vmul.f32 %v1182, %v1196
          %v1219 = vmul.f32 %v1183, %v1196
          %v1220 = vmul.f32 %v1184, %v1196
          %v1221 = vmul.f32 %v1185, %v1196
          %v1222 = vmul.f32 %v1186, %v1196
          %v1223 = vmul.f32 %v1187, %v1196
          %v1224 = vmul.f32 %v1188, %v1196
          %v1225 = vmul.f32 %v1189, %v1196
          %v1226 = vmul.f32 %v1190, %v1196
          %v1227 = vmul.f32 %v1191, %v1196
          %v1228 = vmul.f32 %v1192, %v1196
          %v1229 = vadd.f32 %v1129, %v1197
          %v1230 = vadd.f32 %v1130, %v1198
          %v1231 = vadd.f32 %v1131, %v1199
          %v1232 = vadd.f32 %v1132, %v1200
          %v1233 = vadd.f32 %v1133, %v1201
          %v1234 = vadd.f32 %v1134, %v1202
          %v1235 = vadd.f32 %v1135, %v1203
          %v1236 = vadd.f32 %v1136, %v1204
          %v1237 = vadd.f32 %v1137, %v1205
          %v1238 = vadd.f32 %v1138, %v1206
          %v1239 = vadd.f32 %v1139, %v1207
          %v1240 = vadd.f32 %v1140, %v1208
          %v1241 = vadd.f32 %v1141, %v1209
          %v1242 = vadd.f32 %v1142, %v1210
          %v1243 = vadd.f32 %v1143, %v1211
          %v1244 = vadd.f32 %v1144, %v1212
          %v1245 = vadd.f32 %v1145, %v1213
          %v1246 = vadd.f32 %v1146, %v1214
          %v1247 = vadd.f32 %v1147, %v1215
          %v1248 = vadd.f32 %v1148, %v1216
          %v1249 = vadd.f32 %v1149, %v1217
          %v1250 = vadd.f32 %v1150, %v1218
          %v1251 = vadd.f32 %v1151, %v1219
          %v1252 = vadd.f32 %v1152, %v1220
          %v1253 = vadd.f32 %v1153, %v1221
          %v1254 = vadd.f32 %v1154, %v1222
          %v1255 = vadd.f32 %v1155, %v1223
          %v1256 = vadd.f32 %v1156, %v1224
          %v1257 = vadd.f32 %v1157, %v1225
          %v1258 = vadd.f32 %v1158, %v1226
          %v1259 = vadd.f32 %v1159, %v1227
          %v1260 = vadd.f32 %v1160, %v1228
          %v1261 = vld [vmem:[#allocation2] sm:$0xff]
          %v1262 = vld [vmem:[#allocation2 + $0x8] sm:$0xff]
          %v1263 = vld [vmem:[#allocation2 + $0x10] sm:$0xff]
          %v1264 = vld [vmem:[#allocation2 + $0x18] sm:$0xff]
          %v1265 = vld [vmem:[#allocation2 + $0x20] sm:$0xff]
          %v1266 = vld [vmem:[#allocation2 + $0x28] sm:$0xff]
          %v1267 = vld [vmem:[#allocation2 + $0x30] sm:$0xff]
          %v1268 = vld [vmem:[#allocation2 + $0x38] sm:$0xff]
          %v1269 = vld [vmem:[#allocation2 + $0x40] sm:$0xff]
          %v1270 = vld [vmem:[#allocation2 + $0x48] sm:$0xff]
          %v1271 = vld [vmem:[#allocation2 + $0x50] sm:$0xff]
          %v1272 = vld [vmem:[#allocation2 + $0x58] sm:$0xff]
          %v1273 = vld [vmem:[#allocation2 + $0x60] sm:$0xff]
          %v1274 = vld [vmem:[#allocation2 + $0x68] sm:$0xff]
          %v1275 = vld [vmem:[#allocation2 + $0x70] sm:$0xff]
          %v1276 = vld [vmem:[#allocation2 + $0x78] sm:$0xff]
          %v1277 = vld [vmem:[#allocation2 + $0x80] sm:$0xff]
          %v1278 = vld [vmem:[#allocation2 + $0x88] sm:$0xff]
          %v1279 = vld [vmem:[#allocation2 + $0x90] sm:$0xff]
          %v1280 = vld [vmem:[#allocation2 + $0x98] sm:$0xff]
          %v1281 = vld [vmem:[#allocation2 + $0xa0] sm:$0xff]
          %v1282 = vld [vmem:[#allocation2 + $0xa8] sm:$0xff]
          %v1283 = vld [vmem:[#allocation2 + $0xb0] sm:$0xff]
          %v1284 = vld [vmem:[#allocation2 + $0xb8] sm:$0xff]
          %v1285 = vld [vmem:[#allocation2 + $0xc0] sm:$0xff]
          %v1286 = vld [vmem:[#allocation2 + $0xc8] sm:$0xff]
          %v1287 = vld [vmem:[#allocation2 + $0xd0] sm:$0xff]
          %v1288 = vld [vmem:[#allocation2 + $0xd8] sm:$0xff]
          %v1289 = vld [vmem:[#allocation2 + $0xe0] sm:$0xff]
          %v1290 = vld [vmem:[#allocation2 + $0xe8] sm:$0xff]
          %v1291 = vld [vmem:[#allocation2 + $0xf0] sm:$0xff]
          %v1292 = vld [vmem:[#allocation2 + $0xf8] sm:$0xff]
          %v1293 = vadd.f32 %v1261, %v1229
          %v1294 = vadd.f32 %v1262, %v1230
          %v1295 = vadd.f32 %v1263, %v1231
          %v1296 = vadd.f32 %v1264, %v1232
          %v1297 = vadd.f32 %v1265, %v1233
          %v1298 = vadd.f32 %v1266, %v1234
          %v1299 = vadd.f32 %v1267, %v1235
          %v1300 = vadd.f32 %v1268, %v1236
          %v1301 = vadd.f32 %v1269, %v1237
          %v1302 = vadd.f32 %v1270, %v1238
          %v1303 = vadd.f32 %v1271, %v1239
          %v1304 = vadd.f32 %v1272, %v1240
          %v1305 = vadd.f32 %v1273, %v1241
          %v1306 = vadd.f32 %v1274, %v1242
          %v1307 = vadd.f32 %v1275, %v1243
          %v1308 = vadd.f32 %v1276, %v1244
          %v1309 = vadd.f32 %v1277, %v1245
          %v1310 = vadd.f32 %v1278, %v1246
          %v1311 = vadd.f32 %v1279, %v1247
          %v1312 = vadd.f32 %v1280, %v1248
          %v1313 = vadd.f32 %v1281, %v1249
          %v1314 = vadd.f32 %v1282, %v1250
          %v1315 = vadd.f32 %v1283, %v1251
          %v1316 = vadd.f32 %v1284, %v1252
          %v1317 = vadd.f32 %v1285, %v1253
          %v1318 = vadd.f32 %v1286, %v1254
          %v1319 = vadd.f32 %v1287, %v1255
          %v1320 = vadd.f32 %v1288, %v1256
          %v1321 = vadd.f32 %v1289, %v1257
          %v1322 = vadd.f32 %v1290, %v1258
          %v1323 = vadd.f32 %v1291, %v1259
          %v1324 = vadd.f32 %v1292, %v1260
          %1325 = vst [vmem:[#allocation2] sm:$0xff] %v1293
          %1326 = vst [vmem:[#allocation2 + $0x8] sm:$0xff] %v1294
          %1327 = vst [vmem:[#allocation2 + $0x10] sm:$0xff] %v1295
          %1328 = vst [vmem:[#allocation2 + $0x18] sm:$0xff] %v1296
          %1329 = vst [vmem:[#allocation2 + $0x20] sm:$0xff] %v1297
          %1330 = vst [vmem:[#allocation2 + $0x28] sm:$0xff] %v1298
          %1331 = vst [vmem:[#allocation2 + $0x30] sm:$0xff] %v1299
          %1332 = vst [vmem:[#allocation2 + $0x38] sm:$0xff] %v1300
          %1333 = vst [vmem:[#allocation2 + $0x40] sm:$0xff] %v1301
          %1334 = vst [vmem:[#allocation2 + $0x48] sm:$0xff] %v1302
          %1335 = vst [vmem:[#allocation2 + $0x50] sm:$0xff] %v1303
          %1336 = vst [vmem:[#allocation2 + $0x58] sm:$0xff] %v1304
          %1337 = vst [vmem:[#allocation2 + $0x60] sm:$0xff] %v1305
          %1338 = vst [vmem:[#allocation2 + $0x68] sm:$0xff] %v1306
          %1339 = vst [vmem:[#allocation2 + $0x70] sm:$0xff] %v1307
          %1340 = vst [vmem:[#allocation2 + $0x78] sm:$0xff] %v1308
          %1341 = vst [vmem:[#allocation2 + $0x80] sm:$0xff] %v1309
          %1342 = vst [vmem:[#allocation2 + $0x88] sm:$0xff] %v1310
          %1343 = vst [vmem:[#allocation2 + $0x90] sm:$0xff] %v1311
          %1344 = vst [vmem:[#allocation2 + $0x98] sm:$0xff] %v1312
          %1345 = vst [vmem:[#allocation2 + $0xa0] sm:$0xff] %v1313
          %1346 = vst [vmem:[#allocation2 + $0xa8] sm:$0xff] %v1314
          %1347 = vst [vmem:[#allocation2 + $0xb0] sm:$0xff] %v1315
          %1348 = vst [vmem:[#allocation2 + $0xb8] sm:$0xff] %v1316
          %1349 = vst [vmem:[#allocation2 + $0xc0] sm:$0xff] %v1317
          %1350 = vst [vmem:[#allocation2 + $0xc8] sm:$0xff] %v1318
          %1351 = vst [vmem:[#allocation2 + $0xd0] sm:$0xff] %v1319
          %1352 = vst [vmem:[#allocation2 + $0xd8] sm:$0xff] %v1320
          %1353 = vst [vmem:[#allocation2 + $0xe0] sm:$0xff] %v1321
          %1354 = vst [vmem:[#allocation2 + $0xe8] sm:$0xff] %v1322
          %1355 = vst [vmem:[#allocation2 + $0xf0] sm:$0xff] %v1323
          %1356 = vst [vmem:[#allocation2 + $0xf8] sm:$0xff] %v1324
        $region36: #{tpu_custom_call.1} parent=31 // pred_fallthru
          _
        %v1357 = vld [vmem:[#allocation2] sm:$0xff]
        %v1358 = vld [vmem:[#allocation2 + $0x8] sm:$0xff]
        %v1359 = vld [vmem:[#allocation2 + $0x10] sm:$0xff]
        %v1360 = vld [vmem:[#allocation2 + $0x18] sm:$0xff]
        %v1361 = vld [vmem:[#allocation2 + $0x20] sm:$0xff]
        %v1362 = vld [vmem:[#allocation2 + $0x28] sm:$0xff]
        %v1363 = vld [vmem:[#allocation2 + $0x30] sm:$0xff]
        %v1364 = vld [vmem:[#allocation2 + $0x38] sm:$0xff]
        %v1365 = vld [vmem:[#allocation2 + $0x40] sm:$0xff]
        %v1366 = vld [vmem:[#allocation2 + $0x48] sm:$0xff]
        %v1367 = vld [vmem:[#allocation2 + $0x50] sm:$0xff]
        %v1368 = vld [vmem:[#allocation2 + $0x58] sm:$0xff]
        %v1369 = vld [vmem:[#allocation2 + $0x60] sm:$0xff]
        %v1370 = vld [vmem:[#allocation2 + $0x68] sm:$0xff]
        %v1371 = vld [vmem:[#allocation2 + $0x70] sm:$0xff]
        %v1372 = vld [vmem:[#allocation2 + $0x78] sm:$0xff]
        %v1373 = vld [vmem:[#allocation2 + $0x80] sm:$0xff]
        %v1374 = vld [vmem:[#allocation2 + $0x88] sm:$0xff]
        %v1375 = vld [vmem:[#allocation2 + $0x90] sm:$0xff]
        %v1376 = vld [vmem:[#allocation2 + $0x98] sm:$0xff]
        %v1377 = vld [vmem:[#allocation2 + $0xa0] sm:$0xff]
        %v1378 = vld [vmem:[#allocation2 + $0xa8] sm:$0xff]
        %v1379 = vld [vmem:[#allocation2 + $0xb0] sm:$0xff]
        %v1380 = vld [vmem:[#allocation2 + $0xb8] sm:$0xff]
        %v1381 = vld [vmem:[#allocation2 + $0xc0] sm:$0xff]
        %v1382 = vld [vmem:[#allocation2 + $0xc8] sm:$0xff]
        %v1383 = vld [vmem:[#allocation2 + $0xd0] sm:$0xff]
        %v1384 = vld [vmem:[#allocation2 + $0xd8] sm:$0xff]
        %v1385 = vld [vmem:[#allocation2 + $0xe0] sm:$0xff]
        %v1386 = vld [vmem:[#allocation2 + $0xe8] sm:$0xff]
        %v1387 = vld [vmem:[#allocation2 + $0xf0] sm:$0xff]
        %v1388 = vld [vmem:[#allocation2 + $0xf8] sm:$0xff]
        %v1389 = vld [vmem:[%s222] sm:$0xff]
        %v1390 = vld [vmem:[%s222 + $0x8] sm:$0xff]
        %v1391 = vld [vmem:[%s222 + $0x10] sm:$0xff]
        %v1392 = vld [vmem:[%s222 + $0x18] sm:$0xff]
        %v1393 = vld [vmem:[%s222 + $0x20] sm:$0xff]
        %v1394 = vld [vmem:[%s222 + $0x28] sm:$0xff]
        %v1395 = vld [vmem:[%s222 + $0x30] sm:$0xff]
        %v1396 = vld [vmem:[%s222 + $0x38] sm:$0xff]
        %v1397 = vld [vmem:[%s222 + $0x40] sm:$0xff]
        %v1398 = vld [vmem:[%s222 + $0x48] sm:$0xff]
        %v1399 = vld [vmem:[%s222 + $0x50] sm:$0xff]
        %v1400 = vld [vmem:[%s222 + $0x58] sm:$0xff]
        %v1401 = vld [vmem:[%s222 + $0x60] sm:$0xff]
        %v1402 = vld [vmem:[%s222 + $0x68] sm:$0xff]
        %v1403 = vld [vmem:[%s222 + $0x70] sm:$0xff]
        %v1404 = vld [vmem:[%s222 + $0x78] sm:$0xff]
        %1405 = vmatprep.subr.mxu0 0.0
        %v1406 = vand.u32 %v1404, 4294901760
        %1407 = vmatpush1.msra.mxu0 %v1406
        %1408 = vmatprep.subr.mxu0 0.0
        %v1409 = vand.u32 %v1403, 4294901760
        %1410 = vmatpush1.msra.mxu0 %v1409
        %1411 = vmatprep.subr.mxu0 0.0
        %v1412 = vand.u32 %v1402, 4294901760
        %1413 = vmatpush1.msra.mxu0 %v1412
        %1414 = vmatprep.subr.mxu0 0.0
        %v1415 = vand.u32 %v1401, 4294901760
        %1416 = vmatpush1.msra.mxu0 %v1415
        %1417 = vmatprep.subr.mxu0 0.0
        %v1418 = vand.u32 %v1400, 4294901760
        %1419 = vmatpush1.msra.mxu0 %v1418
        %1420 = vmatprep.subr.mxu0 0.0
        %v1421 = vand.u32 %v1399, 4294901760
        %1422 = vmatpush1.msra.mxu0 %v1421
        %1423 = vmatprep.subr.mxu0 0.0
        %v1424 = vand.u32 %v1398, 4294901760
        %1425 = vmatpush1.msra.mxu0 %v1424
        %1426 = vmatprep.subr.mxu0 0.0
        %v1427 = vand.u32 %v1397, 4294901760
        %1428 = vmatpush1.msra.mxu0 %v1427
        %1429 = vmatprep.subr.mxu0 0.0
        %v1430 = vand.u32 %v1396, 4294901760
        %1431 = vmatpush1.msra.mxu0 %v1430
        %1432 = vmatprep.subr.mxu0 0.0
        %v1433 = vand.u32 %v1395, 4294901760
        %1434 = vmatpush1.msra.mxu0 %v1433
        %1435 = vmatprep.subr.mxu0 0.0
        %v1436 = vand.u32 %v1394, 4294901760
        %1437 = vmatpush1.msra.mxu0 %v1436
        %1438 = vmatprep.subr.mxu0 0.0
        %v1439 = vand.u32 %v1393, 4294901760
        %1440 = vmatpush1.msra.mxu0 %v1439
        %1441 = vmatprep.subr.mxu0 0.0
        %v1442 = vand.u32 %v1392, 4294901760
        %1443 = vmatpush1.msra.mxu0 %v1442
        %1444 = vmatprep.subr.mxu0 0.0
        %v1445 = vand.u32 %v1391, 4294901760
        %1446 = vmatpush1.msra.mxu0 %v1445
        %1447 = vmatprep.subr.mxu0 0.0
        %v1448 = vand.u32 %v1390, 4294901760
        %1449 = vmatpush1.msra.mxu0 %v1448
        %1450 = vmatprep.subr.mxu0 0.0
        %v1451 = vand.u32 %v1389, 4294901760
        %1452 = vmatpush1.msra.mxu0 %v1451
        %1453 = vmatprep.subr.mxu0 0.0
        %1454 = vmatpush2.msra.mxu0 0.0
        %1455 = vmatprep.subr.mxu0 0.0
        %1456 = vmatpush2.msra.mxu0 0.0
        %1457 = vmatprep.subr.mxu0 0.0
        %1458 = vmatpush2.msra.mxu0 0.0
        %1459 = vmatprep.subr.mxu0 0.0
        %1460 = vmatpush2.msra.mxu0 0.0
        %1461 = vmatprep.subr.mxu0 0.0
        %1462 = vmatpush2.msra.mxu0 0.0
        %1463 = vmatprep.subr.mxu0 0.0
        %1464 = vmatpush2.msra.mxu0 0.0
        %1465 = vmatprep.subr.mxu0 0.0
        %1466 = vmatpush2.msra.mxu0 0.0
        %1467 = vmatprep.subr.mxu0 0.0
        %1468 = vmatpush2.msra.mxu0 0.0
        %1469 = vmatprep.subr.mxu0 0.0
        %1470 = vmatpush2.msra.mxu0 0.0
        %1471 = vmatprep.subr.mxu0 0.0
        %1472 = vmatpush2.msra.mxu0 0.0
        %1473 = vmatprep.subr.mxu0 0.0
        %1474 = vmatpush2.msra.mxu0 0.0
        %1475 = vmatprep.subr.mxu0 0.0
        %1476 = vmatpush2.msra.mxu0 0.0
        %1477 = vmatprep.subr.mxu0 0.0
        %1478 = vmatpush2.msra.mxu0 0.0
        %1479 = vmatprep.subr.mxu0 0.0
        %1480 = vmatpush2.msra.mxu0 0.0
        %1481 = vmatprep.subr.mxu0 0.0
        %1482 = vmatpush2.msra.mxu0 0.0
        %1483 = vmatprep.subr.mxu0 0.0
        %1484 = vmatpush2.msra.mxu0 0.0
        %1485 = vmatprep.mubr.f32.mxu0 0.0
        %v1486 = vand.u32 %v1357, 4294901760
        %v1487 = vsub.f32 %v1357, %v1486
        %v1488 = vand.u32 %v1487, 4294901760
        %v1489 = vsub.f32 %v1487, %v1488
        %v1490 = vand.u32 %v1489, 4294901760
        %1491 = vmatmul.mubr.f32.gmra.mxu0 %v1490
        %v1492 = vpop.f32.mrf.mxu0
        %v1493 = vadd.f32 0.0, %v1492
        %v1494 = vpop.f32.mrf.mxu0
        %1495 = vmatprep.mubr.f32.mxu0 0.0
        %v1496 = vand.u32 %v1358, 4294901760
        %v1497 = vsub.f32 %v1358, %v1496
        %v1498 = vand.u32 %v1497, 4294901760
        %v1499 = vsub.f32 %v1497, %v1498
        %v1500 = vand.u32 %v1499, 4294901760
        %1501 = vmatmul.mubr.f32.gmra.mxu0 %v1500
        %v1502 = vpop.f32.mrf.mxu0
        %v1503 = vadd.f32 0.0, %v1502
        %v1504 = vpop.f32.mrf.mxu0
        %1505 = vmatprep.mubr.f32.mxu0 0.0
        %v1506 = vand.u32 %v1359, 4294901760
        %v1507 = vsub.f32 %v1359, %v1506
        %v1508 = vand.u32 %v1507, 4294901760
        %v1509 = vsub.f32 %v1507, %v1508
        %v1510 = vand.u32 %v1509, 4294901760
        %1511 = vmatmul.mubr.f32.gmra.mxu0 %v1510
        %v1512 = vpop.f32.mrf.mxu0
        %v1513 = vadd.f32 0.0, %v1512
        %v1514 = vpop.f32.mrf.mxu0
        %1515 = vmatprep.mubr.f32.mxu0 0.0
        %v1516 = vand.u32 %v1360, 4294901760
        %v1517 = vsub.f32 %v1360, %v1516
        %v1518 = vand.u32 %v1517, 4294901760
        %v1519 = vsub.f32 %v1517, %v1518
        %v1520 = vand.u32 %v1519, 4294901760
        %1521 = vmatmul.mubr.f32.gmra.mxu0 %v1520
        %v1522 = vpop.f32.mrf.mxu0
        %v1523 = vadd.f32 0.0, %v1522
        %v1524 = vpop.f32.mrf.mxu0
        %1525 = vmatprep.mubr.f32.mxu0 0.0
        %v1526 = vand.u32 %v1361, 4294901760
        %v1527 = vsub.f32 %v1361, %v1526
        %v1528 = vand.u32 %v1527, 4294901760
        %v1529 = vsub.f32 %v1527, %v1528
        %v1530 = vand.u32 %v1529, 4294901760
        %1531 = vmatmul.mubr.f32.gmra.mxu0 %v1530
        %v1532 = vpop.f32.mrf.mxu0
        %v1533 = vadd.f32 0.0, %v1532
        %v1534 = vpop.f32.mrf.mxu0
        %1535 = vmatprep.mubr.f32.mxu0 0.0
        %v1536 = vand.u32 %v1362, 4294901760
        %v1537 = vsub.f32 %v1362, %v1536
        %v1538 = vand.u32 %v1537, 4294901760
        %v1539 = vsub.f32 %v1537, %v1538
        %v1540 = vand.u32 %v1539, 4294901760
        %1541 = vmatmul.mubr.f32.gmra.mxu0 %v1540
        %v1542 = vpop.f32.mrf.mxu0
        %v1543 = vadd.f32 0.0, %v1542
        %v1544 = vpop.f32.mrf.mxu0
        %1545 = vmatprep.mubr.f32.mxu0 0.0
        %v1546 = vand.u32 %v1363, 4294901760
        %v1547 = vsub.f32 %v1363, %v1546
        %v1548 = vand.u32 %v1547, 4294901760
        %v1549 = vsub.f32 %v1547, %v1548
        %v1550 = vand.u32 %v1549, 4294901760
        %1551 = vmatmul.mubr.f32.gmra.mxu0 %v1550
        %v1552 = vpop.f32.mrf.mxu0
        %v1553 = vadd.f32 0.0, %v1552
        %v1554 = vpop.f32.mrf.mxu0
        %1555 = vmatprep.mubr.f32.mxu0 0.0
        %v1556 = vand.u32 %v1364, 4294901760
        %v1557 = vsub.f32 %v1364, %v1556
        %v1558 = vand.u32 %v1557, 4294901760
        %v1559 = vsub.f32 %v1557, %v1558
        %v1560 = vand.u32 %v1559, 4294901760
        %1561 = vmatmul.mubr.f32.gmra.mxu0 %v1560
        %v1562 = vpop.f32.mrf.mxu0
        %v1563 = vadd.f32 0.0, %v1562
        %v1564 = vpop.f32.mrf.mxu0
        %1565 = vmatprep.mubr.f32.mxu0 0.0
        %v1566 = vand.u32 %v1365, 4294901760
        %v1567 = vsub.f32 %v1365, %v1566
        %v1568 = vand.u32 %v1567, 4294901760
        %v1569 = vsub.f32 %v1567, %v1568
        %v1570 = vand.u32 %v1569, 4294901760
        %1571 = vmatmul.mubr.f32.gmra.mxu0 %v1570
        %v1572 = vpop.f32.mrf.mxu0
        %v1573 = vadd.f32 0.0, %v1572
        %v1574 = vpop.f32.mrf.mxu0
        %1575 = vmatprep.mubr.f32.mxu0 0.0
        %v1576 = vand.u32 %v1366, 4294901760
        %v1577 = vsub.f32 %v1366, %v1576
        %v1578 = vand.u32 %v1577, 4294901760
        %v1579 = vsub.f32 %v1577, %v1578
        %v1580 = vand.u32 %v1579, 4294901760
        %1581 = vmatmul.mubr.f32.gmra.mxu0 %v1580
        %v1582 = vpop.f32.mrf.mxu0
        %v1583 = vadd.f32 0.0, %v1582
        %v1584 = vpop.f32.mrf.mxu0
        %1585 = vmatprep.mubr.f32.mxu0 0.0
        %v1586 = vand.u32 %v1367, 4294901760
        %v1587 = vsub.f32 %v1367, %v1586
        %v1588 = vand.u32 %v1587, 4294901760
        %v1589 = vsub.f32 %v1587, %v1588
        %v1590 = vand.u32 %v1589, 4294901760
        %1591 = vmatmul.mubr.f32.gmra.mxu0 %v1590
        %v1592 = vpop.f32.mrf.mxu0
        %v1593 = vadd.f32 0.0, %v1592
        %v1594 = vpop.f32.mrf.mxu0
        %1595 = vmatprep.mubr.f32.mxu0 0.0
        %v1596 = vand.u32 %v1368, 4294901760
        %v1597 = vsub.f32 %v1368, %v1596
        %v1598 = vand.u32 %v1597, 4294901760
        %v1599 = vsub.f32 %v1597, %v1598
        %v1600 = vand.u32 %v1599, 4294901760
        %1601 = vmatmul.mubr.f32.gmra.mxu0 %v1600
        %v1602 = vpop.f32.mrf.mxu0
        %v1603 = vadd.f32 0.0, %v1602
        %v1604 = vpop.f32.mrf.mxu0
        %1605 = vmatprep.mubr.f32.mxu0 0.0
        %v1606 = vand.u32 %v1369, 4294901760
        %v1607 = vsub.f32 %v1369, %v1606
        %v1608 = vand.u32 %v1607, 4294901760
        %v1609 = vsub.f32 %v1607, %v1608
        %v1610 = vand.u32 %v1609, 4294901760
        %1611 = vmatmul.mubr.f32.gmra.mxu0 %v1610
        %v1612 = vpop.f32.mrf.mxu0
        %v1613 = vadd.f32 0.0, %v1612
        %v1614 = vpop.f32.mrf.mxu0
        %1615 = vmatprep.mubr.f32.mxu0 0.0
        %v1616 = vand.u32 %v1370, 4294901760
        %v1617 = vsub.f32 %v1370, %v1616
        %v1618 = vand.u32 %v1617, 4294901760
        %v1619 = vsub.f32 %v1617, %v1618
        %v1620 = vand.u32 %v1619, 4294901760
        %1621 = vmatmul.mubr.f32.gmra.mxu0 %v1620
        %v1622 = vpop.f32.mrf.mxu0
        %v1623 = vadd.f32 0.0, %v1622
        %v1624 = vpop.f32.mrf.mxu0
        %1625 = vmatprep.mubr.f32.mxu0 0.0
        %v1626 = vand.u32 %v1371, 4294901760
        %v1627 = vsub.f32 %v1371, %v1626
        %v1628 = vand.u32 %v1627, 4294901760
        %v1629 = vsub.f32 %v1627, %v1628
        %v1630 = vand.u32 %v1629, 4294901760
        %1631 = vmatmul.mubr.f32.gmra.mxu0 %v1630
        %v1632 = vpop.f32.mrf.mxu0
        %v1633 = vadd.f32 0.0, %v1632
        %v1634 = vpop.f32.mrf.mxu0
        %1635 = vmatprep.mubr.f32.mxu0 0.0
        %v1636 = vand.u32 %v1372, 4294901760
        %v1637 = vsub.f32 %v1372, %v1636
        %v1638 = vand.u32 %v1637, 4294901760
        %v1639 = vsub.f32 %v1637, %v1638
        %v1640 = vand.u32 %v1639, 4294901760
        %1641 = vmatmul.mubr.f32.gmra.mxu0 %v1640
        %v1642 = vpop.f32.mrf.mxu0
        %v1643 = vadd.f32 0.0, %v1642
        %v1644 = vpop.f32.mrf.mxu0
        %1645 = vmatprep.mubr.f32.mxu0 0.0
        %v1646 = vand.u32 %v1373, 4294901760
        %v1647 = vsub.f32 %v1373, %v1646
        %v1648 = vand.u32 %v1647, 4294901760
        %v1649 = vsub.f32 %v1647, %v1648
        %v1650 = vand.u32 %v1649, 4294901760
        %1651 = vmatmul.mubr.f32.gmra.mxu0 %v1650
        %v1652 = vpop.f32.mrf.mxu0
        %v1653 = vadd.f32 0.0, %v1652
        %v1654 = vpop.f32.mrf.mxu0
        %1655 = vmatprep.mubr.f32.mxu0 0.0
        %v1656 = vand.u32 %v1374, 4294901760
        %v1657 = vsub.f32 %v1374, %v1656
        %v1658 = vand.u32 %v1657, 4294901760
        %v1659 = vsub.f32 %v1657, %v1658
        %v1660 = vand.u32 %v1659, 4294901760
        %1661 = vmatmul.mubr.f32.gmra.mxu0 %v1660
        %v1662 = vpop.f32.mrf.mxu0
        %v1663 = vadd.f32 0.0, %v1662
        %v1664 = vpop.f32.mrf.mxu0
        %1665 = vmatprep.mubr.f32.mxu0 0.0
        %v1666 = vand.u32 %v1375, 4294901760
        %v1667 = vsub.f32 %v1375, %v1666
        %v1668 = vand.u32 %v1667, 4294901760
        %v1669 = vsub.f32 %v1667, %v1668
        %v1670 = vand.u32 %v1669, 4294901760
        %1671 = vmatmul.mubr.f32.gmra.mxu0 %v1670
        %v1672 = vpop.f32.mrf.mxu0
        %v1673 = vadd.f32 0.0, %v1672
        %v1674 = vpop.f32.mrf.mxu0
        %1675 = vmatprep.mubr.f32.mxu0 0.0
        %v1676 = vand.u32 %v1376, 4294901760
        %v1677 = vsub.f32 %v1376, %v1676
        %v1678 = vand.u32 %v1677, 4294901760
        %v1679 = vsub.f32 %v1677, %v1678
        %v1680 = vand.u32 %v1679, 4294901760
        %1681 = vmatmul.mubr.f32.gmra.mxu0 %v1680
        %v1682 = vpop.f32.mrf.mxu0
        %v1683 = vadd.f32 0.0, %v1682
        %v1684 = vpop.f32.mrf.mxu0
        %1685 = vmatprep.mubr.f32.mxu0 0.0
        %v1686 = vand.u32 %v1377, 4294901760
        %v1687 = vsub.f32 %v1377, %v1686
        %v1688 = vand.u32 %v1687, 4294901760
        %v1689 = vsub.f32 %v1687, %v1688
        %v1690 = vand.u32 %v1689, 4294901760
        %1691 = vmatmul.mubr.f32.gmra.mxu0 %v1690
        %v1692 = vpop.f32.mrf.mxu0
        %v1693 = vadd.f32 0.0, %v1692
        %v1694 = vpop.f32.mrf.mxu0
        %1695 = vmatprep.mubr.f32.mxu0 0.0
        %v1696 = vand.u32 %v1378, 4294901760
        %v1697 = vsub.f32 %v1378, %v1696
        %v1698 = vand.u32 %v1697, 4294901760
        %v1699 = vsub.f32 %v1697, %v1698
        %v1700 = vand.u32 %v1699, 4294901760
        %1701 = vmatmul.mubr.f32.gmra.mxu0 %v1700
        %v1702 = vpop.f32.mrf.mxu0
        %v1703 = vadd.f32 0.0, %v1702
        %v1704 = vpop.f32.mrf.mxu0
        %1705 = vmatprep.mubr.f32.mxu0 0.0
        %v1706 = vand.u32 %v1379, 4294901760
        %v1707 = vsub.f32 %v1379, %v1706
        %v1708 = vand.u32 %v1707, 4294901760
        %v1709 = vsub.f32 %v1707, %v1708
        %v1710 = vand.u32 %v1709, 4294901760
        %1711 = vmatmul.mubr.f32.gmra.mxu0 %v1710
        %v1712 = vpop.f32.mrf.mxu0
        %v1713 = vadd.f32 0.0, %v1712
        %v1714 = vpop.f32.mrf.mxu0
        %1715 = vmatprep.mubr.f32.mxu0 0.0
        %v1716 = vand.u32 %v1380, 4294901760
        %v1717 = vsub.f32 %v1380, %v1716
        %v1718 = vand.u32 %v1717, 4294901760
        %v1719 = vsub.f32 %v1717, %v1718
        %v1720 = vand.u32 %v1719, 4294901760
        %1721 = vmatmul.mubr.f32.gmra.mxu0 %v1720
        %v1722 = vpop.f32.mrf.mxu0
        %v1723 = vadd.f32 0.0, %v1722
        %v1724 = vpop.f32.mrf.mxu0
        %1725 = vmatprep.mubr.f32.mxu0 0.0
        %v1726 = vand.u32 %v1381, 4294901760
        %v1727 = vsub.f32 %v1381, %v1726
        %v1728 = vand.u32 %v1727, 4294901760
        %v1729 = vsub.f32 %v1727, %v1728
        %v1730 = vand.u32 %v1729, 4294901760
        %1731 = vmatmul.mubr.f32.gmra.mxu0 %v1730
        %v1732 = vpop.f32.mrf.mxu0
        %v1733 = vadd.f32 0.0, %v1732
        %v1734 = vpop.f32.mrf.mxu0
        %1735 = vmatprep.mubr.f32.mxu0 0.0
        %v1736 = vand.u32 %v1382, 4294901760
        %v1737 = vsub.f32 %v1382, %v1736
        %v1738 = vand.u32 %v1737, 4294901760
        %v1739 = vsub.f32 %v1737, %v1738
        %v1740 = vand.u32 %v1739, 4294901760
        %1741 = vmatmul.mubr.f32.gmra.mxu0 %v1740
        %v1742 = vpop.f32.mrf.mxu0
        %v1743 = vadd.f32 0.0, %v1742
        %v1744 = vpop.f32.mrf.mxu0
        %1745 = vmatprep.mubr.f32.mxu0 0.0
        %v1746 = vand.u32 %v1383, 4294901760
        %v1747 = vsub.f32 %v1383, %v1746
        %v1748 = vand.u32 %v1747, 4294901760
        %v1749 = vsub.f32 %v1747, %v1748
        %v1750 = vand.u32 %v1749, 4294901760
        %1751 = vmatmul.mubr.f32.gmra.mxu0 %v1750
        %v1752 = vpop.f32.mrf.mxu0
        %v1753 = vadd.f32 0.0, %v1752
        %v1754 = vpop.f32.mrf.mxu0
        %1755 = vmatprep.mubr.f32.mxu0 0.0
        %v1756 = vand.u32 %v1384, 4294901760
        %v1757 = vsub.f32 %v1384, %v1756
        %v1758 = vand.u32 %v1757, 4294901760
        %v1759 = vsub.f32 %v1757, %v1758
        %v1760 = vand.u32 %v1759, 4294901760
        %1761 = vmatmul.mubr.f32.gmra.mxu0 %v1760
        %v1762 = vpop.f32.mrf.mxu0
        %v1763 = vadd.f32 0.0, %v1762
        %v1764 = vpop.f32.mrf.mxu0
        %1765 = vmatprep.mubr.f32.mxu0 0.0
        %v1766 = vand.u32 %v1385, 4294901760
        %v1767 = vsub.f32 %v1385, %v1766
        %v1768 = vand.u32 %v1767, 4294901760
        %v1769 = vsub.f32 %v1767, %v1768
        %v1770 = vand.u32 %v1769, 4294901760
        %1771 = vmatmul.mubr.f32.gmra.mxu0 %v1770
        %v1772 = vpop.f32.mrf.mxu0
        %v1773 = vadd.f32 0.0, %v1772
        %v1774 = vpop.f32.mrf.mxu0
        %1775 = vmatprep.mubr.f32.mxu0 0.0
        %v1776 = vand.u32 %v1386, 4294901760
        %v1777 = vsub.f32 %v1386, %v1776
        %v1778 = vand.u32 %v1777, 4294901760
        %v1779 = vsub.f32 %v1777, %v1778
        %v1780 = vand.u32 %v1779, 4294901760
        %1781 = vmatmul.mubr.f32.gmra.mxu0 %v1780
        %v1782 = vpop.f32.mrf.mxu0
        %v1783 = vadd.f32 0.0, %v1782
        %v1784 = vpop.f32.mrf.mxu0
        %1785 = vmatprep.mubr.f32.mxu0 0.0
        %v1786 = vand.u32 %v1387, 4294901760
        %v1787 = vsub.f32 %v1387, %v1786
        %v1788 = vand.u32 %v1787, 4294901760
        %v1789 = vsub.f32 %v1787, %v1788
        %v1790 = vand.u32 %v1789, 4294901760
        %1791 = vmatmul.mubr.f32.gmra.mxu0 %v1790
        %v1792 = vpop.f32.mrf.mxu0
        %v1793 = vadd.f32 0.0, %v1792
        %v1794 = vpop.f32.mrf.mxu0
        %1795 = vmatprep.mubr.f32.mxu0 0.0
        %v1796 = vand.u32 %v1388, 4294901760
        %v1797 = vsub.f32 %v1388, %v1796
        %v1798 = vand.u32 %v1797, 4294901760
        %v1799 = vsub.f32 %v1797, %v1798
        %v1800 = vand.u32 %v1799, 4294901760
        %1801 = vmatmul.mubr.f32.gmra.mxu0 %v1800
        %v1802 = vpop.f32.mrf.mxu0
        %v1803 = vadd.f32 0.0, %v1802
        %v1804 = vpop.f32.mrf.mxu0
        %1805 = vdwg.mxu0
        %1806 = vmatprep.subr.mxu0 0.0
        %v1807 = vand.u32 %v1404, 4294901760
        %v1808 = vsub.f32 %v1404, %v1807
        %v1809 = vand.u32 %v1808, 4294901760
        %v1810 = vsub.f32 %v1808, %v1809
        %v1811 = vand.u32 %v1810, 4294901760
        %1812 = vmatpush1.msra.mxu0 %v1811
        %1813 = vmatprep.subr.mxu0 0.0
        %v1814 = vand.u32 %v1403, 4294901760
        %v1815 = vsub.f32 %v1403, %v1814
        %v1816 = vand.u32 %v1815, 4294901760
        %v1817 = vsub.f32 %v1815, %v1816
        %v1818 = vand.u32 %v1817, 4294901760
        %1819 = vmatpush1.msra.mxu0 %v1818
        %1820 = vmatprep.subr.mxu0 0.0
        %v1821 = vand.u32 %v1402, 4294901760
        %v1822 = vsub.f32 %v1402, %v1821
        %v1823 = vand.u32 %v1822, 4294901760
        %v1824 = vsub.f32 %v1822, %v1823
        %v1825 = vand.u32 %v1824, 4294901760
        %1826 = vmatpush1.msra.mxu0 %v1825
        %1827 = vmatprep.subr.mxu0 0.0
        %v1828 = vand.u32 %v1401, 4294901760
        %v1829 = vsub.f32 %v1401, %v1828
        %v1830 = vand.u32 %v1829, 4294901760
        %v1831 = vsub.f32 %v1829, %v1830
        %v1832 = vand.u32 %v1831, 4294901760
        %1833 = vmatpush1.msra.mxu0 %v1832
        %1834 = vmatprep.subr.mxu0 0.0
        %v1835 = vand.u32 %v1400, 4294901760
        %v1836 = vsub.f32 %v1400, %v1835
        %v1837 = vand.u32 %v1836, 4294901760
        %v1838 = vsub.f32 %v1836, %v1837
        %v1839 = vand.u32 %v1838, 4294901760
        %1840 = vmatpush1.msra.mxu0 %v1839
        %1841 = vmatprep.subr.mxu0 0.0
        %v1842 = vand.u32 %v1399, 4294901760
        %v1843 = vsub.f32 %v1399, %v1842
        %v1844 = vand.u32 %v1843, 4294901760
        %v1845 = vsub.f32 %v1843, %v1844
        %v1846 = vand.u32 %v1845, 4294901760
        %1847 = vmatpush1.msra.mxu0 %v1846
        %1848 = vmatprep.subr.mxu0 0.0
        %v1849 = vand.u32 %v1398, 4294901760
        %v1850 = vsub.f32 %v1398, %v1849
        %v1851 = vand.u32 %v1850, 4294901760
        %v1852 = vsub.f32 %v1850, %v1851
        %v1853 = vand.u32 %v1852, 4294901760
        %1854 = vmatpush1.msra.mxu0 %v1853
        %1855 = vmatprep.subr.mxu0 0.0
        %v1856 = vand.u32 %v1397, 4294901760
        %v1857 = vsub.f32 %v1397, %v1856
        %v1858 = vand.u32 %v1857, 4294901760
        %v1859 = vsub.f32 %v1857, %v1858
        %v1860 = vand.u32 %v1859, 4294901760
        %1861 = vmatpush1.msra.mxu0 %v1860
        %1862 = vmatprep.subr.mxu0 0.0
        %v1863 = vand.u32 %v1396, 4294901760
        %v1864 = vsub.f32 %v1396, %v1863
        %v1865 = vand.u32 %v1864, 4294901760
        %v1866 = vsub.f32 %v1864, %v1865
        %v1867 = vand.u32 %v1866, 4294901760
        %1868 = vmatpush1.msra.mxu0 %v1867
        %1869 = vmatprep.subr.mxu0 0.0
        %v1870 = vand.u32 %v1395, 4294901760
        %v1871 = vsub.f32 %v1395, %v1870
        %v1872 = vand.u32 %v1871, 4294901760
        %v1873 = vsub.f32 %v1871, %v1872
        %v1874 = vand.u32 %v1873, 4294901760
        %1875 = vmatpush1.msra.mxu0 %v1874
        %1876 = vmatprep.subr.mxu0 0.0
        %v1877 = vand.u32 %v1394, 4294901760
        %v1878 = vsub.f32 %v1394, %v1877
        %v1879 = vand.u32 %v1878, 4294901760
        %v1880 = vsub.f32 %v1878, %v1879
        %v1881 = vand.u32 %v1880, 4294901760
        %1882 = vmatpush1.msra.mxu0 %v1881
        %1883 = vmatprep.subr.mxu0 0.0
        %v1884 = vand.u32 %v1393, 4294901760
        %v1885 = vsub.f32 %v1393, %v1884
        %v1886 = vand.u32 %v1885, 4294901760
        %v1887 = vsub.f32 %v1885, %v1886
        %v1888 = vand.u32 %v1887, 4294901760
        %1889 = vmatpush1.msra.mxu0 %v1888
        %1890 = vmatprep.subr.mxu0 0.0
        %v1891 = vand.u32 %v1392, 4294901760
        %v1892 = vsub.f32 %v1392, %v1891
        %v1893 = vand.u32 %v1892, 4294901760
        %v1894 = vsub.f32 %v1892, %v1893
        %v1895 = vand.u32 %v1894, 4294901760
        %1896 = vmatpush1.msra.mxu0 %v1895
        %1897 = vmatprep.subr.mxu0 0.0
        %v1898 = vand.u32 %v1391, 4294901760
        %v1899 = vsub.f32 %v1391, %v1898
        %v1900 = vand.u32 %v1899, 4294901760
        %v1901 = vsub.f32 %v1899, %v1900
        %v1902 = vand.u32 %v1901, 4294901760
        %1903 = vmatpush1.msra.mxu0 %v1902
        %1904 = vmatprep.subr.mxu0 0.0
        %v1905 = vand.u32 %v1390, 4294901760
        %v1906 = vsub.f32 %v1390, %v1905
        %v1907 = vand.u32 %v1906, 4294901760
        %v1908 = vsub.f32 %v1906, %v1907
        %v1909 = vand.u32 %v1908, 4294901760
        %1910 = vmatpush1.msra.mxu0 %v1909
        %1911 = vmatprep.subr.mxu0 0.0
        %v1912 = vand.u32 %v1389, 4294901760
        %v1913 = vsub.f32 %v1389, %v1912
        %v1914 = vand.u32 %v1913, 4294901760
        %v1915 = vsub.f32 %v1913, %v1914
        %v1916 = vand.u32 %v1915, 4294901760
        %1917 = vmatpush1.msra.mxu0 %v1916
        %1918 = vmatprep.subr.mxu0 0.0
        %1919 = vmatpush2.msra.mxu0 0.0
        %1920 = vmatprep.subr.mxu0 0.0
        %1921 = vmatpush2.msra.mxu0 0.0
        %1922 = vmatprep.subr.mxu0 0.0
        %1923 = vmatpush2.msra.mxu0 0.0
        %1924 = vmatprep.subr.mxu0 0.0
        %1925 = vmatpush2.msra.mxu0 0.0
        %1926 = vmatprep.subr.mxu0 0.0
        %1927 = vmatpush2.msra.mxu0 0.0
        %1928 = vmatprep.subr.mxu0 0.0
        %1929 = vmatpush2.msra.mxu0 0.0
        %1930 = vmatprep.subr.mxu0 0.0
        %1931 = vmatpush2.msra.mxu0 0.0
        %1932 = vmatprep.subr.mxu0 0.0
        %1933 = vmatpush2.msra.mxu0 0.0
        %1934 = vmatprep.subr.mxu0 0.0
        %1935 = vmatpush2.msra.mxu0 0.0
        %1936 = vmatprep.subr.mxu0 0.0
        %1937 = vmatpush2.msra.mxu0 0.0
        %1938 = vmatprep.subr.mxu0 0.0
        %1939 = vmatpush2.msra.mxu0 0.0
        %1940 = vmatprep.subr.mxu0 0.0
        %1941 = vmatpush2.msra.mxu0 0.0
        %1942 = vmatprep.subr.mxu0 0.0
        %1943 = vmatpush2.msra.mxu0 0.0
        %1944 = vmatprep.subr.mxu0 0.0
        %1945 = vmatpush2.msra.mxu0 0.0
        %1946 = vmatprep.subr.mxu0 0.0
        %1947 = vmatpush2.msra.mxu0 0.0
        %1948 = vmatprep.subr.mxu0 0.0
        %1949 = vmatpush2.msra.mxu0 0.0
        %1950 = vmatprep.mubr.f32.mxu0 0.0
        %v1951 = vand.u32 %v1357, 4294901760
        %1952 = vmatmul.mubr.f32.gmra.mxu0 %v1951
        %v1953 = vpop.f32.mrf.mxu0
        %v1954 = vadd.f32 %v1493, %v1953
        %v1955 = vpop.f32.mrf.mxu0
        %1956 = vmatprep.mubr.f32.mxu0 0.0
        %v1957 = vand.u32 %v1358, 4294901760
        %1958 = vmatmul.mubr.f32.gmra.mxu0 %v1957
        %v1959 = vpop.f32.mrf.mxu0
        %v1960 = vadd.f32 %v1503, %v1959
        %v1961 = vpop.f32.mrf.mxu0
        %1962 = vmatprep.mubr.f32.mxu0 0.0
        %v1963 = vand.u32 %v1359, 4294901760
        %1964 = vmatmul.mubr.f32.gmra.mxu0 %v1963
        %v1965 = vpop.f32.mrf.mxu0
        %v1966 = vadd.f32 %v1513, %v1965
        %v1967 = vpop.f32.mrf.mxu0
        %1968 = vmatprep.mubr.f32.mxu0 0.0
        %v1969 = vand.u32 %v1360, 4294901760
        %1970 = vmatmul.mubr.f32.gmra.mxu0 %v1969
        %v1971 = vpop.f32.mrf.mxu0
        %v1972 = vadd.f32 %v1523, %v1971
        %v1973 = vpop.f32.mrf.mxu0
        %1974 = vmatprep.mubr.f32.mxu0 0.0
        %v1975 = vand.u32 %v1361, 4294901760
        %1976 = vmatmul.mubr.f32.gmra.mxu0 %v1975
        %v1977 = vpop.f32.mrf.mxu0
        %v1978 = vadd.f32 %v1533, %v1977
        %v1979 = vpop.f32.mrf.mxu0
        %1980 = vmatprep.mubr.f32.mxu0 0.0
        %v1981 = vand.u32 %v1362, 4294901760
        %1982 = vmatmul.mubr.f32.gmra.mxu0 %v1981
        %v1983 = vpop.f32.mrf.mxu0
        %v1984 = vadd.f32 %v1543, %v1983
        %v1985 = vpop.f32.mrf.mxu0
        %1986 = vmatprep.mubr.f32.mxu0 0.0
        %v1987 = vand.u32 %v1363, 4294901760
        %1988 = vmatmul.mubr.f32.gmra.mxu0 %v1987
        %v1989 = vpop.f32.mrf.mxu0
        %v1990 = vadd.f32 %v1553, %v1989
        %v1991 = vpop.f32.mrf.mxu0
        %1992 = vmatprep.mubr.f32.mxu0 0.0
        %v1993 = vand.u32 %v1364, 4294901760
        %1994 = vmatmul.mubr.f32.gmra.mxu0 %v1993
        %v1995 = vpop.f32.mrf.mxu0
        %v1996 = vadd.f32 %v1563, %v1995
        %v1997 = vpop.f32.mrf.mxu0
        %1998 = vmatprep.mubr.f32.mxu0 0.0
        %v1999 = vand.u32 %v1365, 4294901760
        %2000 = vmatmul.mubr.f32.gmra.mxu0 %v1999
        %v2001 = vpop.f32.mrf.mxu0
        %v2002 = vadd.f32 %v1573, %v2001
        %v2003 = vpop.f32.mrf.mxu0
        %2004 = vmatprep.mubr.f32.mxu0 0.0
        %v2005 = vand.u32 %v1366, 4294901760
        %2006 = vmatmul.mubr.f32.gmra.mxu0 %v2005
        %v2007 = vpop.f32.mrf.mxu0
        %v2008 = vadd.f32 %v1583, %v2007
        %v2009 = vpop.f32.mrf.mxu0
        %2010 = vmatprep.mubr.f32.mxu0 0.0
        %v2011 = vand.u32 %v1367, 4294901760
        %2012 = vmatmul.mubr.f32.gmra.mxu0 %v2011
        %v2013 = vpop.f32.mrf.mxu0
        %v2014 = vadd.f32 %v1593, %v2013
        %v2015 = vpop.f32.mrf.mxu0
        %2016 = vmatprep.mubr.f32.mxu0 0.0
        %v2017 = vand.u32 %v1368, 4294901760
        %2018 = vmatmul.mubr.f32.gmra.mxu0 %v2017
        %v2019 = vpop.f32.mrf.mxu0
        %v2020 = vadd.f32 %v1603, %v2019
        %v2021 = vpop.f32.mrf.mxu0
        %2022 = vmatprep.mubr.f32.mxu0 0.0
        %v2023 = vand.u32 %v1369, 4294901760
        %2024 = vmatmul.mubr.f32.gmra.mxu0 %v2023
        %v2025 = vpop.f32.mrf.mxu0
        %v2026 = vadd.f32 %v1613, %v2025
        %v2027 = vpop.f32.mrf.mxu0
        %2028 = vmatprep.mubr.f32.mxu0 0.0
        %v2029 = vand.u32 %v1370, 4294901760
        %2030 = vmatmul.mubr.f32.gmra.mxu0 %v2029
        %v2031 = vpop.f32.mrf.mxu0
        %v2032 = vadd.f32 %v1623, %v2031
        %v2033 = vpop.f32.mrf.mxu0
        %2034 = vmatprep.mubr.f32.mxu0 0.0
        %v2035 = vand.u32 %v1371, 4294901760
        %2036 = vmatmul.mubr.f32.gmra.mxu0 %v2035
        %v2037 = vpop.f32.mrf.mxu0
        %v2038 = vadd.f32 %v1633, %v2037
        %v2039 = vpop.f32.mrf.mxu0
        %2040 = vmatprep.mubr.f32.mxu0 0.0
        %v2041 = vand.u32 %v1372, 4294901760
        %2042 = vmatmul.mubr.f32.gmra.mxu0 %v2041
        %v2043 = vpop.f32.mrf.mxu0
        %v2044 = vadd.f32 %v1643, %v2043
        %v2045 = vpop.f32.mrf.mxu0
        %2046 = vmatprep.mubr.f32.mxu0 0.0
        %v2047 = vand.u32 %v1373, 4294901760
        %2048 = vmatmul.mubr.f32.gmra.mxu0 %v2047
        %v2049 = vpop.f32.mrf.mxu0
        %v2050 = vadd.f32 %v1653, %v2049
        %v2051 = vpop.f32.mrf.mxu0
        %2052 = vmatprep.mubr.f32.mxu0 0.0
        %v2053 = vand.u32 %v1374, 4294901760
        %2054 = vmatmul.mubr.f32.gmra.mxu0 %v2053
        %v2055 = vpop.f32.mrf.mxu0
        %v2056 = vadd.f32 %v1663, %v2055
        %v2057 = vpop.f32.mrf.mxu0
        %2058 = vmatprep.mubr.f32.mxu0 0.0
        %v2059 = vand.u32 %v1375, 4294901760
        %2060 = vmatmul.mubr.f32.gmra.mxu0 %v2059
        %v2061 = vpop.f32.mrf.mxu0
        %v2062 = vadd.f32 %v1673, %v2061
        %v2063 = vpop.f32.mrf.mxu0
        %2064 = vmatprep.mubr.f32.mxu0 0.0
        %v2065 = vand.u32 %v1376, 4294901760
        %2066 = vmatmul.mubr.f32.gmra.mxu0 %v2065
        %v2067 = vpop.f32.mrf.mxu0
        %v2068 = vadd.f32 %v1683, %v2067
        %v2069 = vpop.f32.mrf.mxu0
        %2070 = vmatprep.mubr.f32.mxu0 0.0
        %v2071 = vand.u32 %v1377, 4294901760
        %2072 = vmatmul.mubr.f32.gmra.mxu0 %v2071
        %v2073 = vpop.f32.mrf.mxu0
        %v2074 = vadd.f32 %v1693, %v2073
        %v2075 = vpop.f32.mrf.mxu0
        %2076 = vmatprep.mubr.f32.mxu0 0.0
        %v2077 = vand.u32 %v1378, 4294901760
        %2078 = vmatmul.mubr.f32.gmra.mxu0 %v2077
        %v2079 = vpop.f32.mrf.mxu0
        %v2080 = vadd.f32 %v1703, %v2079
        %v2081 = vpop.f32.mrf.mxu0
        %2082 = vmatprep.mubr.f32.mxu0 0.0
        %v2083 = vand.u32 %v1379, 4294901760
        %2084 = vmatmul.mubr.f32.gmra.mxu0 %v2083
        %v2085 = vpop.f32.mrf.mxu0
        %v2086 = vadd.f32 %v1713, %v2085
        %v2087 = vpop.f32.mrf.mxu0
        %2088 = vmatprep.mubr.f32.mxu0 0.0
        %v2089 = vand.u32 %v1380, 4294901760
        %2090 = vmatmul.mubr.f32.gmra.mxu0 %v2089
        %v2091 = vpop.f32.mrf.mxu0
        %v2092 = vadd.f32 %v1723, %v2091
        %v2093 = vpop.f32.mrf.mxu0
        %2094 = vmatprep.mubr.f32.mxu0 0.0
        %v2095 = vand.u32 %v1381, 4294901760
        %2096 = vmatmul.mubr.f32.gmra.mxu0 %v2095
        %v2097 = vpop.f32.mrf.mxu0
        %v2098 = vadd.f32 %v1733, %v2097
        %v2099 = vpop.f32.mrf.mxu0
        %2100 = vmatprep.mubr.f32.mxu0 0.0
        %v2101 = vand.u32 %v1382, 4294901760
        %2102 = vmatmul.mubr.f32.gmra.mxu0 %v2101
        %v2103 = vpop.f32.mrf.mxu0
        %v2104 = vadd.f32 %v1743, %v2103
        %v2105 = vpop.f32.mrf.mxu0
        %2106 = vmatprep.mubr.f32.mxu0 0.0
        %v2107 = vand.u32 %v1383, 4294901760
        %2108 = vmatmul.mubr.f32.gmra.mxu0 %v2107
        %v2109 = vpop.f32.mrf.mxu0
        %v2110 = vadd.f32 %v1753, %v2109
        %v2111 = vpop.f32.mrf.mxu0
        %2112 = vmatprep.mubr.f32.mxu0 0.0
        %v2113 = vand.u32 %v1384, 4294901760
        %2114 = vmatmul.mubr.f32.gmra.mxu0 %v2113
        %v2115 = vpop.f32.mrf.mxu0
        %v2116 = vadd.f32 %v1763, %v2115
        %v2117 = vpop.f32.mrf.mxu0
        %2118 = vmatprep.mubr.f32.mxu0 0.0
        %v2119 = vand.u32 %v1385, 4294901760
        %2120 = vmatmul.mubr.f32.gmra.mxu0 %v2119
        %v2121 = vpop.f32.mrf.mxu0
        %v2122 = vadd.f32 %v1773, %v2121
        %v2123 = vpop.f32.mrf.mxu0
        %2124 = vmatprep.mubr.f32.mxu0 0.0
        %v2125 = vand.u32 %v1386, 4294901760
        %2126 = vmatmul.mubr.f32.gmra.mxu0 %v2125
        %v2127 = vpop.f32.mrf.mxu0
        %v2128 = vadd.f32 %v1783, %v2127
        %v2129 = vpop.f32.mrf.mxu0
        %2130 = vmatprep.mubr.f32.mxu0 0.0
        %v2131 = vand.u32 %v1387, 4294901760
        %2132 = vmatmul.mubr.f32.gmra.mxu0 %v2131
        %v2133 = vpop.f32.mrf.mxu0
        %v2134 = vadd.f32 %v1793, %v2133
        %v2135 = vpop.f32.mrf.mxu0
        %2136 = vmatprep.mubr.f32.mxu0 0.0
        %v2137 = vand.u32 %v1388, 4294901760
        %2138 = vmatmul.mubr.f32.gmra.mxu0 %v2137
        %v2139 = vpop.f32.mrf.mxu0
        %v2140 = vadd.f32 %v1803, %v2139
        %v2141 = vpop.f32.mrf.mxu0
        %2142 = vdwg.mxu0
        %2143 = vmatprep.subr.mxu0 0.0
        %v2144 = vand.u32 %v1404, 4294901760
        %v2145 = vsub.f32 %v1404, %v2144
        %2146 = vmatpush1.msra.mxu0 %v2145
        %2147 = vmatprep.subr.mxu0 0.0
        %v2148 = vand.u32 %v1403, 4294901760
        %v2149 = vsub.f32 %v1403, %v2148
        %2150 = vmatpush1.msra.mxu0 %v2149
        %2151 = vmatprep.subr.mxu0 0.0
        %v2152 = vand.u32 %v1402, 4294901760
        %v2153 = vsub.f32 %v1402, %v2152
        %2154 = vmatpush1.msra.mxu0 %v2153
        %2155 = vmatprep.subr.mxu0 0.0
        %v2156 = vand.u32 %v1401, 4294901760
        %v2157 = vsub.f32 %v1401, %v2156
        %2158 = vmatpush1.msra.mxu0 %v2157
        %2159 = vmatprep.subr.mxu0 0.0
        %v2160 = vand.u32 %v1400, 4294901760
        %v2161 = vsub.f32 %v1400, %v2160
        %2162 = vmatpush1.msra.mxu0 %v2161
        %2163 = vmatprep.subr.mxu0 0.0
        %v2164 = vand.u32 %v1399, 4294901760
        %v2165 = vsub.f32 %v1399, %v2164
        %2166 = vmatpush1.msra.mxu0 %v2165
        %2167 = vmatprep.subr.mxu0 0.0
        %v2168 = vand.u32 %v1398, 4294901760
        %v2169 = vsub.f32 %v1398, %v2168
        %2170 = vmatpush1.msra.mxu0 %v2169
        %2171 = vmatprep.subr.mxu0 0.0
        %v2172 = vand.u32 %v1397, 4294901760
        %v2173 = vsub.f32 %v1397, %v2172
        %2174 = vmatpush1.msra.mxu0 %v2173
        %2175 = vmatprep.subr.mxu0 0.0
        %v2176 = vand.u32 %v1396, 4294901760
        %v2177 = vsub.f32 %v1396, %v2176
        %2178 = vmatpush1.msra.mxu0 %v2177
        %2179 = vmatprep.subr.mxu0 0.0
        %v2180 = vand.u32 %v1395, 4294901760
        %v2181 = vsub.f32 %v1395, %v2180
        %2182 = vmatpush1.msra.mxu0 %v2181
        %2183 = vmatprep.subr.mxu0 0.0
        %v2184 = vand.u32 %v1394, 4294901760
        %v2185 = vsub.f32 %v1394, %v2184
        %2186 = vmatpush1.msra.mxu0 %v2185
        %2187 = vmatprep.subr.mxu0 0.0
        %v2188 = vand.u32 %v1393, 4294901760
        %v2189 = vsub.f32 %v1393, %v2188
        %2190 = vmatpush1.msra.mxu0 %v2189
        %2191 = vmatprep.subr.mxu0 0.0
        %v2192 = vand.u32 %v1392, 4294901760
        %v2193 = vsub.f32 %v1392, %v2192
        %2194 = vmatpush1.msra.mxu0 %v2193
        %2195 = vmatprep.subr.mxu0 0.0
        %v2196 = vand.u32 %v1391, 4294901760
        %v2197 = vsub.f32 %v1391, %v2196
        %2198 = vmatpush1.msra.mxu0 %v2197
        %2199 = vmatprep.subr.mxu0 0.0
        %v2200 = vand.u32 %v1390, 4294901760
        %v2201 = vsub.f32 %v1390, %v2200
        %2202 = vmatpush1.msra.mxu0 %v2201
        %2203 = vmatprep.subr.mxu0 0.0
        %v2204 = vand.u32 %v1389, 4294901760
        %v2205 = vsub.f32 %v1389, %v2204
        %2206 = vmatpush1.msra.mxu0 %v2205
        %2207 = vmatprep.subr.mxu0 0.0
        %2208 = vmatpush2.msra.mxu0 0.0
        %2209 = vmatprep.subr.mxu0 0.0
        %2210 = vmatpush2.msra.mxu0 0.0
        %2211 = vmatprep.subr.mxu0 0.0
        %2212 = vmatpush2.msra.mxu0 0.0
        %2213 = vmatprep.subr.mxu0 0.0
        %2214 = vmatpush2.msra.mxu0 0.0
        %2215 = vmatprep.subr.mxu0 0.0
        %2216 = vmatpush2.msra.mxu0 0.0
        %2217 = vmatprep.subr.mxu0 0.0
        %2218 = vmatpush2.msra.mxu0 0.0
        %2219 = vmatprep.subr.mxu0 0.0
        %2220 = vmatpush2.msra.mxu0 0.0
        %2221 = vmatprep.subr.mxu0 0.0
        %2222 = vmatpush2.msra.mxu0 0.0
        %2223 = vmatprep.subr.mxu0 0.0
        %2224 = vmatpush2.msra.mxu0 0.0
        %2225 = vmatprep.subr.mxu0 0.0
        %2226 = vmatpush2.msra.mxu0 0.0
        %2227 = vmatprep.subr.mxu0 0.0
        %2228 = vmatpush2.msra.mxu0 0.0
        %2229 = vmatprep.subr.mxu0 0.0
        %2230 = vmatpush2.msra.mxu0 0.0
        %2231 = vmatprep.subr.mxu0 0.0
        %2232 = vmatpush2.msra.mxu0 0.0
        %2233 = vmatprep.subr.mxu0 0.0
        %2234 = vmatpush2.msra.mxu0 0.0
        %2235 = vmatprep.subr.mxu0 0.0
        %2236 = vmatpush2.msra.mxu0 0.0
        %2237 = vmatprep.subr.mxu0 0.0
        %2238 = vmatpush2.msra.mxu0 0.0
        %2239 = vmatprep.mubr.f32.mxu0 0.0
        %v2240 = vand.u32 %v1357, 4294901760
        %v2241 = vsub.f32 %v1357, %v2240
        %2242 = vmatmul.mubr.f32.gmra.mxu0 %v2241
        %v2243 = vpop.f32.mrf.mxu0
        %v2244 = vadd.f32 %v1954, %v2243
        %v2245 = vpop.f32.mrf.mxu0
        %2246 = vmatprep.mubr.f32.mxu0 0.0
        %v2247 = vand.u32 %v1358, 4294901760
        %v2248 = vsub.f32 %v1358, %v2247
        %2249 = vmatmul.mubr.f32.gmra.mxu0 %v2248
        %v2250 = vpop.f32.mrf.mxu0
        %v2251 = vadd.f32 %v1960, %v2250
        %v2252 = vpop.f32.mrf.mxu0
        %2253 = vmatprep.mubr.f32.mxu0 0.0
        %v2254 = vand.u32 %v1359, 4294901760
        %v2255 = vsub.f32 %v1359, %v2254
        %2256 = vmatmul.mubr.f32.gmra.mxu0 %v2255
        %v2257 = vpop.f32.mrf.mxu0
        %v2258 = vadd.f32 %v1966, %v2257
        %v2259 = vpop.f32.mrf.mxu0
        %2260 = vmatprep.mubr.f32.mxu0 0.0
        %v2261 = vand.u32 %v1360, 4294901760
        %v2262 = vsub.f32 %v1360, %v2261
        %2263 = vmatmul.mubr.f32.gmra.mxu0 %v2262
        %v2264 = vpop.f32.mrf.mxu0
        %v2265 = vadd.f32 %v1972, %v2264
        %v2266 = vpop.f32.mrf.mxu0
        %2267 = vmatprep.mubr.f32.mxu0 0.0
        %v2268 = vand.u32 %v1361, 4294901760
        %v2269 = vsub.f32 %v1361, %v2268
        %2270 = vmatmul.mubr.f32.gmra.mxu0 %v2269
        %v2271 = vpop.f32.mrf.mxu0
        %v2272 = vadd.f32 %v1978, %v2271
        %v2273 = vpop.f32.mrf.mxu0
        %2274 = vmatprep.mubr.f32.mxu0 0.0
        %v2275 = vand.u32 %v1362, 4294901760
        %v2276 = vsub.f32 %v1362, %v2275
        %2277 = vmatmul.mubr.f32.gmra.mxu0 %v2276
        %v2278 = vpop.f32.mrf.mxu0
        %v2279 = vadd.f32 %v1984, %v2278
        %v2280 = vpop.f32.mrf.mxu0
        %2281 = vmatprep.mubr.f32.mxu0 0.0
        %v2282 = vand.u32 %v1363, 4294901760
        %v2283 = vsub.f32 %v1363, %v2282
        %2284 = vmatmul.mubr.f32.gmra.mxu0 %v2283
        %v2285 = vpop.f32.mrf.mxu0
        %v2286 = vadd.f32 %v1990, %v2285
        %v2287 = vpop.f32.mrf.mxu0
        %2288 = vmatprep.mubr.f32.mxu0 0.0
        %v2289 = vand.u32 %v1364, 4294901760
        %v2290 = vsub.f32 %v1364, %v2289
        %2291 = vmatmul.mubr.f32.gmra.mxu0 %v2290
        %v2292 = vpop.f32.mrf.mxu0
        %v2293 = vadd.f32 %v1996, %v2292
        %v2294 = vpop.f32.mrf.mxu0
        %2295 = vmatprep.mubr.f32.mxu0 0.0
        %v2296 = vand.u32 %v1365, 4294901760
        %v2297 = vsub.f32 %v1365, %v2296
        %2298 = vmatmul.mubr.f32.gmra.mxu0 %v2297
        %v2299 = vpop.f32.mrf.mxu0
        %v2300 = vadd.f32 %v2002, %v2299
        %v2301 = vpop.f32.mrf.mxu0
        %2302 = vmatprep.mubr.f32.mxu0 0.0
        %v2303 = vand.u32 %v1366, 4294901760
        %v2304 = vsub.f32 %v1366, %v2303
        %2305 = vmatmul.mubr.f32.gmra.mxu0 %v2304
        %v2306 = vpop.f32.mrf.mxu0
        %v2307 = vadd.f32 %v2008, %v2306
        %v2308 = vpop.f32.mrf.mxu0
        %2309 = vmatprep.mubr.f32.mxu0 0.0
        %v2310 = vand.u32 %v1367, 4294901760
        %v2311 = vsub.f32 %v1367, %v2310
        %2312 = vmatmul.mubr.f32.gmra.mxu0 %v2311
        %v2313 = vpop.f32.mrf.mxu0
        %v2314 = vadd.f32 %v2014, %v2313
        %v2315 = vpop.f32.mrf.mxu0
        %2316 = vmatprep.mubr.f32.mxu0 0.0
        %v2317 = vand.u32 %v1368, 4294901760
        %v2318 = vsub.f32 %v1368, %v2317
        %2319 = vmatmul.mubr.f32.gmra.mxu0 %v2318
        %v2320 = vpop.f32.mrf.mxu0
        %v2321 = vadd.f32 %v2020, %v2320
        %v2322 = vpop.f32.mrf.mxu0
        %2323 = vmatprep.mubr.f32.mxu0 0.0
        %v2324 = vand.u32 %v1369, 4294901760
        %v2325 = vsub.f32 %v1369, %v2324
        %2326 = vmatmul.mubr.f32.gmra.mxu0 %v2325
        %v2327 = vpop.f32.mrf.mxu0
        %v2328 = vadd.f32 %v2026, %v2327
        %v2329 = vpop.f32.mrf.mxu0
        %2330 = vmatprep.mubr.f32.mxu0 0.0
        %v2331 = vand.u32 %v1370, 4294901760
        %v2332 = vsub.f32 %v1370, %v2331
        %2333 = vmatmul.mubr.f32.gmra.mxu0 %v2332
        %v2334 = vpop.f32.mrf.mxu0
        %v2335 = vadd.f32 %v2032, %v2334
        %v2336 = vpop.f32.mrf.mxu0
        %2337 = vmatprep.mubr.f32.mxu0 0.0
        %v2338 = vand.u32 %v1371, 4294901760
        %v2339 = vsub.f32 %v1371, %v2338
        %2340 = vmatmul.mubr.f32.gmra.mxu0 %v2339
        %v2341 = vpop.f32.mrf.mxu0
        %v2342 = vadd.f32 %v2038, %v2341
        %v2343 = vpop.f32.mrf.mxu0
        %2344 = vmatprep.mubr.f32.mxu0 0.0
        %v2345 = vand.u32 %v1372, 4294901760
        %v2346 = vsub.f32 %v1372, %v2345
        %2347 = vmatmul.mubr.f32.gmra.mxu0 %v2346
        %v2348 = vpop.f32.mrf.mxu0
        %v2349 = vadd.f32 %v2044, %v2348
        %v2350 = vpop.f32.mrf.mxu0
        %2351 = vmatprep.mubr.f32.mxu0 0.0
        %v2352 = vand.u32 %v1373, 4294901760
        %v2353 = vsub.f32 %v1373, %v2352
        %2354 = vmatmul.mubr.f32.gmra.mxu0 %v2353
        %v2355 = vpop.f32.mrf.mxu0
        %v2356 = vadd.f32 %v2050, %v2355
        %v2357 = vpop.f32.mrf.mxu0
        %2358 = vmatprep.mubr.f32.mxu0 0.0
        %v2359 = vand.u32 %v1374, 4294901760
        %v2360 = vsub.f32 %v1374, %v2359
        %2361 = vmatmul.mubr.f32.gmra.mxu0 %v2360
        %v2362 = vpop.f32.mrf.mxu0
        %v2363 = vadd.f32 %v2056, %v2362
        %v2364 = vpop.f32.mrf.mxu0
        %2365 = vmatprep.mubr.f32.mxu0 0.0
        %v2366 = vand.u32 %v1375, 4294901760
        %v2367 = vsub.f32 %v1375, %v2366
        %2368 = vmatmul.mubr.f32.gmra.mxu0 %v2367
        %v2369 = vpop.f32.mrf.mxu0
        %v2370 = vadd.f32 %v2062, %v2369
        %v2371 = vpop.f32.mrf.mxu0
        %2372 = vmatprep.mubr.f32.mxu0 0.0
        %v2373 = vand.u32 %v1376, 4294901760
        %v2374 = vsub.f32 %v1376, %v2373
        %2375 = vmatmul.mubr.f32.gmra.mxu0 %v2374
        %v2376 = vpop.f32.mrf.mxu0
        %v2377 = vadd.f32 %v2068, %v2376
        %v2378 = vpop.f32.mrf.mxu0
        %2379 = vmatprep.mubr.f32.mxu0 0.0
        %v2380 = vand.u32 %v1377, 4294901760
        %v2381 = vsub.f32 %v1377, %v2380
        %2382 = vmatmul.mubr.f32.gmra.mxu0 %v2381
        %v2383 = vpop.f32.mrf.mxu0
        %v2384 = vadd.f32 %v2074, %v2383
        %v2385 = vpop.f32.mrf.mxu0
        %2386 = vmatprep.mubr.f32.mxu0 0.0
        %v2387 = vand.u32 %v1378, 4294901760
        %v2388 = vsub.f32 %v1378, %v2387
        %2389 = vmatmul.mubr.f32.gmra.mxu0 %v2388
        %v2390 = vpop.f32.mrf.mxu0
        %v2391 = vadd.f32 %v2080, %v2390
        %v2392 = vpop.f32.mrf.mxu0
        %2393 = vmatprep.mubr.f32.mxu0 0.0
        %v2394 = vand.u32 %v1379, 4294901760
        %v2395 = vsub.f32 %v1379, %v2394
        %2396 = vmatmul.mubr.f32.gmra.mxu0 %v2395
        %v2397 = vpop.f32.mrf.mxu0
        %v2398 = vadd.f32 %v2086, %v2397
        %v2399 = vpop.f32.mrf.mxu0
        %2400 = vmatprep.mubr.f32.mxu0 0.0
        %v2401 = vand.u32 %v1380, 4294901760
        %v2402 = vsub.f32 %v1380, %v2401
        %2403 = vmatmul.mubr.f32.gmra.mxu0 %v2402
        %v2404 = vpop.f32.mrf.mxu0
        %v2405 = vadd.f32 %v2092, %v2404
        %v2406 = vpop.f32.mrf.mxu0
        %2407 = vmatprep.mubr.f32.mxu0 0.0
        %v2408 = vand.u32 %v1381, 4294901760
        %v2409 = vsub.f32 %v1381, %v2408
        %2410 = vmatmul.mubr.f32.gmra.mxu0 %v2409
        %v2411 = vpop.f32.mrf.mxu0
        %v2412 = vadd.f32 %v2098, %v2411
        %v2413 = vpop.f32.mrf.mxu0
        %2414 = vmatprep.mubr.f32.mxu0 0.0
        %v2415 = vand.u32 %v1382, 4294901760
        %v2416 = vsub.f32 %v1382, %v2415
        %2417 = vmatmul.mubr.f32.gmra.mxu0 %v2416
        %v2418 = vpop.f32.mrf.mxu0
        %v2419 = vadd.f32 %v2104, %v2418
        %v2420 = vpop.f32.mrf.mxu0
        %2421 = vmatprep.mubr.f32.mxu0 0.0
        %v2422 = vand.u32 %v1383, 4294901760
        %v2423 = vsub.f32 %v1383, %v2422
        %2424 = vmatmul.mubr.f32.gmra.mxu0 %v2423
        %v2425 = vpop.f32.mrf.mxu0
        %v2426 = vadd.f32 %v2110, %v2425
        %v2427 = vpop.f32.mrf.mxu0
        %2428 = vmatprep.mubr.f32.mxu0 0.0
        %v2429 = vand.u32 %v1384, 4294901760
        %v2430 = vsub.f32 %v1384, %v2429
        %2431 = vmatmul.mubr.f32.gmra.mxu0 %v2430
        %v2432 = vpop.f32.mrf.mxu0
        %v2433 = vadd.f32 %v2116, %v2432
        %v2434 = vpop.f32.mrf.mxu0
        %2435 = vmatprep.mubr.f32.mxu0 0.0
        %v2436 = vand.u32 %v1385, 4294901760
        %v2437 = vsub.f32 %v1385, %v2436
        %2438 = vmatmul.mubr.f32.gmra.mxu0 %v2437
        %v2439 = vpop.f32.mrf.mxu0
        %v2440 = vadd.f32 %v2122, %v2439
        %v2441 = vpop.f32.mrf.mxu0
        %2442 = vmatprep.mubr.f32.mxu0 0.0
        %v2443 = vand.u32 %v1386, 4294901760
        %v2444 = vsub.f32 %v1386, %v2443
        %2445 = vmatmul.mubr.f32.gmra.mxu0 %v2444
        %v2446 = vpop.f32.mrf.mxu0
        %v2447 = vadd.f32 %v2128, %v2446
        %v2448 = vpop.f32.mrf.mxu0
        %2449 = vmatprep.mubr.f32.mxu0 0.0
        %v2450 = vand.u32 %v1387, 4294901760
        %v2451 = vsub.f32 %v1387, %v2450
        %2452 = vmatmul.mubr.f32.gmra.mxu0 %v2451
        %v2453 = vpop.f32.mrf.mxu0
        %v2454 = vadd.f32 %v2134, %v2453
        %v2455 = vpop.f32.mrf.mxu0
        %2456 = vmatprep.mubr.f32.mxu0 0.0
        %v2457 = vand.u32 %v1388, 4294901760
        %v2458 = vsub.f32 %v1388, %v2457
        %2459 = vmatmul.mubr.f32.gmra.mxu0 %v2458
        %v2460 = vpop.f32.mrf.mxu0
        %v2461 = vadd.f32 %v2140, %v2460
        %v2462 = vpop.f32.mrf.mxu0
        %2463 = vdwg.mxu0
        %2464 = vmatprep.subr.mxu0 0.0
        %v2465 = vand.u32 %v1404, 4294901760
        %2466 = vmatpush1.msra.mxu0 %v2465
        %2467 = vmatprep.subr.mxu0 0.0
        %v2468 = vand.u32 %v1403, 4294901760
        %2469 = vmatpush1.msra.mxu0 %v2468
        %2470 = vmatprep.subr.mxu0 0.0
        %v2471 = vand.u32 %v1402, 4294901760
        %2472 = vmatpush1.msra.mxu0 %v2471
        %2473 = vmatprep.subr.mxu0 0.0
        %v2474 = vand.u32 %v1401, 4294901760
        %2475 = vmatpush1.msra.mxu0 %v2474
        %2476 = vmatprep.subr.mxu0 0.0
        %v2477 = vand.u32 %v1400, 4294901760
        %2478 = vmatpush1.msra.mxu0 %v2477
        %2479 = vmatprep.subr.mxu0 0.0
        %v2480 = vand.u32 %v1399, 4294901760
        %2481 = vmatpush1.msra.mxu0 %v2480
        %2482 = vmatprep.subr.mxu0 0.0
        %v2483 = vand.u32 %v1398, 4294901760
        %2484 = vmatpush1.msra.mxu0 %v2483
        %2485 = vmatprep.subr.mxu0 0.0
        %v2486 = vand.u32 %v1397, 4294901760
        %2487 = vmatpush1.msra.mxu0 %v2486
        %2488 = vmatprep.subr.mxu0 0.0
        %v2489 = vand.u32 %v1396, 4294901760
        %2490 = vmatpush1.msra.mxu0 %v2489
        %2491 = vmatprep.subr.mxu0 0.0
        %v2492 = vand.u32 %v1395, 4294901760
        %2493 = vmatpush1.msra.mxu0 %v2492
        %2494 = vmatprep.subr.mxu0 0.0
        %v2495 = vand.u32 %v1394, 4294901760
        %2496 = vmatpush1.msra.mxu0 %v2495
        %2497 = vmatprep.subr.mxu0 0.0
        %v2498 = vand.u32 %v1393, 4294901760
        %2499 = vmatpush1.msra.mxu0 %v2498
        %2500 = vmatprep.subr.mxu0 0.0
        %v2501 = vand.u32 %v1392, 4294901760
        %2502 = vmatpush1.msra.mxu0 %v2501
        %2503 = vmatprep.subr.mxu0 0.0
        %v2504 = vand.u32 %v1391, 4294901760
        %2505 = vmatpush1.msra.mxu0 %v2504
        %2506 = vmatprep.subr.mxu0 0.0
        %v2507 = vand.u32 %v1390, 4294901760
        %2508 = vmatpush1.msra.mxu0 %v2507
        %2509 = vmatprep.subr.mxu0 0.0
        %v2510 = vand.u32 %v1389, 4294901760
        %2511 = vmatpush1.msra.mxu0 %v2510
        %2512 = vmatprep.subr.mxu0 0.0
        %2513 = vmatpush2.msra.mxu0 0.0
        %2514 = vmatprep.subr.mxu0 0.0
        %2515 = vmatpush2.msra.mxu0 0.0
        %2516 = vmatprep.subr.mxu0 0.0
        %2517 = vmatpush2.msra.mxu0 0.0
        %2518 = vmatprep.subr.mxu0 0.0
        %2519 = vmatpush2.msra.mxu0 0.0
        %2520 = vmatprep.subr.mxu0 0.0
        %2521 = vmatpush2.msra.mxu0 0.0
        %2522 = vmatprep.subr.mxu0 0.0
        %2523 = vmatpush2.msra.mxu0 0.0
        %2524 = vmatprep.subr.mxu0 0.0
        %2525 = vmatpush2.msra.mxu0 0.0
        %2526 = vmatprep.subr.mxu0 0.0
        %2527 = vmatpush2.msra.mxu0 0.0
        %2528 = vmatprep.subr.mxu0 0.0
        %2529 = vmatpush2.msra.mxu0 0.0
        %2530 = vmatprep.subr.mxu0 0.0
        %2531 = vmatpush2.msra.mxu0 0.0
        %2532 = vmatprep.subr.mxu0 0.0
        %2533 = vmatpush2.msra.mxu0 0.0
        %2534 = vmatprep.subr.mxu0 0.0
        %2535 = vmatpush2.msra.mxu0 0.0
        %2536 = vmatprep.subr.mxu0 0.0
        %2537 = vmatpush2.msra.mxu0 0.0
        %2538 = vmatprep.subr.mxu0 0.0
        %2539 = vmatpush2.msra.mxu0 0.0
        %2540 = vmatprep.subr.mxu0 0.0
        %2541 = vmatpush2.msra.mxu0 0.0
        %2542 = vmatprep.subr.mxu0 0.0
        %2543 = vmatpush2.msra.mxu0 0.0
        %2544 = vmatprep.mubr.f32.mxu0 0.0
        %v2545 = vand.u32 %v1357, 4294901760
        %v2546 = vsub.f32 %v1357, %v2545
        %v2547 = vand.u32 %v2546, 4294901760
        %2548 = vmatmul.mubr.f32.gmra.mxu0 %v2547
        %v2549 = vpop.f32.mrf.mxu0
        %v2550 = vadd.f32 %v2244, %v2549
        %v2551 = vpop.f32.mrf.mxu0
        %2552 = vmatprep.mubr.f32.mxu0 0.0
        %v2553 = vand.u32 %v1358, 4294901760
        %v2554 = vsub.f32 %v1358, %v2553
        %v2555 = vand.u32 %v2554, 4294901760
        %2556 = vmatmul.mubr.f32.gmra.mxu0 %v2555
        %v2557 = vpop.f32.mrf.mxu0
        %v2558 = vadd.f32 %v2251, %v2557
        %v2559 = vpop.f32.mrf.mxu0
        %2560 = vmatprep.mubr.f32.mxu0 0.0
        %v2561 = vand.u32 %v1359, 4294901760
        %v2562 = vsub.f32 %v1359, %v2561
        %v2563 = vand.u32 %v2562, 4294901760
        %2564 = vmatmul.mubr.f32.gmra.mxu0 %v2563
        %v2565 = vpop.f32.mrf.mxu0
        %v2566 = vadd.f32 %v2258, %v2565
        %v2567 = vpop.f32.mrf.mxu0
        %2568 = vmatprep.mubr.f32.mxu0 0.0
        %v2569 = vand.u32 %v1360, 4294901760
        %v2570 = vsub.f32 %v1360, %v2569
        %v2571 = vand.u32 %v2570, 4294901760
        %2572 = vmatmul.mubr.f32.gmra.mxu0 %v2571
        %v2573 = vpop.f32.mrf.mxu0
        %v2574 = vadd.f32 %v2265, %v2573
        %v2575 = vpop.f32.mrf.mxu0
        %2576 = vmatprep.mubr.f32.mxu0 0.0
        %v2577 = vand.u32 %v1361, 4294901760
        %v2578 = vsub.f32 %v1361, %v2577
        %v2579 = vand.u32 %v2578, 4294901760
        %2580 = vmatmul.mubr.f32.gmra.mxu0 %v2579
        %v2581 = vpop.f32.mrf.mxu0
        %v2582 = vadd.f32 %v2272, %v2581
        %v2583 = vpop.f32.mrf.mxu0
        %2584 = vmatprep.mubr.f32.mxu0 0.0
        %v2585 = vand.u32 %v1362, 4294901760
        %v2586 = vsub.f32 %v1362, %v2585
        %v2587 = vand.u32 %v2586, 4294901760
        %2588 = vmatmul.mubr.f32.gmra.mxu0 %v2587
        %v2589 = vpop.f32.mrf.mxu0
        %v2590 = vadd.f32 %v2279, %v2589
        %v2591 = vpop.f32.mrf.mxu0
        %2592 = vmatprep.mubr.f32.mxu0 0.0
        %v2593 = vand.u32 %v1363, 4294901760
        %v2594 = vsub.f32 %v1363, %v2593
        %v2595 = vand.u32 %v2594, 4294901760
        %2596 = vmatmul.mubr.f32.gmra.mxu0 %v2595
        %v2597 = vpop.f32.mrf.mxu0
        %v2598 = vadd.f32 %v2286, %v2597
        %v2599 = vpop.f32.mrf.mxu0
        %2600 = vmatprep.mubr.f32.mxu0 0.0
        %v2601 = vand.u32 %v1364, 4294901760
        %v2602 = vsub.f32 %v1364, %v2601
        %v2603 = vand.u32 %v2602, 4294901760
        %2604 = vmatmul.mubr.f32.gmra.mxu0 %v2603
        %v2605 = vpop.f32.mrf.mxu0
        %v2606 = vadd.f32 %v2293, %v2605
        %v2607 = vpop.f32.mrf.mxu0
        %2608 = vmatprep.mubr.f32.mxu0 0.0
        %v2609 = vand.u32 %v1365, 4294901760
        %v2610 = vsub.f32 %v1365, %v2609
        %v2611 = vand.u32 %v2610, 4294901760
        %2612 = vmatmul.mubr.f32.gmra.mxu0 %v2611
        %v2613 = vpop.f32.mrf.mxu0
        %v2614 = vadd.f32 %v2300, %v2613
        %v2615 = vpop.f32.mrf.mxu0
        %2616 = vmatprep.mubr.f32.mxu0 0.0
        %v2617 = vand.u32 %v1366, 4294901760
        %v2618 = vsub.f32 %v1366, %v2617
        %v2619 = vand.u32 %v2618, 4294901760
        %2620 = vmatmul.mubr.f32.gmra.mxu0 %v2619
        %v2621 = vpop.f32.mrf.mxu0
        %v2622 = vadd.f32 %v2307, %v2621
        %v2623 = vpop.f32.mrf.mxu0
        %2624 = vmatprep.mubr.f32.mxu0 0.0
        %v2625 = vand.u32 %v1367, 4294901760
        %v2626 = vsub.f32 %v1367, %v2625
        %v2627 = vand.u32 %v2626, 4294901760
        %2628 = vmatmul.mubr.f32.gmra.mxu0 %v2627
        %v2629 = vpop.f32.mrf.mxu0
        %v2630 = vadd.f32 %v2314, %v2629
        %v2631 = vpop.f32.mrf.mxu0
        %2632 = vmatprep.mubr.f32.mxu0 0.0
        %v2633 = vand.u32 %v1368, 4294901760
        %v2634 = vsub.f32 %v1368, %v2633
        %v2635 = vand.u32 %v2634, 4294901760
        %2636 = vmatmul.mubr.f32.gmra.mxu0 %v2635
        %v2637 = vpop.f32.mrf.mxu0
        %v2638 = vadd.f32 %v2321, %v2637
        %v2639 = vpop.f32.mrf.mxu0
        %2640 = vmatprep.mubr.f32.mxu0 0.0
        %v2641 = vand.u32 %v1369, 4294901760
        %v2642 = vsub.f32 %v1369, %v2641
        %v2643 = vand.u32 %v2642, 4294901760
        %2644 = vmatmul.mubr.f32.gmra.mxu0 %v2643
        %v2645 = vpop.f32.mrf.mxu0
        %v2646 = vadd.f32 %v2328, %v2645
        %v2647 = vpop.f32.mrf.mxu0
        %2648 = vmatprep.mubr.f32.mxu0 0.0
        %v2649 = vand.u32 %v1370, 4294901760
        %v2650 = vsub.f32 %v1370, %v2649
        %v2651 = vand.u32 %v2650, 4294901760
        %2652 = vmatmul.mubr.f32.gmra.mxu0 %v2651
        %v2653 = vpop.f32.mrf.mxu0
        %v2654 = vadd.f32 %v2335, %v2653
        %v2655 = vpop.f32.mrf.mxu0
        %2656 = vmatprep.mubr.f32.mxu0 0.0
        %v2657 = vand.u32 %v1371, 4294901760
        %v2658 = vsub.f32 %v1371, %v2657
        %v2659 = vand.u32 %v2658, 4294901760
        %2660 = vmatmul.mubr.f32.gmra.mxu0 %v2659
        %v2661 = vpop.f32.mrf.mxu0
        %v2662 = vadd.f32 %v2342, %v2661
        %v2663 = vpop.f32.mrf.mxu0
        %2664 = vmatprep.mubr.f32.mxu0 0.0
        %v2665 = vand.u32 %v1372, 4294901760
        %v2666 = vsub.f32 %v1372, %v2665
        %v2667 = vand.u32 %v2666, 4294901760
        %2668 = vmatmul.mubr.f32.gmra.mxu0 %v2667
        %v2669 = vpop.f32.mrf.mxu0
        %v2670 = vadd.f32 %v2349, %v2669
        %v2671 = vpop.f32.mrf.mxu0
        %2672 = vmatprep.mubr.f32.mxu0 0.0
        %v2673 = vand.u32 %v1373, 4294901760
        %v2674 = vsub.f32 %v1373, %v2673
        %v2675 = vand.u32 %v2674, 4294901760
        %2676 = vmatmul.mubr.f32.gmra.mxu0 %v2675
        %v2677 = vpop.f32.mrf.mxu0
        %v2678 = vadd.f32 %v2356, %v2677
        %v2679 = vpop.f32.mrf.mxu0
        %2680 = vmatprep.mubr.f32.mxu0 0.0
        %v2681 = vand.u32 %v1374, 4294901760
        %v2682 = vsub.f32 %v1374, %v2681
        %v2683 = vand.u32 %v2682, 4294901760
        %2684 = vmatmul.mubr.f32.gmra.mxu0 %v2683
        %v2685 = vpop.f32.mrf.mxu0
        %v2686 = vadd.f32 %v2363, %v2685
        %v2687 = vpop.f32.mrf.mxu0
        %2688 = vmatprep.mubr.f32.mxu0 0.0
        %v2689 = vand.u32 %v1375, 4294901760
        %v2690 = vsub.f32 %v1375, %v2689
        %v2691 = vand.u32 %v2690, 4294901760
        %2692 = vmatmul.mubr.f32.gmra.mxu0 %v2691
        %v2693 = vpop.f32.mrf.mxu0
        %v2694 = vadd.f32 %v2370, %v2693
        %v2695 = vpop.f32.mrf.mxu0
        %2696 = vmatprep.mubr.f32.mxu0 0.0
        %v2697 = vand.u32 %v1376, 4294901760
        %v2698 = vsub.f32 %v1376, %v2697
        %v2699 = vand.u32 %v2698, 4294901760
        %2700 = vmatmul.mubr.f32.gmra.mxu0 %v2699
        %v2701 = vpop.f32.mrf.mxu0
        %v2702 = vadd.f32 %v2377, %v2701
        %v2703 = vpop.f32.mrf.mxu0
        %2704 = vmatprep.mubr.f32.mxu0 0.0
        %v2705 = vand.u32 %v1377, 4294901760
        %v2706 = vsub.f32 %v1377, %v2705
        %v2707 = vand.u32 %v2706, 4294901760
        %2708 = vmatmul.mubr.f32.gmra.mxu0 %v2707
        %v2709 = vpop.f32.mrf.mxu0
        %v2710 = vadd.f32 %v2384, %v2709
        %v2711 = vpop.f32.mrf.mxu0
        %2712 = vmatprep.mubr.f32.mxu0 0.0
        %v2713 = vand.u32 %v1378, 4294901760
        %v2714 = vsub.f32 %v1378, %v2713
        %v2715 = vand.u32 %v2714, 4294901760
        %2716 = vmatmul.mubr.f32.gmra.mxu0 %v2715
        %v2717 = vpop.f32.mrf.mxu0
        %v2718 = vadd.f32 %v2391, %v2717
        %v2719 = vpop.f32.mrf.mxu0
        %2720 = vmatprep.mubr.f32.mxu0 0.0
        %v2721 = vand.u32 %v1379, 4294901760
        %v2722 = vsub.f32 %v1379, %v2721
        %v2723 = vand.u32 %v2722, 4294901760
        %2724 = vmatmul.mubr.f32.gmra.mxu0 %v2723
        %v2725 = vpop.f32.mrf.mxu0
        %v2726 = vadd.f32 %v2398, %v2725
        %v2727 = vpop.f32.mrf.mxu0
        %2728 = vmatprep.mubr.f32.mxu0 0.0
        %v2729 = vand.u32 %v1380, 4294901760
        %v2730 = vsub.f32 %v1380, %v2729
        %v2731 = vand.u32 %v2730, 4294901760
        %2732 = vmatmul.mubr.f32.gmra.mxu0 %v2731
        %v2733 = vpop.f32.mrf.mxu0
        %v2734 = vadd.f32 %v2405, %v2733
        %v2735 = vpop.f32.mrf.mxu0
        %2736 = vmatprep.mubr.f32.mxu0 0.0
        %v2737 = vand.u32 %v1381, 4294901760
        %v2738 = vsub.f32 %v1381, %v2737
        %v2739 = vand.u32 %v2738, 4294901760
        %2740 = vmatmul.mubr.f32.gmra.mxu0 %v2739
        %v2741 = vpop.f32.mrf.mxu0
        %v2742 = vadd.f32 %v2412, %v2741
        %v2743 = vpop.f32.mrf.mxu0
        %2744 = vmatprep.mubr.f32.mxu0 0.0
        %v2745 = vand.u32 %v1382, 4294901760
        %v2746 = vsub.f32 %v1382, %v2745
        %v2747 = vand.u32 %v2746, 4294901760
        %2748 = vmatmul.mubr.f32.gmra.mxu0 %v2747
        %v2749 = vpop.f32.mrf.mxu0
        %v2750 = vadd.f32 %v2419, %v2749
        %v2751 = vpop.f32.mrf.mxu0
        %2752 = vmatprep.mubr.f32.mxu0 0.0
        %v2753 = vand.u32 %v1383, 4294901760
        %v2754 = vsub.f32 %v1383, %v2753
        %v2755 = vand.u32 %v2754, 4294901760
        %2756 = vmatmul.mubr.f32.gmra.mxu0 %v2755
        %v2757 = vpop.f32.mrf.mxu0
        %v2758 = vadd.f32 %v2426, %v2757
        %v2759 = vpop.f32.mrf.mxu0
        %2760 = vmatprep.mubr.f32.mxu0 0.0
        %v2761 = vand.u32 %v1384, 4294901760
        %v2762 = vsub.f32 %v1384, %v2761
        %v2763 = vand.u32 %v2762, 4294901760
        %2764 = vmatmul.mubr.f32.gmra.mxu0 %v2763
        %v2765 = vpop.f32.mrf.mxu0
        %v2766 = vadd.f32 %v2433, %v2765
        %v2767 = vpop.f32.mrf.mxu0
        %2768 = vmatprep.mubr.f32.mxu0 0.0
        %v2769 = vand.u32 %v1385, 4294901760
        %v2770 = vsub.f32 %v1385, %v2769
        %v2771 = vand.u32 %v2770, 4294901760
        %2772 = vmatmul.mubr.f32.gmra.mxu0 %v2771
        %v2773 = vpop.f32.mrf.mxu0
        %v2774 = vadd.f32 %v2440, %v2773
        %v2775 = vpop.f32.mrf.mxu0
        %2776 = vmatprep.mubr.f32.mxu0 0.0
        %v2777 = vand.u32 %v1386, 4294901760
        %v2778 = vsub.f32 %v1386, %v2777
        %v2779 = vand.u32 %v2778, 4294901760
        %2780 = vmatmul.mubr.f32.gmra.mxu0 %v2779
        %v2781 = vpop.f32.mrf.mxu0
        %v2782 = vadd.f32 %v2447, %v2781
        %v2783 = vpop.f32.mrf.mxu0
        %2784 = vmatprep.mubr.f32.mxu0 0.0
        %v2785 = vand.u32 %v1387, 4294901760
        %v2786 = vsub.f32 %v1387, %v2785
        %v2787 = vand.u32 %v2786, 4294901760
        %2788 = vmatmul.mubr.f32.gmra.mxu0 %v2787
        %v2789 = vpop.f32.mrf.mxu0
        %v2790 = vadd.f32 %v2454, %v2789
        %v2791 = vpop.f32.mrf.mxu0
        %2792 = vmatprep.mubr.f32.mxu0 0.0
        %v2793 = vand.u32 %v1388, 4294901760
        %v2794 = vsub.f32 %v1388, %v2793
        %v2795 = vand.u32 %v2794, 4294901760
        %2796 = vmatmul.mubr.f32.gmra.mxu0 %v2795
        %v2797 = vpop.f32.mrf.mxu0
        %v2798 = vadd.f32 %v2461, %v2797
        %v2799 = vpop.f32.mrf.mxu0
        %2800 = vdwg.mxu0
        %2801 = vmatprep.subr.mxu0 0.0
        %v2802 = vand.u32 %v1404, 4294901760
        %v2803 = vsub.f32 %v1404, %v2802
        %v2804 = vand.u32 %v2803, 4294901760
        %2805 = vmatpush1.msra.mxu0 %v2804
        %2806 = vmatprep.subr.mxu0 0.0
        %v2807 = vand.u32 %v1403, 4294901760
        %v2808 = vsub.f32 %v1403, %v2807
        %v2809 = vand.u32 %v2808, 4294901760
        %2810 = vmatpush1.msra.mxu0 %v2809
        %2811 = vmatprep.subr.mxu0 0.0
        %v2812 = vand.u32 %v1402, 4294901760
        %v2813 = vsub.f32 %v1402, %v2812
        %v2814 = vand.u32 %v2813, 4294901760
        %2815 = vmatpush1.msra.mxu0 %v2814
        %2816 = vmatprep.subr.mxu0 0.0
        %v2817 = vand.u32 %v1401, 4294901760
        %v2818 = vsub.f32 %v1401, %v2817
        %v2819 = vand.u32 %v2818, 4294901760
        %2820 = vmatpush1.msra.mxu0 %v2819
        %2821 = vmatprep.subr.mxu0 0.0
        %v2822 = vand.u32 %v1400, 4294901760
        %v2823 = vsub.f32 %v1400, %v2822
        %v2824 = vand.u32 %v2823, 4294901760
        %2825 = vmatpush1.msra.mxu0 %v2824
        %2826 = vmatprep.subr.mxu0 0.0
        %v2827 = vand.u32 %v1399, 4294901760
        %v2828 = vsub.f32 %v1399, %v2827
        %v2829 = vand.u32 %v2828, 4294901760
        %2830 = vmatpush1.msra.mxu0 %v2829
        %2831 = vmatprep.subr.mxu0 0.0
        %v2832 = vand.u32 %v1398, 4294901760
        %v2833 = vsub.f32 %v1398, %v2832
        %v2834 = vand.u32 %v2833, 4294901760
        %2835 = vmatpush1.msra.mxu0 %v2834
        %2836 = vmatprep.subr.mxu0 0.0
        %v2837 = vand.u32 %v1397, 4294901760
        %v2838 = vsub.f32 %v1397, %v2837
        %v2839 = vand.u32 %v2838, 4294901760
        %2840 = vmatpush1.msra.mxu0 %v2839
        %2841 = vmatprep.subr.mxu0 0.0
        %v2842 = vand.u32 %v1396, 4294901760
        %v2843 = vsub.f32 %v1396, %v2842
        %v2844 = vand.u32 %v2843, 4294901760
        %2845 = vmatpush1.msra.mxu0 %v2844
        %2846 = vmatprep.subr.mxu0 0.0
        %v2847 = vand.u32 %v1395, 4294901760
        %v2848 = vsub.f32 %v1395, %v2847
        %v2849 = vand.u32 %v2848, 4294901760
        %2850 = vmatpush1.msra.mxu0 %v2849
        %2851 = vmatprep.subr.mxu0 0.0
        %v2852 = vand.u32 %v1394, 4294901760
        %v2853 = vsub.f32 %v1394, %v2852
        %v2854 = vand.u32 %v2853, 4294901760
        %2855 = vmatpush1.msra.mxu0 %v2854
        %2856 = vmatprep.subr.mxu0 0.0
        %v2857 = vand.u32 %v1393, 4294901760
        %v2858 = vsub.f32 %v1393, %v2857
        %v2859 = vand.u32 %v2858, 4294901760
        %2860 = vmatpush1.msra.mxu0 %v2859
        %2861 = vmatprep.subr.mxu0 0.0
        %v2862 = vand.u32 %v1392, 4294901760
        %v2863 = vsub.f32 %v1392, %v2862
        %v2864 = vand.u32 %v2863, 4294901760
        %2865 = vmatpush1.msra.mxu0 %v2864
        %2866 = vmatprep.subr.mxu0 0.0
        %v2867 = vand.u32 %v1391, 4294901760
        %v2868 = vsub.f32 %v1391, %v2867
        %v2869 = vand.u32 %v2868, 4294901760
        %2870 = vmatpush1.msra.mxu0 %v2869
        %2871 = vmatprep.subr.mxu0 0.0
        %v2872 = vand.u32 %v1390, 4294901760
        %v2873 = vsub.f32 %v1390, %v2872
        %v2874 = vand.u32 %v2873, 4294901760
        %2875 = vmatpush1.msra.mxu0 %v2874
        %2876 = vmatprep.subr.mxu0 0.0
        %v2877 = vand.u32 %v1389, 4294901760
        %v2878 = vsub.f32 %v1389, %v2877
        %v2879 = vand.u32 %v2878, 4294901760
        %2880 = vmatpush1.msra.mxu0 %v2879
        %2881 = vmatprep.subr.mxu0 0.0
        %2882 = vmatpush2.msra.mxu0 0.0
        %2883 = vmatprep.subr.mxu0 0.0
        %2884 = vmatpush2.msra.mxu0 0.0
        %2885 = vmatprep.subr.mxu0 0.0
        %2886 = vmatpush2.msra.mxu0 0.0
        %2887 = vmatprep.subr.mxu0 0.0
        %2888 = vmatpush2.msra.mxu0 0.0
        %2889 = vmatprep.subr.mxu0 0.0
        %2890 = vmatpush2.msra.mxu0 0.0
        %2891 = vmatprep.subr.mxu0 0.0
        %2892 = vmatpush2.msra.mxu0 0.0
        %2893 = vmatprep.subr.mxu0 0.0
        %2894 = vmatpush2.msra.mxu0 0.0
        %2895 = vmatprep.subr.mxu0 0.0
        %2896 = vmatpush2.msra.mxu0 0.0
        %2897 = vmatprep.subr.mxu0 0.0
        %2898 = vmatpush2.msra.mxu0 0.0
        %2899 = vmatprep.subr.mxu0 0.0
        %2900 = vmatpush2.msra.mxu0 0.0
        %2901 = vmatprep.subr.mxu0 0.0
        %2902 = vmatpush2.msra.mxu0 0.0
        %2903 = vmatprep.subr.mxu0 0.0
        %2904 = vmatpush2.msra.mxu0 0.0
        %2905 = vmatprep.subr.mxu0 0.0
        %2906 = vmatpush2.msra.mxu0 0.0
        %2907 = vmatprep.subr.mxu0 0.0
        %2908 = vmatpush2.msra.mxu0 0.0
        %2909 = vmatprep.subr.mxu0 0.0
        %2910 = vmatpush2.msra.mxu0 0.0
        %2911 = vmatprep.subr.mxu0 0.0
        %2912 = vmatpush2.msra.mxu0 0.0
        %2913 = vmatprep.mubr.f32.mxu0 0.0
        %v2914 = vand.u32 %v1357, 4294901760
        %2915 = vmatmul.mubr.f32.gmra.mxu0 %v2914
        %v2916 = vpop.f32.mrf.mxu0
        %v2917 = vadd.f32 %v2550, %v2916
        %v2918 = vpop.f32.mrf.mxu0
        %2919 = vmatprep.mubr.f32.mxu0 0.0
        %v2920 = vand.u32 %v1358, 4294901760
        %2921 = vmatmul.mubr.f32.gmra.mxu0 %v2920
        %v2922 = vpop.f32.mrf.mxu0
        %v2923 = vadd.f32 %v2558, %v2922
        %v2924 = vpop.f32.mrf.mxu0
        %2925 = vmatprep.mubr.f32.mxu0 0.0
        %v2926 = vand.u32 %v1359, 4294901760
        %2927 = vmatmul.mubr.f32.gmra.mxu0 %v2926
        %v2928 = vpop.f32.mrf.mxu0
        %v2929 = vadd.f32 %v2566, %v2928
        %v2930 = vpop.f32.mrf.mxu0
        %2931 = vmatprep.mubr.f32.mxu0 0.0
        %v2932 = vand.u32 %v1360, 4294901760
        %2933 = vmatmul.mubr.f32.gmra.mxu0 %v2932
        %v2934 = vpop.f32.mrf.mxu0
        %v2935 = vadd.f32 %v2574, %v2934
        %v2936 = vpop.f32.mrf.mxu0
        %2937 = vmatprep.mubr.f32.mxu0 0.0
        %v2938 = vand.u32 %v1361, 4294901760
        %2939 = vmatmul.mubr.f32.gmra.mxu0 %v2938
        %v2940 = vpop.f32.mrf.mxu0
        %v2941 = vadd.f32 %v2582, %v2940
        %v2942 = vpop.f32.mrf.mxu0
        %2943 = vmatprep.mubr.f32.mxu0 0.0
        %v2944 = vand.u32 %v1362, 4294901760
        %2945 = vmatmul.mubr.f32.gmra.mxu0 %v2944
        %v2946 = vpop.f32.mrf.mxu0
        %v2947 = vadd.f32 %v2590, %v2946
        %v2948 = vpop.f32.mrf.mxu0
        %2949 = vmatprep.mubr.f32.mxu0 0.0
        %v2950 = vand.u32 %v1363, 4294901760
        %2951 = vmatmul.mubr.f32.gmra.mxu0 %v2950
        %v2952 = vpop.f32.mrf.mxu0
        %v2953 = vadd.f32 %v2598, %v2952
        %v2954 = vpop.f32.mrf.mxu0
        %2955 = vmatprep.mubr.f32.mxu0 0.0
        %v2956 = vand.u32 %v1364, 4294901760
        %2957 = vmatmul.mubr.f32.gmra.mxu0 %v2956
        %v2958 = vpop.f32.mrf.mxu0
        %v2959 = vadd.f32 %v2606, %v2958
        %v2960 = vpop.f32.mrf.mxu0
        %2961 = vmatprep.mubr.f32.mxu0 0.0
        %v2962 = vand.u32 %v1365, 4294901760
        %2963 = vmatmul.mubr.f32.gmra.mxu0 %v2962
        %v2964 = vpop.f32.mrf.mxu0
        %v2965 = vadd.f32 %v2614, %v2964
        %v2966 = vpop.f32.mrf.mxu0
        %2967 = vmatprep.mubr.f32.mxu0 0.0
        %v2968 = vand.u32 %v1366, 4294901760
        %2969 = vmatmul.mubr.f32.gmra.mxu0 %v2968
        %v2970 = vpop.f32.mrf.mxu0
        %v2971 = vadd.f32 %v2622, %v2970
        %v2972 = vpop.f32.mrf.mxu0
        %2973 = vmatprep.mubr.f32.mxu0 0.0
        %v2974 = vand.u32 %v1367, 4294901760
        %2975 = vmatmul.mubr.f32.gmra.mxu0 %v2974
        %v2976 = vpop.f32.mrf.mxu0
        %v2977 = vadd.f32 %v2630, %v2976
        %v2978 = vpop.f32.mrf.mxu0
        %2979 = vmatprep.mubr.f32.mxu0 0.0
        %v2980 = vand.u32 %v1368, 4294901760
        %2981 = vmatmul.mubr.f32.gmra.mxu0 %v2980
        %v2982 = vpop.f32.mrf.mxu0
        %v2983 = vadd.f32 %v2638, %v2982
        %v2984 = vpop.f32.mrf.mxu0
        %2985 = vmatprep.mubr.f32.mxu0 0.0
        %v2986 = vand.u32 %v1369, 4294901760
        %2987 = vmatmul.mubr.f32.gmra.mxu0 %v2986
        %v2988 = vpop.f32.mrf.mxu0
        %v2989 = vadd.f32 %v2646, %v2988
        %v2990 = vpop.f32.mrf.mxu0
        %2991 = vmatprep.mubr.f32.mxu0 0.0
        %v2992 = vand.u32 %v1370, 4294901760
        %2993 = vmatmul.mubr.f32.gmra.mxu0 %v2992
        %v2994 = vpop.f32.mrf.mxu0
        %v2995 = vadd.f32 %v2654, %v2994
        %v2996 = vpop.f32.mrf.mxu0
        %2997 = vmatprep.mubr.f32.mxu0 0.0
        %v2998 = vand.u32 %v1371, 4294901760
        %2999 = vmatmul.mubr.f32.gmra.mxu0 %v2998
        %v3000 = vpop.f32.mrf.mxu0
        %v3001 = vadd.f32 %v2662, %v3000
        %v3002 = vpop.f32.mrf.mxu0
        %3003 = vmatprep.mubr.f32.mxu0 0.0
        %v3004 = vand.u32 %v1372, 4294901760
        %3005 = vmatmul.mubr.f32.gmra.mxu0 %v3004
        %v3006 = vpop.f32.mrf.mxu0
        %v3007 = vadd.f32 %v2670, %v3006
        %v3008 = vpop.f32.mrf.mxu0
        %3009 = vmatprep.mubr.f32.mxu0 0.0
        %v3010 = vand.u32 %v1373, 4294901760
        %3011 = vmatmul.mubr.f32.gmra.mxu0 %v3010
        %v3012 = vpop.f32.mrf.mxu0
        %v3013 = vadd.f32 %v2678, %v3012
        %v3014 = vpop.f32.mrf.mxu0
        %3015 = vmatprep.mubr.f32.mxu0 0.0
        %v3016 = vand.u32 %v1374, 4294901760
        %3017 = vmatmul.mubr.f32.gmra.mxu0 %v3016
        %v3018 = vpop.f32.mrf.mxu0
        %v3019 = vadd.f32 %v2686, %v3018
        %v3020 = vpop.f32.mrf.mxu0
        %3021 = vmatprep.mubr.f32.mxu0 0.0
        %v3022 = vand.u32 %v1375, 4294901760
        %3023 = vmatmul.mubr.f32.gmra.mxu0 %v3022
        %v3024 = vpop.f32.mrf.mxu0
        %v3025 = vadd.f32 %v2694, %v3024
        %v3026 = vpop.f32.mrf.mxu0
        %3027 = vmatprep.mubr.f32.mxu0 0.0
        %v3028 = vand.u32 %v1376, 4294901760
        %3029 = vmatmul.mubr.f32.gmra.mxu0 %v3028
        %v3030 = vpop.f32.mrf.mxu0
        %v3031 = vadd.f32 %v2702, %v3030
        %v3032 = vpop.f32.mrf.mxu0
        %3033 = vmatprep.mubr.f32.mxu0 0.0
        %v3034 = vand.u32 %v1377, 4294901760
        %3035 = vmatmul.mubr.f32.gmra.mxu0 %v3034
        %v3036 = vpop.f32.mrf.mxu0
        %v3037 = vadd.f32 %v2710, %v3036
        %v3038 = vpop.f32.mrf.mxu0
        %3039 = vmatprep.mubr.f32.mxu0 0.0
        %v3040 = vand.u32 %v1378, 4294901760
        %3041 = vmatmul.mubr.f32.gmra.mxu0 %v3040
        %v3042 = vpop.f32.mrf.mxu0
        %v3043 = vadd.f32 %v2718, %v3042
        %v3044 = vpop.f32.mrf.mxu0
        %3045 = vmatprep.mubr.f32.mxu0 0.0
        %v3046 = vand.u32 %v1379, 4294901760
        %3047 = vmatmul.mubr.f32.gmra.mxu0 %v3046
        %v3048 = vpop.f32.mrf.mxu0
        %v3049 = vadd.f32 %v2726, %v3048
        %v3050 = vpop.f32.mrf.mxu0
        %3051 = vmatprep.mubr.f32.mxu0 0.0
        %v3052 = vand.u32 %v1380, 4294901760
        %3053 = vmatmul.mubr.f32.gmra.mxu0 %v3052
        %v3054 = vpop.f32.mrf.mxu0
        %v3055 = vadd.f32 %v2734, %v3054
        %v3056 = vpop.f32.mrf.mxu0
        %3057 = vmatprep.mubr.f32.mxu0 0.0
        %v3058 = vand.u32 %v1381, 4294901760
        %3059 = vmatmul.mubr.f32.gmra.mxu0 %v3058
        %v3060 = vpop.f32.mrf.mxu0
        %v3061 = vadd.f32 %v2742, %v3060
        %v3062 = vpop.f32.mrf.mxu0
        %3063 = vmatprep.mubr.f32.mxu0 0.0
        %v3064 = vand.u32 %v1382, 4294901760
        %3065 = vmatmul.mubr.f32.gmra.mxu0 %v3064
        %v3066 = vpop.f32.mrf.mxu0
        %v3067 = vadd.f32 %v2750, %v3066
        %v3068 = vpop.f32.mrf.mxu0
        %3069 = vmatprep.mubr.f32.mxu0 0.0
        %v3070 = vand.u32 %v1383, 4294901760
        %3071 = vmatmul.mubr.f32.gmra.mxu0 %v3070
        %v3072 = vpop.f32.mrf.mxu0
        %v3073 = vadd.f32 %v2758, %v3072
        %v3074 = vpop.f32.mrf.mxu0
        %3075 = vmatprep.mubr.f32.mxu0 0.0
        %v3076 = vand.u32 %v1384, 4294901760
        %3077 = vmatmul.mubr.f32.gmra.mxu0 %v3076
        %v3078 = vpop.f32.mrf.mxu0
        %v3079 = vadd.f32 %v2766, %v3078
        %v3080 = vpop.f32.mrf.mxu0
        %3081 = vmatprep.mubr.f32.mxu0 0.0
        %v3082 = vand.u32 %v1385, 4294901760
        %3083 = vmatmul.mubr.f32.gmra.mxu0 %v3082
        %v3084 = vpop.f32.mrf.mxu0
        %v3085 = vadd.f32 %v2774, %v3084
        %v3086 = vpop.f32.mrf.mxu0
        %3087 = vmatprep.mubr.f32.mxu0 0.0
        %v3088 = vand.u32 %v1386, 4294901760
        %3089 = vmatmul.mubr.f32.gmra.mxu0 %v3088
        %v3090 = vpop.f32.mrf.mxu0
        %v3091 = vadd.f32 %v2782, %v3090
        %v3092 = vpop.f32.mrf.mxu0
        %3093 = vmatprep.mubr.f32.mxu0 0.0
        %v3094 = vand.u32 %v1387, 4294901760
        %3095 = vmatmul.mubr.f32.gmra.mxu0 %v3094
        %v3096 = vpop.f32.mrf.mxu0
        %v3097 = vadd.f32 %v2790, %v3096
        %v3098 = vpop.f32.mrf.mxu0
        %3099 = vmatprep.mubr.f32.mxu0 0.0
        %v3100 = vand.u32 %v1388, 4294901760
        %3101 = vmatmul.mubr.f32.gmra.mxu0 %v3100
        %v3102 = vpop.f32.mrf.mxu0
        %v3103 = vadd.f32 %v2798, %v3102
        %v3104 = vpop.f32.mrf.mxu0
        %3105 = vdwg.mxu0
        %3106 = vmatprep.subr.mxu0 0.0
        %v3107 = vand.u32 %v1404, 4294901760
        %3108 = vmatpush1.msra.mxu0 %v3107
        %3109 = vmatprep.subr.mxu0 0.0
        %v3110 = vand.u32 %v1403, 4294901760
        %3111 = vmatpush1.msra.mxu0 %v3110
        %3112 = vmatprep.subr.mxu0 0.0
        %v3113 = vand.u32 %v1402, 4294901760
        %3114 = vmatpush1.msra.mxu0 %v3113
        %3115 = vmatprep.subr.mxu0 0.0
        %v3116 = vand.u32 %v1401, 4294901760
        %3117 = vmatpush1.msra.mxu0 %v3116
        %3118 = vmatprep.subr.mxu0 0.0
        %v3119 = vand.u32 %v1400, 4294901760
        %3120 = vmatpush1.msra.mxu0 %v3119
        %3121 = vmatprep.subr.mxu0 0.0
        %v3122 = vand.u32 %v1399, 4294901760
        %3123 = vmatpush1.msra.mxu0 %v3122
        %3124 = vmatprep.subr.mxu0 0.0
        %v3125 = vand.u32 %v1398, 4294901760
        %3126 = vmatpush1.msra.mxu0 %v3125
        %3127 = vmatprep.subr.mxu0 0.0
        %v3128 = vand.u32 %v1397, 4294901760
        %3129 = vmatpush1.msra.mxu0 %v3128
        %3130 = vmatprep.subr.mxu0 0.0
        %v3131 = vand.u32 %v1396, 4294901760
        %3132 = vmatpush1.msra.mxu0 %v3131
        %3133 = vmatprep.subr.mxu0 0.0
        %v3134 = vand.u32 %v1395, 4294901760
        %3135 = vmatpush1.msra.mxu0 %v3134
        %3136 = vmatprep.subr.mxu0 0.0
        %v3137 = vand.u32 %v1394, 4294901760
        %3138 = vmatpush1.msra.mxu0 %v3137
        %3139 = vmatprep.subr.mxu0 0.0
        %v3140 = vand.u32 %v1393, 4294901760
        %3141 = vmatpush1.msra.mxu0 %v3140
        %3142 = vmatprep.subr.mxu0 0.0
        %v3143 = vand.u32 %v1392, 4294901760
        %3144 = vmatpush1.msra.mxu0 %v3143
        %3145 = vmatprep.subr.mxu0 0.0
        %v3146 = vand.u32 %v1391, 4294901760
        %3147 = vmatpush1.msra.mxu0 %v3146
        %3148 = vmatprep.subr.mxu0 0.0
        %v3149 = vand.u32 %v1390, 4294901760
        %3150 = vmatpush1.msra.mxu0 %v3149
        %3151 = vmatprep.subr.mxu0 0.0
        %v3152 = vand.u32 %v1389, 4294901760
        %3153 = vmatpush1.msra.mxu0 %v3152
        %3154 = vmatprep.subr.mxu0 0.0
        %3155 = vmatpush2.msra.mxu0 0.0
        %3156 = vmatprep.subr.mxu0 0.0
        %3157 = vmatpush2.msra.mxu0 0.0
        %3158 = vmatprep.subr.mxu0 0.0
        %3159 = vmatpush2.msra.mxu0 0.0
        %3160 = vmatprep.subr.mxu0 0.0
        %3161 = vmatpush2.msra.mxu0 0.0
        %3162 = vmatprep.subr.mxu0 0.0
        %3163 = vmatpush2.msra.mxu0 0.0
        %3164 = vmatprep.subr.mxu0 0.0
        %3165 = vmatpush2.msra.mxu0 0.0
        %3166 = vmatprep.subr.mxu0 0.0
        %3167 = vmatpush2.msra.mxu0 0.0
        %3168 = vmatprep.subr.mxu0 0.0
        %3169 = vmatpush2.msra.mxu0 0.0
        %3170 = vmatprep.subr.mxu0 0.0
        %3171 = vmatpush2.msra.mxu0 0.0
        %3172 = vmatprep.subr.mxu0 0.0
        %3173 = vmatpush2.msra.mxu0 0.0
        %3174 = vmatprep.subr.mxu0 0.0
        %3175 = vmatpush2.msra.mxu0 0.0
        %3176 = vmatprep.subr.mxu0 0.0
        %3177 = vmatpush2.msra.mxu0 0.0
        %3178 = vmatprep.subr.mxu0 0.0
        %3179 = vmatpush2.msra.mxu0 0.0
        %3180 = vmatprep.subr.mxu0 0.0
        %3181 = vmatpush2.msra.mxu0 0.0
        %3182 = vmatprep.subr.mxu0 0.0
        %3183 = vmatpush2.msra.mxu0 0.0
        %3184 = vmatprep.subr.mxu0 0.0
        %3185 = vmatpush2.msra.mxu0 0.0
        %3186 = vmatprep.mubr.f32.mxu0 0.0
        %v3187 = vand.u32 %v1357, 4294901760
        %3188 = vmatmul.mubr.f32.gmra.mxu0 %v3187
        %v3189 = vpop.f32.mrf.mxu0
        %v3190 = vadd.f32 %v2917, %v3189
        %v3191 = vpop.f32.mrf.mxu0
        %3192 = vmatprep.mubr.f32.mxu0 0.0
        %v3193 = vand.u32 %v1358, 4294901760
        %3194 = vmatmul.mubr.f32.gmra.mxu0 %v3193
        %v3195 = vpop.f32.mrf.mxu0
        %v3196 = vadd.f32 %v2923, %v3195
        %v3197 = vpop.f32.mrf.mxu0
        %3198 = vmatprep.mubr.f32.mxu0 0.0
        %v3199 = vand.u32 %v1359, 4294901760
        %3200 = vmatmul.mubr.f32.gmra.mxu0 %v3199
        %v3201 = vpop.f32.mrf.mxu0
        %v3202 = vadd.f32 %v2929, %v3201
        %v3203 = vpop.f32.mrf.mxu0
        %3204 = vmatprep.mubr.f32.mxu0 0.0
        %v3205 = vand.u32 %v1360, 4294901760
        %3206 = vmatmul.mubr.f32.gmra.mxu0 %v3205
        %v3207 = vpop.f32.mrf.mxu0
        %v3208 = vadd.f32 %v2935, %v3207
        %v3209 = vpop.f32.mrf.mxu0
        %3210 = vmatprep.mubr.f32.mxu0 0.0
        %v3211 = vand.u32 %v1361, 4294901760
        %3212 = vmatmul.mubr.f32.gmra.mxu0 %v3211
        %v3213 = vpop.f32.mrf.mxu0
        %v3214 = vadd.f32 %v2941, %v3213
        %v3215 = vpop.f32.mrf.mxu0
        %3216 = vmatprep.mubr.f32.mxu0 0.0
        %v3217 = vand.u32 %v1362, 4294901760
        %3218 = vmatmul.mubr.f32.gmra.mxu0 %v3217
        %v3219 = vpop.f32.mrf.mxu0
        %v3220 = vadd.f32 %v2947, %v3219
        %v3221 = vpop.f32.mrf.mxu0
        %3222 = vmatprep.mubr.f32.mxu0 0.0
        %v3223 = vand.u32 %v1363, 4294901760
        %3224 = vmatmul.mubr.f32.gmra.mxu0 %v3223
        %v3225 = vpop.f32.mrf.mxu0
        %v3226 = vadd.f32 %v2953, %v3225
        %v3227 = vpop.f32.mrf.mxu0
        %3228 = vmatprep.mubr.f32.mxu0 0.0
        %v3229 = vand.u32 %v1364, 4294901760
        %3230 = vmatmul.mubr.f32.gmra.mxu0 %v3229
        %v3231 = vpop.f32.mrf.mxu0
        %v3232 = vadd.f32 %v2959, %v3231
        %v3233 = vpop.f32.mrf.mxu0
        %3234 = vmatprep.mubr.f32.mxu0 0.0
        %v3235 = vand.u32 %v1365, 4294901760
        %3236 = vmatmul.mubr.f32.gmra.mxu0 %v3235
        %v3237 = vpop.f32.mrf.mxu0
        %v3238 = vadd.f32 %v2965, %v3237
        %v3239 = vpop.f32.mrf.mxu0
        %3240 = vmatprep.mubr.f32.mxu0 0.0
        %v3241 = vand.u32 %v1366, 4294901760
        %3242 = vmatmul.mubr.f32.gmra.mxu0 %v3241
        %v3243 = vpop.f32.mrf.mxu0
        %v3244 = vadd.f32 %v2971, %v3243
        %v3245 = vpop.f32.mrf.mxu0
        %3246 = vmatprep.mubr.f32.mxu0 0.0
        %v3247 = vand.u32 %v1367, 4294901760
        %3248 = vmatmul.mubr.f32.gmra.mxu0 %v3247
        %v3249 = vpop.f32.mrf.mxu0
        %v3250 = vadd.f32 %v2977, %v3249
        %v3251 = vpop.f32.mrf.mxu0
        %3252 = vmatprep.mubr.f32.mxu0 0.0
        %v3253 = vand.u32 %v1368, 4294901760
        %3254 = vmatmul.mubr.f32.gmra.mxu0 %v3253
        %v3255 = vpop.f32.mrf.mxu0
        %v3256 = vadd.f32 %v2983, %v3255
        %v3257 = vpop.f32.mrf.mxu0
        %3258 = vmatprep.mubr.f32.mxu0 0.0
        %v3259 = vand.u32 %v1369, 4294901760
        %3260 = vmatmul.mubr.f32.gmra.mxu0 %v3259
        %v3261 = vpop.f32.mrf.mxu0
        %v3262 = vadd.f32 %v2989, %v3261
        %v3263 = vpop.f32.mrf.mxu0
        %3264 = vmatprep.mubr.f32.mxu0 0.0
        %v3265 = vand.u32 %v1370, 4294901760
        %3266 = vmatmul.mubr.f32.gmra.mxu0 %v3265
        %v3267 = vpop.f32.mrf.mxu0
        %v3268 = vadd.f32 %v2995, %v3267
        %v3269 = vpop.f32.mrf.mxu0
        %3270 = vmatprep.mubr.f32.mxu0 0.0
        %v3271 = vand.u32 %v1371, 4294901760
        %3272 = vmatmul.mubr.f32.gmra.mxu0 %v3271
        %v3273 = vpop.f32.mrf.mxu0
        %v3274 = vadd.f32 %v3001, %v3273
        %v3275 = vpop.f32.mrf.mxu0
        %3276 = vmatprep.mubr.f32.mxu0 0.0
        %v3277 = vand.u32 %v1372, 4294901760
        %3278 = vmatmul.mubr.f32.gmra.mxu0 %v3277
        %v3279 = vpop.f32.mrf.mxu0
        %v3280 = vadd.f32 %v3007, %v3279
        %v3281 = vpop.f32.mrf.mxu0
        %3282 = vmatprep.mubr.f32.mxu0 0.0
        %v3283 = vand.u32 %v1373, 4294901760
        %3284 = vmatmul.mubr.f32.gmra.mxu0 %v3283
        %v3285 = vpop.f32.mrf.mxu0
        %v3286 = vadd.f32 %v3013, %v3285
        %v3287 = vpop.f32.mrf.mxu0
        %3288 = vmatprep.mubr.f32.mxu0 0.0
        %v3289 = vand.u32 %v1374, 4294901760
        %3290 = vmatmul.mubr.f32.gmra.mxu0 %v3289
        %v3291 = vpop.f32.mrf.mxu0
        %v3292 = vadd.f32 %v3019, %v3291
        %v3293 = vpop.f32.mrf.mxu0
        %3294 = vmatprep.mubr.f32.mxu0 0.0
        %v3295 = vand.u32 %v1375, 4294901760
        %3296 = vmatmul.mubr.f32.gmra.mxu0 %v3295
        %v3297 = vpop.f32.mrf.mxu0
        %v3298 = vadd.f32 %v3025, %v3297
        %v3299 = vpop.f32.mrf.mxu0
        %3300 = vmatprep.mubr.f32.mxu0 0.0
        %v3301 = vand.u32 %v1376, 4294901760
        %3302 = vmatmul.mubr.f32.gmra.mxu0 %v3301
        %v3303 = vpop.f32.mrf.mxu0
        %v3304 = vadd.f32 %v3031, %v3303
        %v3305 = vpop.f32.mrf.mxu0
        %3306 = vmatprep.mubr.f32.mxu0 0.0
        %v3307 = vand.u32 %v1377, 4294901760
        %3308 = vmatmul.mubr.f32.gmra.mxu0 %v3307
        %v3309 = vpop.f32.mrf.mxu0
        %v3310 = vadd.f32 %v3037, %v3309
        %v3311 = vpop.f32.mrf.mxu0
        %3312 = vmatprep.mubr.f32.mxu0 0.0
        %v3313 = vand.u32 %v1378, 4294901760
        %3314 = vmatmul.mubr.f32.gmra.mxu0 %v3313
        %v3315 = vpop.f32.mrf.mxu0
        %v3316 = vadd.f32 %v3043, %v3315
        %v3317 = vpop.f32.mrf.mxu0
        %3318 = vmatprep.mubr.f32.mxu0 0.0
        %v3319 = vand.u32 %v1379, 4294901760
        %3320 = vmatmul.mubr.f32.gmra.mxu0 %v3319
        %v3321 = vpop.f32.mrf.mxu0
        %v3322 = vadd.f32 %v3049, %v3321
        %v3323 = vpop.f32.mrf.mxu0
        %3324 = vmatprep.mubr.f32.mxu0 0.0
        %v3325 = vand.u32 %v1380, 4294901760
        %3326 = vmatmul.mubr.f32.gmra.mxu0 %v3325
        %v3327 = vpop.f32.mrf.mxu0
        %v3328 = vadd.f32 %v3055, %v3327
        %v3329 = vpop.f32.mrf.mxu0
        %3330 = vmatprep.mubr.f32.mxu0 0.0
        %v3331 = vand.u32 %v1381, 4294901760
        %3332 = vmatmul.mubr.f32.gmra.mxu0 %v3331
        %v3333 = vpop.f32.mrf.mxu0
        %v3334 = vadd.f32 %v3061, %v3333
        %v3335 = vpop.f32.mrf.mxu0
        %3336 = vmatprep.mubr.f32.mxu0 0.0
        %v3337 = vand.u32 %v1382, 4294901760
        %3338 = vmatmul.mubr.f32.gmra.mxu0 %v3337
        %v3339 = vpop.f32.mrf.mxu0
        %v3340 = vadd.f32 %v3067, %v3339
        %v3341 = vpop.f32.mrf.mxu0
        %3342 = vmatprep.mubr.f32.mxu0 0.0
        %v3343 = vand.u32 %v1383, 4294901760
        %3344 = vmatmul.mubr.f32.gmra.mxu0 %v3343
        %v3345 = vpop.f32.mrf.mxu0
        %v3346 = vadd.f32 %v3073, %v3345
        %v3347 = vpop.f32.mrf.mxu0
        %3348 = vmatprep.mubr.f32.mxu0 0.0
        %v3349 = vand.u32 %v1384, 4294901760
        %3350 = vmatmul.mubr.f32.gmra.mxu0 %v3349
        %v3351 = vpop.f32.mrf.mxu0
        %v3352 = vadd.f32 %v3079, %v3351
        %v3353 = vpop.f32.mrf.mxu0
        %3354 = vmatprep.mubr.f32.mxu0 0.0
        %v3355 = vand.u32 %v1385, 4294901760
        %3356 = vmatmul.mubr.f32.gmra.mxu0 %v3355
        %v3357 = vpop.f32.mrf.mxu0
        %v3358 = vadd.f32 %v3085, %v3357
        %v3359 = vpop.f32.mrf.mxu0
        %3360 = vmatprep.mubr.f32.mxu0 0.0
        %v3361 = vand.u32 %v1386, 4294901760
        %3362 = vmatmul.mubr.f32.gmra.mxu0 %v3361
        %v3363 = vpop.f32.mrf.mxu0
        %v3364 = vadd.f32 %v3091, %v3363
        %v3365 = vpop.f32.mrf.mxu0
        %3366 = vmatprep.mubr.f32.mxu0 0.0
        %v3367 = vand.u32 %v1387, 4294901760
        %3368 = vmatmul.mubr.f32.gmra.mxu0 %v3367
        %v3369 = vpop.f32.mrf.mxu0
        %v3370 = vadd.f32 %v3097, %v3369
        %v3371 = vpop.f32.mrf.mxu0
        %3372 = vmatprep.mubr.f32.mxu0 0.0
        %v3373 = vand.u32 %v1388, 4294901760
        %3374 = vmatmul.mubr.f32.gmra.mxu0 %v3373
        %v3375 = vpop.f32.mrf.mxu0
        %v3376 = vadd.f32 %v3103, %v3375
        %v3377 = vpop.f32.mrf.mxu0
        %3378 = vdwg.mxu0
        %3379 = vst [vmem:[%s209] sm:$0xff] %v3190
        %3380 = vst [vmem:[%s209 + $0x8] sm:$0xff] %v3196
        %3381 = vst [vmem:[%s209 + $0x10] sm:$0xff] %v3202
        %3382 = vst [vmem:[%s209 + $0x18] sm:$0xff] %v3208
        %3383 = vst [vmem:[%s209 + $0x20] sm:$0xff] %v3214
        %3384 = vst [vmem:[%s209 + $0x28] sm:$0xff] %v3220
        %3385 = vst [vmem:[%s209 + $0x30] sm:$0xff] %v3226
        %3386 = vst [vmem:[%s209 + $0x38] sm:$0xff] %v3232
        %3387 = vst [vmem:[%s209 + $0x40] sm:$0xff] %v3238
        %3388 = vst [vmem:[%s209 + $0x48] sm:$0xff] %v3244
        %3389 = vst [vmem:[%s209 + $0x50] sm:$0xff] %v3250
        %3390 = vst [vmem:[%s209 + $0x58] sm:$0xff] %v3256
        %3391 = vst [vmem:[%s209 + $0x60] sm:$0xff] %v3262
        %3392 = vst [vmem:[%s209 + $0x68] sm:$0xff] %v3268
        %3393 = vst [vmem:[%s209 + $0x70] sm:$0xff] %v3274
        %3394 = vst [vmem:[%s209 + $0x78] sm:$0xff] %v3280
        %3395 = vst [vmem:[%s209 + $0x80] sm:$0xff] %v3286
        %3396 = vst [vmem:[%s209 + $0x88] sm:$0xff] %v3292
        %3397 = vst [vmem:[%s209 + $0x90] sm:$0xff] %v3298
        %3398 = vst [vmem:[%s209 + $0x98] sm:$0xff] %v3304
        %3399 = vst [vmem:[%s209 + $0xa0] sm:$0xff] %v3310
        %3400 = vst [vmem:[%s209 + $0xa8] sm:$0xff] %v3316
        %3401 = vst [vmem:[%s209 + $0xb0] sm:$0xff] %v3322
        %3402 = vst [vmem:[%s209 + $0xb8] sm:$0xff] %v3328
        %3403 = vst [vmem:[%s209 + $0xc0] sm:$0xff] %v3334
        %3404 = vst [vmem:[%s209 + $0xc8] sm:$0xff] %v3340
        %3405 = vst [vmem:[%s209 + $0xd0] sm:$0xff] %v3346
        %3406 = vst [vmem:[%s209 + $0xd8] sm:$0xff] %v3352
        %3407 = vst [vmem:[%s209 + $0xe0] sm:$0xff] %v3358
        %3408 = vst [vmem:[%s209 + $0xe8] sm:$0xff] %v3364
        %3409 = vst [vmem:[%s209 + $0xf0] sm:$0xff] %v3370
        %3410 = vst [vmem:[%s209 + $0xf8] sm:$0xff] %v3376
        %s3411 = sand.u32 %s123, 1
        %s3412 = scalar_lea.sflag [#allocation4], %s3411
        %s3413 = sand.u32 %s123, 1
        %s3414 = smul.addr %s3413, 256
        %s3415 = scalar_lea.vmem [#allocation3], %s3414
        // Predicated region
        $region37: #{tpu_custom_call.1} parent=31 // pred_check
          %p3416 = pneg %p133
        $region38: #{tpu_custom_call.1} parent=31 // pred_check_branch
          %3418 = sbr.rel (%p3416) target = $region40
        $region39: #{tpu_custom_call.1} parent=31 // pred_region
          %s3419 = smul.u32 16, %s23
          %s3421 = ssub.s32 4096, 4096
          %3422 = vsyncadd %s3412, %s3421
          %s3423 = smul.addr %s3419, 2
          %s3424 = sadd.s32 %s24, %s3423
          %s3425 = smul.addr %s22, 32
          %s3426 = sadd.s32 %s3424, %s3425
          %s3427 = smul.addr %s3426, 128
          %s3428 = scalar_lea.hbm %s3, %s3427
          %s3429 = sshll.u32 %s3415, 4
          %s3430 = int_to_ptr.vmem [resolvable:$true] %s3429
          %3435 = dma.vmem_to_hbm [thread:$0]  %s3430, 4096, %s3428, %s3412, 128, 128, 8
        $region40: #{tpu_custom_call.1} parent=31 // pred_fallthru
          _
      $region32: #{tpu_custom_call.1} parent=5 // pred_fallthru
        _
      %p3436 = scmp.le.s32.totalorder 2, %s12
      // Predicated region
      $region41: #{tpu_custom_call.1} parent=5 // pred_check
        %p3437 = pneg %p3436
      $region42: #{tpu_custom_call.1} parent=5 // pred_check_branch
        %3439 = sbr.rel (%p3437) target = $region44
      $region43: #{tpu_custom_call.1} parent=5 // pred_region
        %s3440 = ssub.s32 %s12, 2
        // Predicated region
        $region45: #{tpu_custom_call.1} parent=43 // pred_check
          %p3441 = pneg %p139
        $region46: #{tpu_custom_call.1} parent=43 // pred_check_branch
          %3443 = sbr.rel (%p3441) target = $region48
        $region47: #{tpu_custom_call.1} parent=43 // pred_region
          %s3444 = sand.u32 %s124, 1
          %s3445 = scalar_lea.sflag [#allocation4], %s3444
          %s3446 = sand.u32 %s124, 1
          %s3447 = smul.addr %s3446, 256
          %s3448 = scalar_lea.vmem [#allocation3], %s3447
          %3449 = dma.done %s3445, 4096
        $region48: #{tpu_custom_call.1} parent=43 // pred_fallthru
          _
      $region44: #{tpu_custom_call.1} parent=5 // pred_fallthru
        _
    $region6: #{tpu_custom_call.1} parent=1 // loop_footer
      %s16 = sadd.s32 1, %s12
    $region7: #{tpu_custom_call.1} parent=1 // loop_footer_branch
      %11 = sbr.rel target = $region3
    $region8: #{tpu_custom_call.1} parent=1 // loop_exit
      _
    %3450 = vsyncpa [#allocation4], 1
    %s3451 = scalar_lea.sflag [#allocation4], 1
    %3452 = vsyncpa %s3451, 1

</llo_original>
